<compile_context>
chip_gen: v6e
topology: v6e:2x2x1
jax: 0.10.0
libtpu: 0.0.40
codegen_flags: <defaults>
</compile_context>

<pallas_src>
import jax
import jax.numpy as jnp
from jax.experimental import pallas as pl
from jax.experimental.pallas import tpu as pltpu


def _round_up(x, m):
    return ((x + m - 1) // m) * m


def residual_block_kernel(x_ref, band1_ref, band2_ref, b1_ref, b2_ref,
                          fw1_ref, fb1_ref, fw2_ref, fb2_ref,
                          o_ref, pad_ref):
    B, H, WC = x_ref.shape
    T = pad_ref.shape[0]            # M + 2 rows (zero-bordered conv slab)
    M = T - 2                       # conv matmul rows (multiple of 8)
    stride = H + 1                  # per-image stride (one shared zero row)

    zero_row = jnp.zeros((1, WC), jnp.float32)

    # Zero the separator rows and the trailing pad rows; interior image rows
    # are fully overwritten before each conv, so no full-scratch memset.
    for i in range(B):
        pad_ref[pl.ds(i * stride, 1), :] = zero_row
    tail = B * stride
    pad_ref[pl.ds(tail, T - tail), :] = jnp.zeros((T - tail, WC), jnp.float32)

    def conv3x3(band_ref):
        # One banded bf16 MXU matmul per kernel row ky, accumulated as a
        # single chained expression (kept in the MXU result buffer on v7x).
        s0 = pad_ref[pl.ds(0, M), :].astype(jnp.bfloat16)
        s1 = pad_ref[pl.ds(1, M), :].astype(jnp.bfloat16)
        s2 = pad_ref[pl.ds(2, M), :].astype(jnp.bfloat16)
        return (jnp.dot(s0, band_ref[0], preferred_element_type=jnp.float32)
                + jnp.dot(s1, band_ref[1], preferred_element_type=jnp.float32)
                + jnp.dot(s2, band_ref[2], preferred_element_type=jnp.float32))

    # ---- conv1 (BN1 scale pre-folded into band1) -> +bias -> ReLU ----------
    for i in range(B):                            # stage x into the slab
        pad_ref[pl.ds(i * stride + 1, H), :] = x_ref[i]
    y = jnp.maximum(conv3x3(band1_ref) + b1_ref[...], 0.0)          # (M, WC)

    # ---- conv2 (BN2 scale pre-folded into band2) -> +bias -------------------
    pad_ref[pl.ds(1, M), :] = y                   # re-stage the slab
    for i in range(1, B + 1):                     # re-zero clobbered separators
        pad_ref[pl.ds(i * stride, 1), :] = zero_row
    y = conv3x3(band2_ref) + b2_ref[...]                            # (M, WC)

    # Park the conv2 output slab in VMEM so it is not live in vregs across SE.
    pad_ref[pl.ds(0, M), :] = y

    # ---- Squeeze-and-Excitation ---------------------------------------------
    # Global average pool: exact f32 per-image segment reduction of the slab;
    # the 1/(H*W) factor and the sum over W are folded into fc1 (wrapper).
    pool = jnp.concatenate(
        [jnp.sum(pad_ref[pl.ds(i * stride, H), :], axis=0, keepdims=True)
         for i in range(B)], axis=0)                               # (B, WC)
    h = jnp.maximum(
        jnp.dot(pool.astype(jnp.bfloat16), fw1_ref[...],
                preferred_element_type=jnp.float32) + fb1_ref[...], 0.0)
    gate = jax.nn.sigmoid(
        jnp.dot(h.astype(jnp.bfloat16), fw2_ref[...],
                preferred_element_type=jnp.float32) + fb2_ref[...])  # (B, WC)

    # ---- gate * y + residual, final ReLU; lane-dense per-image store --------
    for i in range(B):
        y_i = pad_ref[pl.ds(i * stride, H), :]
        o_ref[i] = jnp.maximum(y_i * gate[i:i + 1] + x_ref[i],
                               0.0).astype(o_ref.dtype)


def conv_band_weights(w_hwio, width):
    """(3, 3, C, C) HWIO 3x3 weights -> (3, width*C, width*C) band matrices.

    band[ky] maps one flattened input row x[h + ky - 1] (a (width*C,) vector
    in w-major / c-minor order) to its contribution to the flattened output
    row.  Horizontal SAME padding is implicit: taps falling outside
    [0, width) simply have no entries in the band.
    """
    C = w_hwio.shape[2]
    u = jnp.arange(width)[None, :, None]      # input column
    w = jnp.arange(width)[None, None, :]      # output column
    kx = jnp.arange(3)[:, None, None]
    sel = (u == w + kx - 1).astype(w_hwio.dtype)              # (3, width, width)
    band = jnp.einsum('kuw,ykio->yuiwo', sel, w_hwio)         # (ky, u, ci, w, co)
    return band.reshape(3, width * C, width * C)


def pick_b_tile(n, h, target_m=128, min_grid=2):
    """Largest divisor of n giving conv-matmul rows ~target_m while keeping
    at least `min_grid` grid steps (one per v7x TensorCore) when possible."""
    want = max(1, -(-target_m // h))
    cap = max(1, n // min_grid)
    b = max(1, min(want, cap, n))
    while n % b:
        b -= 1
    return b


def residual_block(x_nhwc, params, *, b_tile=None):
    N, H, W, C = x_nhwc.shape
    WC = W * C
    assert WC % 128 == 0, "W*C must be a multiple of 128 (lane-dense layout)"
    assert H % 8 == 0, "H must be a multiple of 8 (sublane-aligned rows)"
    hidden = params["fc1_w"].shape[1]
    hid_pad = _round_up(max(hidden, 1), 128)

    if b_tile is None:
        b_tile = pick_b_tile(N, H)
    assert N % b_tile == 0

    # --- wrapper-side layout plumbing (keeps the kernel free of reshapes) ----
    # Fold the (inference-mode) BN scales into the conv band weights.
    s1 = jnp.tile(params["bn1_scale"], (1, W))                     # (1, W*C)
    b1 = jnp.tile(params["bn1_bias"], (1, W))
    s2 = jnp.tile(params["bn2_scale"], (1, W))
    b2 = jnp.tile(params["bn2_bias"], (1, W))
    band1 = (conv_band_weights(params["conv1_w"], W) * s1).astype(jnp.bfloat16)
    band2 = (conv_band_weights(params["conv2_w"], W) * s2).astype(jnp.bfloat16)

    # SE: fold the global average pool (1/(H*W), sum over W) into fc1, pre-tile
    # fc2 over W so the gate comes out in the (1, W*C) lane layout, and pad the
    # tiny hidden dim (C // 8) to 128 lanes so the FCs are lane-dense.
    fc1_wide = jnp.zeros((WC, hid_pad), jnp.float32)
    fc1_wide = fc1_wide.at[:, :hidden].set(
        jnp.tile(params["fc1_w"], (W, 1)) * (1.0 / (H * W)))
    fb1_pad = jnp.zeros((1, hid_pad), jnp.float32).at[:, :hidden].set(
        params["fc1_b"])
    fc2_wide = jnp.zeros((hid_pad, WC), jnp.float32)
    fc2_wide = fc2_wide.at[:hidden, :].set(jnp.tile(params["fc2_w"], (1, W)))
    fb2_wide = jnp.tile(params["fc2_b"], (1, W))

    x2 = x_nhwc.reshape(N, H, WC)                                  # lane dense

    # Conv slab geometry: b_tile images of H rows, one shared zero separator
    # row between/around them; M (matmul rows) rounded up to a sublane multiple.
    m_rows = _round_up(b_tile * (H + 1) - 1, 8)
    t_rows = m_rows + 2

    def full(shape):
        nd = len(shape)
        return pl.BlockSpec(shape, lambda n, nd=nd: (0,) * nd)

    grid_spec = pltpu.PrefetchScalarGridSpec(
        num_scalar_prefetch=0,
        grid=(N // b_tile,),
        in_specs=[
            pl.BlockSpec((b_tile, H, WC), lambda n: (n, 0, 0)),    # x
            full((3, WC, WC)), full((3, WC, WC)),       # conv bands (BN folded)
            full((1, WC)), full((1, WC)),               # bn1 / bn2 bias
            full((WC, hid_pad)), full((1, hid_pad)),    # SE fc1 (pool folded)
            full((hid_pad, WC)), full((1, WC)),         # SE fc2 (pre-tiled)
        ],
        out_specs=pl.BlockSpec((b_tile, H, WC), lambda n: (n, 0, 0)),
        scratch_shapes=[
            pltpu.VMEM((t_rows, WC), jnp.float32),      # zero-bordered slab
        ],
    )

    out2 = pl.pallas_call(
        residual_block_kernel,
        out_shape=jax.ShapeDtypeStruct((N, H, WC), x_nhwc.dtype),
        grid_spec=grid_spec,
        compiler_params=pltpu.CompilerParams(
            dimension_semantics=("parallel",),
            # Footprint here is ~3 MiB; keep an explicit limit that is safe on
            # every generation (v7x has only 64 MiB physical VMEM).  The band
            # weights scale as (W*C)^2 and are double-buffered by default --
            # re-derive this limit before scaling W*C substantially.
            vmem_limit_bytes=32 * 1024 * 1024,
        ),
    )(x2, band1, band2, b1, b2,
      fc1_wide.astype(jnp.bfloat16), fb1_pad,
      fc2_wide.astype(jnp.bfloat16), fb2_wide)
    return out2.reshape(N, H, W, C)


def make_params(key, channels, reduction=8):
    hidden = channels // reduction
    ks = jax.random.split(key, 12)
    conv_scale = 1.0 / jnp.sqrt(9.0 * channels)

    def bn_fold(kg, kb, km, kv):
        gamma = 1.0 + 0.1 * jax.random.normal(kg, (channels,), jnp.float32)
        beta = 0.1 * jax.random.normal(kb, (channels,), jnp.float32)
        rmean = 0.1 * jax.random.normal(km, (channels,), jnp.float32)
        rvar = 1.0 + 0.1 * jax.random.uniform(kv, (channels,), jnp.float32)
        scale = gamma / jnp.sqrt(rvar + 1e-5)
        bias = beta - rmean * scale
        return scale.reshape(1, channels), bias.reshape(1, channels)

    s1, b1 = bn_fold(ks[2], ks[3], ks[4], ks[5])
    s2, b2 = bn_fold(ks[6], ks[7], ks[8], ks[9])
    return {
        "conv1_w": conv_scale * jax.random.normal(
            ks[0], (3, 3, channels, channels), jnp.float32),
        "conv2_w": conv_scale * jax.random.normal(
            ks[1], (3, 3, channels, channels), jnp.float32),
        "bn1_scale": s1, "bn1_bias": b1,
        "bn2_scale": s2, "bn2_bias": b2,
        "fc1_w": (1.0 / jnp.sqrt(1.0 * channels)) * jax.random.normal(
            ks[10], (channels, hidden), jnp.float32),
        "fc1_b": 0.1 * jnp.ones((1, hidden), jnp.float32),
        "fc2_w": (1.0 / jnp.sqrt(1.0 * hidden)) * jax.random.normal(
            ks[11], (hidden, channels), jnp.float32),
        "fc2_b": 0.1 * jnp.ones((1, channels), jnp.float32),
    }


def reference(x, p):
    # Pure-JAX reference (NHWC), inference-mode BN, f32 HIGHEST precision conv.
    def conv(y, w):
        return jax.lax.conv_general_dilated(
            y, w, (1, 1), "SAME",
            dimension_numbers=("NHWC", "HWIO", "NHWC"),
            precision=jax.lax.Precision.HIGHEST)

    y = conv(x, p["conv1_w"])
    y = jnp.maximum(y * p["bn1_scale"][0] + p["bn1_bias"][0], 0.0)
    y = conv(y, p["conv2_w"])
    y = y * p["bn2_scale"][0] + p["bn2_bias"][0]
    pooled = jnp.mean(y, axis=(1, 2))                               # (N, C)
    h = jnp.maximum(pooled @ p["fc1_w"] + p["fc1_b"][0], 0.0)
    gate = jax.nn.sigmoid(h @ p["fc2_w"] + p["fc2_b"][0])
    y = y * gate[:, None, None, :]
    return jnp.maximum(y + x, 0.0)


if __name__ == "__main__":
    N, C, H, W = 8, 16, 16, 16  # SELayer(channels, 8) -> hidden = C // 8 = 2
    key = jax.random.PRNGKey(0)
    kx, kp = jax.random.split(key)

    # PyTorch-style NCHW input, transposed to the kernel's NHWC layout.
    x_nchw = jax.random.normal(kx, (N, C, H, W), jnp.float32)
    x = jnp.transpose(x_nchw, (0, 2, 3, 1))                         # NHWC

    params = make_params(kp, C, reduction=8)

    out = residual_block(x, params)
    out = jax.block_until_ready(out)

    ref = reference(x, params)
    max_err = float(jnp.max(jnp.abs(out - ref)))
    # bf16 MXU operands (BN scale folded into bf16 band weights, bf16 SE FCs)
    # vs. an f32 HIGHEST-precision reference: tolerance sized for bf16
    # operand rounding at these magnitudes.
    assert max_err < 3e-2, f"mismatch vs reference: max abs err = {max_err}"

    print("KERNEL_OK")
</pallas_src>

<mosaic_0001>
module attributes {stable_mosaic.version = 11 : i64} {
  func.func @residual_block_kernel(%arg0: i32, %arg1: memref<4x16x256xf32, #tpu.memory_space<vmem>>, %arg2: memref<3x256x256xbf16, #tpu.memory_space<vmem>>, %arg3: memref<3x256x256xbf16, #tpu.memory_space<vmem>>, %arg4: memref<1x256xf32, #tpu.memory_space<vmem>>, %arg5: memref<1x256xf32, #tpu.memory_space<vmem>>, %arg6: memref<256x128xbf16, #tpu.memory_space<vmem>>, %arg7: memref<1x128xf32, #tpu.memory_space<vmem>>, %arg8: memref<128x256xbf16, #tpu.memory_space<vmem>>, %arg9: memref<1x256xf32, #tpu.memory_space<vmem>>, %arg10: memref<4x16x256xf32, #tpu.memory_space<vmem>>, %arg11: memref<74x256xf32, #tpu.memory_space<vmem>>) attributes {dimension_semantics = [#tpu.dimension_semantics<parallel>], iteration_bounds = array<i64: 2>, scalar_prefetch = 0 : i64, scratch_operands = 1 : i64, tpu.core_type = #tpu.core_type<tc>, window_params = [{transform_indices = @transform_0, window_bounds = array<i64: 4, 16, 256>}, {pipeline_mode = #tpu.pipeline_mode<synchronous>, transform_indices = @transform_1, window_bounds = array<i64: 3, 256, 256>}, {pipeline_mode = #tpu.pipeline_mode<synchronous>, transform_indices = @transform_2, window_bounds = array<i64: 3, 256, 256>}, {pipeline_mode = #tpu.pipeline_mode<synchronous>, transform_indices = @transform_3, window_bounds = array<i64: 1, 256>}, {pipeline_mode = #tpu.pipeline_mode<synchronous>, transform_indices = @transform_4, window_bounds = array<i64: 1, 256>}, {pipeline_mode = #tpu.pipeline_mode<synchronous>, transform_indices = @transform_5, window_bounds = array<i64: 256, 128>}, {pipeline_mode = #tpu.pipeline_mode<synchronous>, transform_indices = @transform_6, window_bounds = array<i64: 1, 128>}, {pipeline_mode = #tpu.pipeline_mode<synchronous>, transform_indices = @transform_7, window_bounds = array<i64: 128, 256>}, {pipeline_mode = #tpu.pipeline_mode<synchronous>, transform_indices = @transform_8, window_bounds = array<i64: 1, 256>}, {transform_indices = @transform_9, window_bounds = array<i64: 4, 16, 256>}]} {
    %cst = arith.constant 0.000000e+00 : f32
    %0 = vector.broadcast %cst : f32 to vector<1x256xf32>
    %c0 = arith.constant 0 : index
    %c0_0 = arith.constant 0 : index
    %1 = vector.load %arg11[%c0, %c0_0] : memref<74x256xf32, #tpu.memory_space<vmem>>, vector<1x256xf32>
    tpu.vector_store %arg11[%c0, %c0_0], %0 {strides = array<i32>} : memref<74x256xf32, #tpu.memory_space<vmem>>, vector<1x256xf32>,
    %c17 = arith.constant 17 : index
    %c0_1 = arith.constant 0 : index
    %2 = vector.load %arg11[%c17, %c0_1] : memref<74x256xf32, #tpu.memory_space<vmem>>, vector<1x256xf32>
    tpu.vector_store %arg11[%c17, %c0_1], %0 {strides = array<i32>} : memref<74x256xf32, #tpu.memory_space<vmem>>, vector<1x256xf32>,
    %c34 = arith.constant 34 : index
    %c0_2 = arith.constant 0 : index
    %3 = vector.load %arg11[%c34, %c0_2] : memref<74x256xf32, #tpu.memory_space<vmem>>, vector<1x256xf32>
    tpu.vector_store %arg11[%c34, %c0_2], %0 {strides = array<i32>} : memref<74x256xf32, #tpu.memory_space<vmem>>, vector<1x256xf32>,
    %c51 = arith.constant 51 : index
    %c0_3 = arith.constant 0 : index
    %4 = vector.load %arg11[%c51, %c0_3] : memref<74x256xf32, #tpu.memory_space<vmem>>, vector<1x256xf32>
    tpu.vector_store %arg11[%c51, %c0_3], %0 {strides = array<i32>} : memref<74x256xf32, #tpu.memory_space<vmem>>, vector<1x256xf32>,
    %cst_4 = arith.constant 0.000000e+00 : f32
    %5 = vector.broadcast %cst_4 : f32 to vector<6x256xf32>
    %c68 = arith.constant 68 : index
    %c0_5 = arith.constant 0 : index
    %6 = vector.load %arg11[%c68, %c0_5] : memref<74x256xf32, #tpu.memory_space<vmem>>, vector<6x256xf32>
    tpu.vector_store %arg11[%c68, %c0_5], %5 {strides = array<i32>} : memref<74x256xf32, #tpu.memory_space<vmem>>, vector<6x256xf32>,
    %c0_6 = arith.constant 0 : index
    %c0_7 = arith.constant 0 : index
    %c0_8 = arith.constant 0 : index
    %7 = vector.load %arg1[%c0_6, %c0_7, %c0_8] : memref<4x16x256xf32, #tpu.memory_space<vmem>>, vector<1x16x256xf32>
    %8 = vector.shape_cast %7 : vector<1x16x256xf32> to vector<16x256xf32>
    %c1 = arith.constant 1 : index
    %c0_9 = arith.constant 0 : index
    %9 = vector.load %arg11[%c1, %c0_9] : memref<74x256xf32, #tpu.memory_space<vmem>>, vector<16x256xf32>
    tpu.vector_store %arg11[%c1, %c0_9], %8 {strides = array<i32>} : memref<74x256xf32, #tpu.memory_space<vmem>>, vector<16x256xf32>,
    %c1_10 = arith.constant 1 : index
    %c0_11 = arith.constant 0 : index
    %c0_12 = arith.constant 0 : index
    %10 = vector.load %arg1[%c1_10, %c0_11, %c0_12] : memref<4x16x256xf32, #tpu.memory_space<vmem>>, vector<1x16x256xf32>
    %11 = vector.shape_cast %10 : vector<1x16x256xf32> to vector<16x256xf32>
    %c18 = arith.constant 18 : index
    %c0_13 = arith.constant 0 : index
    %12 = vector.load %arg11[%c18, %c0_13] : memref<74x256xf32, #tpu.memory_space<vmem>>, vector<16x256xf32>
    tpu.vector_store %arg11[%c18, %c0_13], %11 {strides = array<i32>} : memref<74x256xf32, #tpu.memory_space<vmem>>, vector<16x256xf32>,
    %c2 = arith.constant 2 : index
    %c0_14 = arith.constant 0 : index
    %c0_15 = arith.constant 0 : index
    %13 = vector.load %arg1[%c2, %c0_14, %c0_15] : memref<4x16x256xf32, #tpu.memory_space<vmem>>, vector<1x16x256xf32>
    %14 = vector.shape_cast %13 : vector<1x16x256xf32> to vector<16x256xf32>
    %c35 = arith.constant 35 : index
    %c0_16 = arith.constant 0 : index
    %15 = vector.load %arg11[%c35, %c0_16] : memref<74x256xf32, #tpu.memory_space<vmem>>, vector<16x256xf32>
    tpu.vector_store %arg11[%c35, %c0_16], %14 {strides = array<i32>} : memref<74x256xf32, #tpu.memory_space<vmem>>, vector<16x256xf32>,
    %c3 = arith.constant 3 : index
    %c0_17 = arith.constant 0 : index
    %c0_18 = arith.constant 0 : index
    %16 = vector.load %arg1[%c3, %c0_17, %c0_18] : memref<4x16x256xf32, #tpu.memory_space<vmem>>, vector<1x16x256xf32>
    %17 = vector.shape_cast %16 : vector<1x16x256xf32> to vector<16x256xf32>
    %c52 = arith.constant 52 : index
    %c0_19 = arith.constant 0 : index
    %18 = vector.load %arg11[%c52, %c0_19] : memref<74x256xf32, #tpu.memory_space<vmem>>, vector<16x256xf32>
    tpu.vector_store %arg11[%c52, %c0_19], %17 {strides = array<i32>} : memref<74x256xf32, #tpu.memory_space<vmem>>, vector<16x256xf32>,
    %c0_20 = arith.constant 0 : index
    %c0_21 = arith.constant 0 : index
    %19 = vector.load %arg11[%c0_20, %c0_21] : memref<74x256xf32, #tpu.memory_space<vmem>>, vector<72x256xf32>
    %20 = arith.truncf %19 : vector<72x256xf32> to vector<72x256xbf16>
    %c1_22 = arith.constant 1 : index
    %c0_23 = arith.constant 0 : index
    %21 = vector.load %arg11[%c1_22, %c0_23] : memref<74x256xf32, #tpu.memory_space<vmem>>, vector<72x256xf32>
    %22 = arith.truncf %21 : vector<72x256xf32> to vector<72x256xbf16>
    %c2_24 = arith.constant 2 : index
    %c0_25 = arith.constant 0 : index
    %23 = vector.load %arg11[%c2_24, %c0_25] : memref<74x256xf32, #tpu.memory_space<vmem>>, vector<72x256xf32>
    %24 = arith.truncf %23 : vector<72x256xf32> to vector<72x256xbf16>
    %c0_26 = arith.constant 0 : index
    %c0_27 = arith.constant 0 : index
    %c0_28 = arith.constant 0 : index
    %25 = vector.load %arg2[%c0_26, %c0_27, %c0_28] : memref<3x256x256xbf16, #tpu.memory_space<vmem>>, vector<1x256x256xbf16>
    %26 = vector.shape_cast %25 : vector<1x256x256xbf16> to vector<256x256xbf16>
    %cst_29 = arith.constant dense<0.000000e+00> : vector<72x256xf32>
    %27 = tpu.matmul %20, %26, %cst_29 {dimension_numbers = #tpu.dot_dimension_numbers<[1], [0], [0], [1], [0, 0, 1, 1], [], []>} : vector<72x256xbf16>, vector<256x256xbf16>, vector<72x256xf32> -> vector<72x256xf32>
    %c1_30 = arith.constant 1 : index
    %c0_31 = arith.constant 0 : index
    %c0_32 = arith.constant 0 : index
    %28 = vector.load %arg2[%c1_30, %c0_31, %c0_32] : memref<3x256x256xbf16, #tpu.memory_space<vmem>>, vector<1x256x256xbf16>
    %29 = vector.shape_cast %28 : vector<1x256x256xbf16> to vector<256x256xbf16>
    %cst_33 = arith.constant dense<0.000000e+00> : vector<72x256xf32>
    %30 = tpu.matmul %22, %29, %cst_33 {dimension_numbers = #tpu.dot_dimension_numbers<[1], [0], [0], [1], [0, 0, 1, 1], [], []>} : vector<72x256xbf16>, vector<256x256xbf16>, vector<72x256xf32> -> vector<72x256xf32>
    %31 = arith.addf %27, %30 : vector<72x256xf32>
    %c2_34 = arith.constant 2 : index
    %c0_35 = arith.constant 0 : index
    %c0_36 = arith.constant 0 : index
    %32 = vector.load %arg2[%c2_34, %c0_35, %c0_36] : memref<3x256x256xbf16, #tpu.memory_space<vmem>>, vector<1x256x256xbf16>
    %33 = vector.shape_cast %32 : vector<1x256x256xbf16> to vector<256x256xbf16>
    %cst_37 = arith.constant dense<0.000000e+00> : vector<72x256xf32>
    %34 = tpu.matmul %24, %33, %cst_37 {dimension_numbers = #tpu.dot_dimension_numbers<[1], [0], [0], [1], [0, 0, 1, 1], [], []>} : vector<72x256xbf16>, vector<256x256xbf16>, vector<72x256xf32> -> vector<72x256xf32>
    %35 = arith.addf %31, %34 : vector<72x256xf32>
    %c0_38 = arith.constant 0 : index
    %c0_39 = arith.constant 0 : index
    %36 = vector.load %arg4[%c0_38, %c0_39] : memref<1x256xf32, #tpu.memory_space<vmem>>, vector<1x256xf32>
    %37 = vector.broadcast %36 : vector<1x256xf32> to vector<72x256xf32>
    %38 = arith.addf %35, %37 : vector<72x256xf32>
    %cst_40 = arith.constant 0.000000e+00 : f32
    %39 = vector.broadcast %cst_40 : f32 to vector<72x256xf32>
    %40 = arith.maximumf %38, %39 : vector<72x256xf32>
    %c1_41 = arith.constant 1 : index
    %c0_42 = arith.constant 0 : index
    %41 = vector.load %arg11[%c1_41, %c0_42] : memref<74x256xf32, #tpu.memory_space<vmem>>, vector<72x256xf32>
    tpu.vector_store %arg11[%c1_41, %c0_42], %40 {strides = array<i32>} : memref<74x256xf32, #tpu.memory_space<vmem>>, vector<72x256xf32>,
    %c17_43 = arith.constant 17 : index
    %c0_44 = arith.constant 0 : index
    %42 = vector.load %arg11[%c17_43, %c0_44] : memref<74x256xf32, #tpu.memory_space<vmem>>, vector<1x256xf32>
    tpu.vector_store %arg11[%c17_43, %c0_44], %0 {strides = array<i32>} : memref<74x256xf32, #tpu.memory_space<vmem>>, vector<1x256xf32>,
    %c34_45 = arith.constant 34 : index
    %c0_46 = arith.constant 0 : index
    %43 = vector.load %arg11[%c34_45, %c0_46] : memref<74x256xf32, #tpu.memory_space<vmem>>, vector<1x256xf32>
    tpu.vector_store %arg11[%c34_45, %c0_46], %0 {strides = array<i32>} : memref<74x256xf32, #tpu.memory_space<vmem>>, vector<1x256xf32>,
    %c51_47 = arith.constant 51 : index
    %c0_48 = arith.constant 0 : index
    %44 = vector.load %arg11[%c51_47, %c0_48] : memref<74x256xf32, #tpu.memory_space<vmem>>, vector<1x256xf32>
    tpu.vector_store %arg11[%c51_47, %c0_48], %0 {strides = array<i32>} : memref<74x256xf32, #tpu.memory_space<vmem>>, vector<1x256xf32>,
    %c68_49 = arith.constant 68 : index
    %c0_50 = arith.constant 0 : index
    %45 = vector.load %arg11[%c68_49, %c0_50] : memref<74x256xf32, #tpu.memory_space<vmem>>, vector<1x256xf32>
    tpu.vector_store %arg11[%c68_49, %c0_50], %0 {strides = array<i32>} : memref<74x256xf32, #tpu.memory_space<vmem>>, vector<1x256xf32>,
    %c0_51 = arith.constant 0 : index
    %c0_52 = arith.constant 0 : index
    %46 = vector.load %arg11[%c0_51, %c0_52] : memref<74x256xf32, #tpu.memory_space<vmem>>, vector<72x256xf32>
    %47 = arith.truncf %46 : vector<72x256xf32> to vector<72x256xbf16>
    %c1_53 = arith.constant 1 : index
    %c0_54 = arith.constant 0 : index
    %48 = vector.load %arg11[%c1_53, %c0_54] : memref<74x256xf32, #tpu.memory_space<vmem>>, vector<72x256xf32>
    %49 = arith.truncf %48 : vector<72x256xf32> to vector<72x256xbf16>
    %c2_55 = arith.constant 2 : index
    %c0_56 = arith.constant 0 : index
    %50 = vector.load %arg11[%c2_55, %c0_56] : memref<74x256xf32, #tpu.memory_space<vmem>>, vector<72x256xf32>
    %51 = arith.truncf %50 : vector<72x256xf32> to vector<72x256xbf16>
    %c0_57 = arith.constant 0 : index
    %c0_58 = arith.constant 0 : index
    %c0_59 = arith.constant 0 : index
    %52 = vector.load %arg3[%c0_57, %c0_58, %c0_59] : memref<3x256x256xbf16, #tpu.memory_space<vmem>>, vector<1x256x256xbf16>
    %53 = vector.shape_cast %52 : vector<1x256x256xbf16> to vector<256x256xbf16>
    %cst_60 = arith.constant dense<0.000000e+00> : vector<72x256xf32>
    %54 = tpu.matmul %47, %53, %cst_60 {dimension_numbers = #tpu.dot_dimension_numbers<[1], [0], [0], [1], [0, 0, 1, 1], [], []>} : vector<72x256xbf16>, vector<256x256xbf16>, vector<72x256xf32> -> vector<72x256xf32>
    %c1_61 = arith.constant 1 : index
    %c0_62 = arith.constant 0 : index
    %c0_63 = arith.constant 0 : index
    %55 = vector.load %arg3[%c1_61, %c0_62, %c0_63] : memref<3x256x256xbf16, #tpu.memory_space<vmem>>, vector<1x256x256xbf16>
    %56 = vector.shape_cast %55 : vector<1x256x256xbf16> to vector<256x256xbf16>
    %cst_64 = arith.constant dense<0.000000e+00> : vector<72x256xf32>
    %57 = tpu.matmul %49, %56, %cst_64 {dimension_numbers = #tpu.dot_dimension_numbers<[1], [0], [0], [1], [0, 0, 1, 1], [], []>} : vector<72x256xbf16>, vector<256x256xbf16>, vector<72x256xf32> -> vector<72x256xf32>
    %58 = arith.addf %54, %57 : vector<72x256xf32>
    %c2_65 = arith.constant 2 : index
    %c0_66 = arith.constant 0 : index
    %c0_67 = arith.constant 0 : index
    %59 = vector.load %arg3[%c2_65, %c0_66, %c0_67] : memref<3x256x256xbf16, #tpu.memory_space<vmem>>, vector<1x256x256xbf16>
    %60 = vector.shape_cast %59 : vector<1x256x256xbf16> to vector<256x256xbf16>
    %cst_68 = arith.constant dense<0.000000e+00> : vector<72x256xf32>
    %61 = tpu.matmul %51, %60, %cst_68 {dimension_numbers = #tpu.dot_dimension_numbers<[1], [0], [0], [1], [0, 0, 1, 1], [], []>} : vector<72x256xbf16>, vector<256x256xbf16>, vector<72x256xf32> -> vector<72x256xf32>
    %62 = arith.addf %58, %61 : vector<72x256xf32>
    %c0_69 = arith.constant 0 : index
    %c0_70 = arith.constant 0 : index
    %63 = vector.load %arg5[%c0_69, %c0_70] : memref<1x256xf32, #tpu.memory_space<vmem>>, vector<1x256xf32>
    %64 = vector.broadcast %63 : vector<1x256xf32> to vector<72x256xf32>
    %65 = arith.addf %62, %64 : vector<72x256xf32>
    %c0_71 = arith.constant 0 : index
    %c0_72 = arith.constant 0 : index
    %66 = vector.load %arg11[%c0_71, %c0_72] : memref<74x256xf32, #tpu.memory_space<vmem>>, vector<72x256xf32>
    tpu.vector_store %arg11[%c0_71, %c0_72], %65 {strides = array<i32>} : memref<74x256xf32, #tpu.memory_space<vmem>>, vector<72x256xf32>,
    %c0_73 = arith.constant 0 : index
    %c0_74 = arith.constant 0 : index
    %67 = vector.load %arg11[%c0_73, %c0_74] : memref<74x256xf32, #tpu.memory_space<vmem>>, vector<16x256xf32>
    %cst_75 = arith.constant dense<0.000000e+00> : vector<256xf32>
    %68 = vector.multi_reduction <add>, %67, %cst_75 [0] : vector<16x256xf32> to vector<256xf32>
    %69 = vector.shape_cast %68 : vector<256xf32> to vector<1x256xf32>
    %c17_76 = arith.constant 17 : index
    %c0_77 = arith.constant 0 : index
    %70 = vector.load %arg11[%c17_76, %c0_77] : memref<74x256xf32, #tpu.memory_space<vmem>>, vector<16x256xf32>
    %cst_78 = arith.constant dense<0.000000e+00> : vector<256xf32>
    %71 = vector.multi_reduction <add>, %70, %cst_78 [0] : vector<16x256xf32> to vector<256xf32>
    %72 = vector.shape_cast %71 : vector<256xf32> to vector<1x256xf32>
    %c34_79 = arith.constant 34 : index
    %c0_80 = arith.constant 0 : index
    %73 = vector.load %arg11[%c34_79, %c0_80] : memref<74x256xf32, #tpu.memory_space<vmem>>, vector<16x256xf32>
    %cst_81 = arith.constant dense<0.000000e+00> : vector<256xf32>
    %74 = vector.multi_reduction <add>, %73, %cst_81 [0] : vector<16x256xf32> to vector<256xf32>
    %75 = vector.shape_cast %74 : vector<256xf32> to vector<1x256xf32>
    %c51_82 = arith.constant 51 : index
    %c0_83 = arith.constant 0 : index
    %76 = vector.load %arg11[%c51_82, %c0_83] : memref<74x256xf32, #tpu.memory_space<vmem>>, vector<16x256xf32>
    %cst_84 = arith.constant dense<0.000000e+00> : vector<256xf32>
    %77 = vector.multi_reduction <add>, %76, %cst_84 [0] : vector<16x256xf32> to vector<256xf32>
    %78 = vector.shape_cast %77 : vector<256xf32> to vector<1x256xf32>
    %79 = tpu.concatenate %69, %72, %75, %78 in 0 : vector<1x256xf32>, vector<1x256xf32>, vector<1x256xf32>, vector<1x256xf32> -> vector<4x256xf32>
    %80 = arith.truncf %79 : vector<4x256xf32> to vector<4x256xbf16>
    %c0_85 = arith.constant 0 : index
    %c0_86 = arith.constant 0 : index
    %81 = vector.load %arg6[%c0_85, %c0_86] : memref<256x128xbf16, #tpu.memory_space<vmem>>, vector<256x128xbf16>
    %cst_87 = arith.constant dense<0.000000e+00> : vector<4x128xf32>
    %82 = tpu.matmul %80, %81, %cst_87 {dimension_numbers = #tpu.dot_dimension_numbers<[1], [0], [0], [1], [0, 0, 1, 1], [], []>} : vector<4x256xbf16>, vector<256x128xbf16>, vector<4x128xf32> -> vector<4x128xf32>
    %c0_88 = arith.constant 0 : index
    %c0_89 = arith.constant 0 : index
    %83 = vector.load %arg7[%c0_88, %c0_89] : memref<1x128xf32, #tpu.memory_space<vmem>>, vector<1x128xf32>
    %84 = vector.broadcast %83 : vector<1x128xf32> to vector<4x128xf32>
    %85 = arith.addf %82, %84 : vector<4x128xf32>
    %cst_90 = arith.constant 0.000000e+00 : f32
    %86 = vector.broadcast %cst_90 : f32 to vector<4x128xf32>
    %87 = arith.maximumf %85, %86 : vector<4x128xf32>
    %88 = arith.truncf %87 : vector<4x128xf32> to vector<4x128xbf16>
    %c0_91 = arith.constant 0 : index
    %c0_92 = arith.constant 0 : index
    %89 = vector.load %arg8[%c0_91, %c0_92] : memref<128x256xbf16, #tpu.memory_space<vmem>>, vector<128x256xbf16>
    %cst_93 = arith.constant dense<0.000000e+00> : vector<4x256xf32>
    %90 = tpu.matmul %88, %89, %cst_93 {dimension_numbers = #tpu.dot_dimension_numbers<[1], [0], [0], [1], [0, 0, 1, 1], [], []>} : vector<4x128xbf16>, vector<128x256xbf16>, vector<4x256xf32> -> vector<4x256xf32>
    %c0_94 = arith.constant 0 : index
    %c0_95 = arith.constant 0 : index
    %91 = vector.load %arg9[%c0_94, %c0_95] : memref<1x256xf32, #tpu.memory_space<vmem>>, vector<1x256xf32>
    %92 = vector.broadcast %91 : vector<1x256xf32> to vector<4x256xf32>
    %93 = arith.addf %90, %92 : vector<4x256xf32>
    %94 = arith.negf %93 : vector<4x256xf32>
    %95 = math.exp %94 : vector<4x256xf32>
    %cst_96 = arith.constant 1.000000e+00 : f32
    %96 = vector.broadcast %cst_96 : f32 to vector<4x256xf32>
    %97 = arith.addf %96, %95 : vector<4x256xf32>
    %98 = arith.divf %96, %97 : vector<4x256xf32>
    %c0_97 = arith.constant 0 : index
    %c0_98 = arith.constant 0 : index
    %99 = vector.load %arg11[%c0_97, %c0_98] : memref<74x256xf32, #tpu.memory_space<vmem>>, vector<16x256xf32>
    %100 = vector.extract_strided_slice %98 {offsets = [0, 0], sizes = [1, 256], strides = [1, 1]} : vector<4x256xf32> to vector<1x256xf32>
    %101 = vector.broadcast %100 : vector<1x256xf32> to vector<16x256xf32>
    %102 = arith.mulf %99, %101 : vector<16x256xf32>
    %c0_99 = arith.constant 0 : index
    %c0_100 = arith.constant 0 : index
    %c0_101 = arith.constant 0 : index
    %103 = vector.load %arg1[%c0_99, %c0_100, %c0_101] : memref<4x16x256xf32, #tpu.memory_space<vmem>>, vector<1x16x256xf32>
    %104 = vector.shape_cast %103 : vector<1x16x256xf32> to vector<16x256xf32>
    %105 = arith.addf %102, %104 : vector<16x256xf32>
    %cst_102 = arith.constant 0.000000e+00 : f32
    %106 = vector.broadcast %cst_102 : f32 to vector<16x256xf32>
    %107 = arith.maximumf %105, %106 : vector<16x256xf32>
    %c0_103 = arith.constant 0 : index
    %c0_104 = arith.constant 0 : index
    %c0_105 = arith.constant 0 : index
    %108 = vector.load %arg10[%c0_103, %c0_104, %c0_105] : memref<4x16x256xf32, #tpu.memory_space<vmem>>, vector<1x16x256xf32>
    %109 = vector.shape_cast %108 : vector<1x16x256xf32> to vector<16x256xf32>
    %110 = vector.shape_cast %107 : vector<16x256xf32> to vector<1x16x256xf32>
    tpu.vector_store %arg10[%c0_103, %c0_104, %c0_105], %110 {strides = array<i32>} : memref<4x16x256xf32, #tpu.memory_space<vmem>>, vector<1x16x256xf32>,
    %c17_106 = arith.constant 17 : index
    %c0_107 = arith.constant 0 : index
    %111 = vector.load %arg11[%c17_106, %c0_107] : memref<74x256xf32, #tpu.memory_space<vmem>>, vector<16x256xf32>
    %112 = vector.extract_strided_slice %98 {offsets = [1, 0], sizes = [1, 256], strides = [1, 1]} : vector<4x256xf32> to vector<1x256xf32>
    %113 = vector.broadcast %112 : vector<1x256xf32> to vector<16x256xf32>
    %114 = arith.mulf %111, %113 : vector<16x256xf32>
    %c1_108 = arith.constant 1 : index
    %c0_109 = arith.constant 0 : index
    %c0_110 = arith.constant 0 : index
    %115 = vector.load %arg1[%c1_108, %c0_109, %c0_110] : memref<4x16x256xf32, #tpu.memory_space<vmem>>, vector<1x16x256xf32>
    %116 = vector.shape_cast %115 : vector<1x16x256xf32> to vector<16x256xf32>
    %117 = arith.addf %114, %116 : vector<16x256xf32>
    %cst_111 = arith.constant 0.000000e+00 : f32
    %118 = vector.broadcast %cst_111 : f32 to vector<16x256xf32>
    %119 = arith.maximumf %117, %118 : vector<16x256xf32>
    %c1_112 = arith.constant 1 : index
    %c0_113 = arith.constant 0 : index
    %c0_114 = arith.constant 0 : index
    %120 = vector.load %arg10[%c1_112, %c0_113, %c0_114] : memref<4x16x256xf32, #tpu.memory_space<vmem>>, vector<1x16x256xf32>
    %121 = vector.shape_cast %120 : vector<1x16x256xf32> to vector<16x256xf32>
    %122 = vector.shape_cast %119 : vector<16x256xf32> to vector<1x16x256xf32>
    tpu.vector_store %arg10[%c1_112, %c0_113, %c0_114], %122 {strides = array<i32>} : memref<4x16x256xf32, #tpu.memory_space<vmem>>, vector<1x16x256xf32>,
    %c34_115 = arith.constant 34 : index
    %c0_116 = arith.constant 0 : index
    %123 = vector.load %arg11[%c34_115, %c0_116] : memref<74x256xf32, #tpu.memory_space<vmem>>, vector<16x256xf32>
    %124 = vector.extract_strided_slice %98 {offsets = [2, 0], sizes = [1, 256], strides = [1, 1]} : vector<4x256xf32> to vector<1x256xf32>
    %125 = vector.broadcast %124 : vector<1x256xf32> to vector<16x256xf32>
    %126 = arith.mulf %123, %125 : vector<16x256xf32>
    %c2_117 = arith.constant 2 : index
    %c0_118 = arith.constant 0 : index
    %c0_119 = arith.constant 0 : index
    %127 = vector.load %arg1[%c2_117, %c0_118, %c0_119] : memref<4x16x256xf32, #tpu.memory_space<vmem>>, vector<1x16x256xf32>
    %128 = vector.shape_cast %127 : vector<1x16x256xf32> to vector<16x256xf32>
    %129 = arith.addf %126, %128 : vector<16x256xf32>
    %cst_120 = arith.constant 0.000000e+00 : f32
    %130 = vector.broadcast %cst_120 : f32 to vector<16x256xf32>
    %131 = arith.maximumf %129, %130 : vector<16x256xf32>
    %c2_121 = arith.constant 2 : index
    %c0_122 = arith.constant 0 : index
    %c0_123 = arith.constant 0 : index
    %132 = vector.load %arg10[%c2_121, %c0_122, %c0_123] : memref<4x16x256xf32, #tpu.memory_space<vmem>>, vector<1x16x256xf32>
    %133 = vector.shape_cast %132 : vector<1x16x256xf32> to vector<16x256xf32>
    %134 = vector.shape_cast %131 : vector<16x256xf32> to vector<1x16x256xf32>
    tpu.vector_store %arg10[%c2_121, %c0_122, %c0_123], %134 {strides = array<i32>} : memref<4x16x256xf32, #tpu.memory_space<vmem>>, vector<1x16x256xf32>,
    %c51_124 = arith.constant 51 : index
    %c0_125 = arith.constant 0 : index
    %135 = vector.load %arg11[%c51_124, %c0_125] : memref<74x256xf32, #tpu.memory_space<vmem>>, vector<16x256xf32>
    %136 = vector.extract_strided_slice %98 {offsets = [3, 0], sizes = [1, 256], strides = [1, 1]} : vector<4x256xf32> to vector<1x256xf32>
    %137 = vector.broadcast %136 : vector<1x256xf32> to vector<16x256xf32>
    %138 = arith.mulf %135, %137 : vector<16x256xf32>
    %c3_126 = arith.constant 3 : index
    %c0_127 = arith.constant 0 : index
    %c0_128 = arith.constant 0 : index
    %139 = vector.load %arg1[%c3_126, %c0_127, %c0_128] : memref<4x16x256xf32, #tpu.memory_space<vmem>>, vector<1x16x256xf32>
    %140 = vector.shape_cast %139 : vector<1x16x256xf32> to vector<16x256xf32>
    %141 = arith.addf %138, %140 : vector<16x256xf32>
    %cst_129 = arith.constant 0.000000e+00 : f32
    %142 = vector.broadcast %cst_129 : f32 to vector<16x256xf32>
    %143 = arith.maximumf %141, %142 : vector<16x256xf32>
    %c3_130 = arith.constant 3 : index
    %c0_131 = arith.constant 0 : index
    %c0_132 = arith.constant 0 : index
    %144 = vector.load %arg10[%c3_130, %c0_131, %c0_132] : memref<4x16x256xf32, #tpu.memory_space<vmem>>, vector<1x16x256xf32>
    %145 = vector.shape_cast %144 : vector<1x16x256xf32> to vector<16x256xf32>
    %146 = vector.shape_cast %143 : vector<16x256xf32> to vector<1x16x256xf32>
    tpu.vector_store %arg10[%c3_130, %c0_131, %c0_132], %146 {strides = array<i32>} : memref<4x16x256xf32, #tpu.memory_space<vmem>>, vector<1x16x256xf32>,
    return
  }
  func.func @transform_0(%arg0: i32) -> (i32, i32, i32) {
    %c0_i32 = arith.constant 0 : i32
    %c0_i32_0 = arith.constant 0 : i32
    %c0_i32_1 = arith.constant 0 : i32
    return %arg0, %c0_i32, %c0_i32_0 : i32, i32, i32
  }
  func.func @transform_1(%arg0: i32) -> (i32, i32, i32) {
    %c0_i32 = arith.constant 0 : i32
    %c0_i32_0 = arith.constant 0 : i32
    %c0_i32_1 = arith.constant 0 : i32
    %c0_i32_2 = arith.constant 0 : i32
    return %c0_i32, %c0_i32_0, %c0_i32_1 : i32, i32, i32
  }
  func.func @transform_2(%arg0: i32) -> (i32, i32, i32) {
    %c0_i32 = arith.constant 0 : i32
    %c0_i32_0 = arith.constant 0 : i32
    %c0_i32_1 = arith.constant 0 : i32
    %c0_i32_2 = arith.constant 0 : i32
    return %c0_i32, %c0_i32_0, %c0_i32_1 : i32, i32, i32
  }
  func.func @transform_3(%arg0: i32) -> (i32, i32) {
    %c0_i32 = arith.constant 0 : i32
    %c0_i32_0 = arith.constant 0 : i32
    %c0_i32_1 = arith.constant 0 : i32
    return %c0_i32, %c0_i32_0 : i32, i32
  }
  func.func @transform_4(%arg0: i32) -> (i32, i32) {
    %c0_i32 = arith.constant 0 : i32
    %c0_i32_0 = arith.constant 0 : i32
    %c0_i32_1 = arith.constant 0 : i32
    return %c0_i32, %c0_i32_0 : i32, i32
  }
  func.func @transform_5(%arg0: i32) -> (i32, i32) {
    %c0_i32 = arith.constant 0 : i32
    %c0_i32_0 = arith.constant 0 : i32
    %c0_i32_1 = arith.constant 0 : i32
    return %c0_i32, %c0_i32_0 : i32, i32
  }
  func.func @transform_6(%arg0: i32) -> (i32, i32) {
    %c0_i32 = arith.constant 0 : i32
    %c0_i32_0 = arith.constant 0 : i32
    %c0_i32_1 = arith.constant 0 : i32
    return %c0_i32, %c0_i32_0 : i32, i32
  }
  func.func @transform_7(%arg0: i32) -> (i32, i32) {
    %c0_i32 = arith.constant 0 : i32
    %c0_i32_0 = arith.constant 0 : i32
    %c0_i32_1 = arith.constant 0 : i32
    return %c0_i32, %c0_i32_0 : i32, i32
  }
  func.func @transform_8(%arg0: i32) -> (i32, i32) {
    %c0_i32 = arith.constant 0 : i32
    %c0_i32_0 = arith.constant 0 : i32
    %c0_i32_1 = arith.constant 0 : i32
    return %c0_i32, %c0_i32_0 : i32, i32
  }
  func.func @transform_9(%arg0: i32) -> (i32, i32, i32) {
    %c0_i32 = arith.constant 0 : i32
    %c0_i32_0 = arith.constant 0 : i32
    %c0_i32_1 = arith.constant 0 : i32
    return %arg0, %c0_i32, %c0_i32_0 : i32, i32, i32
  }
}

</mosaic_0001>

<llo_original>
// kernel: tpu_custom_call.1
$region0: #{tpu_custom_call.1}
  #allocation0 [shape = 'u32[]', space=smem, size = 0x4, offset = 0x4, fixed_abs, tag = 'smem constant byte address 0x4 - core index']
  #allocation1 [shape = 'u32[144,128]{1,0:T(1,128)}', space=vmem, size = 0x12000, scoped, tag = 'internal scratch']
  #allocation2 [shape = 'f32[74,256]{1,0:T(8,128)}', space=vmem, size = 0x14000, scoped, tag = 'scratch operand']
  %s0 = inlined_call_operand.hbm [shape: f32[8,16,256], index: 0, kind: input, shape index: {}]
  %s1 = inlined_call_operand.hbm [shape: bf16[3,256,256], index: 1, kind: input, shape index: {}]
  %s2 = inlined_call_operand.hbm [shape: bf16[3,256,256], index: 2, kind: input, shape index: {}]
  %s3 = inlined_call_operand.vmem [shape: f32[1,256], index: 3, kind: input, shape index: {}]
  %s4 = inlined_call_operand.vmem [shape: f32[1,256], index: 4, kind: input, shape index: {}]
  %s5 = inlined_call_operand.hbm [shape: bf16[256,128], index: 5, kind: input, shape index: {}]
  %s6 = inlined_call_operand.vmem [shape: f32[1,128], index: 6, kind: input, shape index: {}]
  %s7 = inlined_call_operand.hbm [shape: bf16[128,256], index: 7, kind: input, shape index: {}]
  %s8 = inlined_call_operand.vmem [shape: f32[1,256], index: 8, kind: input, shape index: {}]
  %s9 = inlined_call_operand.hbm [shape: f32[8,16,256], index: 9, kind: output, shape index: {}]
  %s10 = sld [smem:[#allocation0]]
  $region89: #{tpu_custom_call.1} parent=0
    _
  %s12 = ssub.s32 1, %s10
  %s13 = scalar_select 0, %s12, %s10
  $region1: #{tpu_custom_call.1} parent=0
    #allocation3 [shape = 'u8[131072]{0}', space=vmem, size = 0x20000, scoped, tag = 'input window, operand 0']
    #allocation4 [shape = 's32[2]{0}', space=sflag, size = 0x8, scoped, tag = 'scoped memory for tpu_custom_call.1']
    #allocation5 [shape = 's32[2]{0}', space=sflag, size = 0x8, scoped, tag = 'scoped memory for tpu_custom_call.1']
    #allocation6 [shape = 'u8[393216]{0}', space=vmem, size = 0x60000, scoped, tag = 'input window, operand 1, single buffered']
    #allocation7 [shape = 's32[1]{0}', space=sflag, size = 0x4, scoped, tag = 'scoped memory for tpu_custom_call.1']
    #allocation8 [shape = 'u8[393216]{0}', space=vmem, size = 0x60000, scoped, tag = 'input window, operand 2, single buffered']
    #allocation9 [shape = 'u8[65536]{0}', space=vmem, size = 0x10000, scoped, tag = 'input window, operand 5, single buffered']
    #allocation10 [shape = 's32[1]{0}', space=sflag, size = 0x4, scoped, tag = 'scoped memory for tpu_custom_call.1']
    #allocation11 [shape = 'u8[65536]{0}', space=vmem, size = 0x10000, scoped, tag = 'input window, operand 7, single buffered']
    #allocation12 [shape = 'u8[131072]{0}', space=vmem, size = 0x20000, scoped, tag = 'output window, operand 0']
    %14 = vsyncpa [#allocation4], 0
    %s15 = scalar_lea.sflag [#allocation4], 1
    %16 = vsyncpa %s15, 0
    %17 = vsyncpa [#allocation7], 0
    %18 = vsyncpa [#allocation10], 0
    %19 = vsyncpa [#allocation5], 0
    %s20 = scalar_lea.sflag [#allocation5], 1
    %21 = vsyncpa %s20, 0
    loop: start=0, step=1, limit=4
    $region2: #{tpu_custom_call.1} parent=1 // loop_pre_header
      _
    $region3: #{tpu_custom_call.1} parent=1 // loop_header
      %s23 = sphi 0, %s27
      %p24 = scmp.ge.s32.totalorder %s23, 4
      %s33 = sphi 0, %s35
      %s36 = sphi 0, %s33
      %s37 = sphi 0, %s36
      %s53 = sphi 0, %s37
      %s57 = sphi 0, %s57
      %s59 = sphi 0, %s57
      %s60 = sphi 0, %s59
      %s74 = sphi 0, %s60
      %s78 = sphi 0, %s78
      %s80 = sphi 0, %s78
      %s81 = sphi 0, %s80
      %s95 = sphi 0, %s81
      %s99 = sphi 0, %s99
      %s101 = sphi 0, %s99
      %s102 = sphi 0, %s101
      %s116 = sphi 0, %s102
      %s120 = sphi 0, %s120
      %s122 = sphi 0, %s120
      %s123 = sphi 0, %s122
      %s137 = sphi 0, %s123
      %s141 = sphi 0, %s141
      %s143 = sphi 0, %s141
      %s144 = sphi 0, %s143
      %s158 = sphi 0, %s144
      %s162 = sphi 0, %s162
      %s164 = sphi 0, %s162
      %s165 = sphi 0, %s164
      %s179 = sphi 0, %s165
      %s183 = sphi 0, %s183
      %s185 = sphi 0, %s183
      %s186 = sphi 0, %s185
      %s200 = sphi 0, %s186
      %s204 = sphi 0, %s204
      %s206 = sphi 0, %s204
      %s207 = sphi 0, %s206
      %s221 = sphi 0, %s207
      %s227 = sphi 0, %s229
      %s230 = sphi 0, %s227
      %s231 = sphi 0, %s230
      %s247 = sphi 0, %s231
    $region4: #{tpu_custom_call.1} parent=1 // loop_header_branch
      %26 = sbr.rel (%p24) target = $region8
    $region5: #{tpu_custom_call.1} parent=1 // loop_body
      %s28 = ssub.s32 %s23, 1
      %s29 = ssub.s32 %s23, 2
      %s30 = sadd.s32 %s23, 1
      %s31 = ssub.s32 %s23, %s30
      %p32 = scmp.eq.s32.totalorder %s31, 0
      %s34 = sadd.s32 %s33, 1
      %s35 = scalar_select %p32, %s33, %s34
      %p38 = pneg %p32
      %p39 = scmp.eq.s32.totalorder %s23, 1
      %p40 = por %p38, %p39
      %p41 = scmp.ne.s32.totalorder %s33, %s36
      %p42 = scmp.eq.s32.totalorder %s23, 0
      %p43 = por %p41, %p42
      %p44 = scmp.ne.s32.totalorder %s33, %s36
      %p45 = scmp.eq.s32.totalorder %s28, 1
      %p46 = por %p44, %p45
      %p47 = scmp.ne.s32.totalorder %s36, %s37
      %p48 = scmp.eq.s32.totalorder %s28, 0
      %p49 = por %p47, %p48
      %p50 = scmp.ne.s32.totalorder %s36, %s37
      %p51 = scmp.eq.s32.totalorder %s29, 1
      %p52 = por %p50, %p51
      %p54 = scmp.ne.s32.totalorder %s37, %s53
      %p55 = scmp.eq.s32.totalorder %s29, 0
      %p56 = por %p54, %p55
      %s58 = sadd.s32 %s57, 1
      %p61 = scmp.eq.s32.totalorder %s23, 1
      %p62 = scmp.ne.s32.totalorder %s57, %s59
      %p63 = scmp.eq.s32.totalorder %s23, 0
      %p64 = por %p62, %p63
      %p65 = scmp.ne.s32.totalorder %s57, %s59
      %p66 = scmp.eq.s32.totalorder %s28, 1
      %p67 = por %p65, %p66
      %p68 = scmp.ne.s32.totalorder %s59, %s60
      %p69 = scmp.eq.s32.totalorder %s28, 0
      %p70 = por %p68, %p69
      %p71 = scmp.ne.s32.totalorder %s59, %s60
      %p72 = scmp.eq.s32.totalorder %s29, 1
      %p73 = por %p71, %p72
      %p75 = scmp.ne.s32.totalorder %s60, %s74
      %p76 = scmp.eq.s32.totalorder %s29, 0
      %p77 = por %p75, %p76
      %s79 = sadd.s32 %s78, 1
      %p82 = scmp.eq.s32.totalorder %s23, 1
      %p83 = scmp.ne.s32.totalorder %s78, %s80
      %p84 = scmp.eq.s32.totalorder %s23, 0
      %p85 = por %p83, %p84
      %p86 = scmp.ne.s32.totalorder %s78, %s80
      %p87 = scmp.eq.s32.totalorder %s28, 1
      %p88 = por %p86, %p87
      %p89 = scmp.ne.s32.totalorder %s80, %s81
      %p90 = scmp.eq.s32.totalorder %s28, 0
      %p91 = por %p89, %p90
      %p92 = scmp.ne.s32.totalorder %s80, %s81
      %p93 = scmp.eq.s32.totalorder %s29, 1
      %p94 = por %p92, %p93
      %p96 = scmp.ne.s32.totalorder %s81, %s95
      %p97 = scmp.eq.s32.totalorder %s29, 0
      %p98 = por %p96, %p97
      %s100 = sadd.s32 %s99, 1
      %p103 = scmp.eq.s32.totalorder %s23, 1
      %p104 = scmp.ne.s32.totalorder %s99, %s101
      %p105 = scmp.eq.s32.totalorder %s23, 0
      %p106 = por %p104, %p105
      %p107 = scmp.ne.s32.totalorder %s99, %s101
      %p108 = scmp.eq.s32.totalorder %s28, 1
      %p109 = por %p107, %p108
      %p110 = scmp.ne.s32.totalorder %s101, %s102
      %p111 = scmp.eq.s32.totalorder %s28, 0
      %p112 = por %p110, %p111
      %p113 = scmp.ne.s32.totalorder %s101, %s102
      %p114 = scmp.eq.s32.totalorder %s29, 1
      %p115 = por %p113, %p114
      %p117 = scmp.ne.s32.totalorder %s102, %s116
      %p118 = scmp.eq.s32.totalorder %s29, 0
      %p119 = por %p117, %p118
      %s121 = sadd.s32 %s120, 1
      %p124 = scmp.eq.s32.totalorder %s23, 1
      %p125 = scmp.ne.s32.totalorder %s120, %s122
      %p126 = scmp.eq.s32.totalorder %s23, 0
      %p127 = por %p125, %p126
      %p128 = scmp.ne.s32.totalorder %s120, %s122
      %p129 = scmp.eq.s32.totalorder %s28, 1
      %p130 = por %p128, %p129
      %p131 = scmp.ne.s32.totalorder %s122, %s123
      %p132 = scmp.eq.s32.totalorder %s28, 0
      %p133 = por %p131, %p132
      %p134 = scmp.ne.s32.totalorder %s122, %s123
      %p135 = scmp.eq.s32.totalorder %s29, 1
      %p136 = por %p134, %p135
      %p138 = scmp.ne.s32.totalorder %s123, %s137
      %p139 = scmp.eq.s32.totalorder %s29, 0
      %p140 = por %p138, %p139
      %s142 = sadd.s32 %s141, 1
      %p145 = scmp.eq.s32.totalorder %s23, 1
      %p146 = scmp.ne.s32.totalorder %s141, %s143
      %p147 = scmp.eq.s32.totalorder %s23, 0
      %p148 = por %p146, %p147
      %p149 = scmp.ne.s32.totalorder %s141, %s143
      %p150 = scmp.eq.s32.totalorder %s28, 1
      %p151 = por %p149, %p150
      %p152 = scmp.ne.s32.totalorder %s143, %s144
      %p153 = scmp.eq.s32.totalorder %s28, 0
      %p154 = por %p152, %p153
      %p155 = scmp.ne.s32.totalorder %s143, %s144
      %p156 = scmp.eq.s32.totalorder %s29, 1
      %p157 = por %p155, %p156
      %p159 = scmp.ne.s32.totalorder %s144, %s158
      %p160 = scmp.eq.s32.totalorder %s29, 0
      %p161 = por %p159, %p160
      %s163 = sadd.s32 %s162, 1
      %p166 = scmp.eq.s32.totalorder %s23, 1
      %p167 = scmp.ne.s32.totalorder %s162, %s164
      %p168 = scmp.eq.s32.totalorder %s23, 0
      %p169 = por %p167, %p168
      %p170 = scmp.ne.s32.totalorder %s162, %s164
      %p171 = scmp.eq.s32.totalorder %s28, 1
      %p172 = por %p170, %p171
      %p173 = scmp.ne.s32.totalorder %s164, %s165
      %p174 = scmp.eq.s32.totalorder %s28, 0
      %p175 = por %p173, %p174
      %p176 = scmp.ne.s32.totalorder %s164, %s165
      %p177 = scmp.eq.s32.totalorder %s29, 1
      %p178 = por %p176, %p177
      %p180 = scmp.ne.s32.totalorder %s165, %s179
      %p181 = scmp.eq.s32.totalorder %s29, 0
      %p182 = por %p180, %p181
      %s184 = sadd.s32 %s183, 1
      %p187 = scmp.eq.s32.totalorder %s23, 1
      %p188 = scmp.ne.s32.totalorder %s183, %s185
      %p189 = scmp.eq.s32.totalorder %s23, 0
      %p190 = por %p188, %p189
      %p191 = scmp.ne.s32.totalorder %s183, %s185
      %p192 = scmp.eq.s32.totalorder %s28, 1
      %p193 = por %p191, %p192
      %p194 = scmp.ne.s32.totalorder %s185, %s186
      %p195 = scmp.eq.s32.totalorder %s28, 0
      %p196 = por %p194, %p195
      %p197 = scmp.ne.s32.totalorder %s185, %s186
      %p198 = scmp.eq.s32.totalorder %s29, 1
      %p199 = por %p197, %p198
      %p201 = scmp.ne.s32.totalorder %s186, %s200
      %p202 = scmp.eq.s32.totalorder %s29, 0
      %p203 = por %p201, %p202
      %s205 = sadd.s32 %s204, 1
      %p208 = scmp.eq.s32.totalorder %s23, 1
      %p209 = scmp.ne.s32.totalorder %s204, %s206
      %p210 = scmp.eq.s32.totalorder %s23, 0
      %p211 = por %p209, %p210
      %p212 = scmp.ne.s32.totalorder %s204, %s206
      %p213 = scmp.eq.s32.totalorder %s28, 1
      %p214 = por %p212, %p213
      %p215 = scmp.ne.s32.totalorder %s206, %s207
      %p216 = scmp.eq.s32.totalorder %s28, 0
      %p217 = por %p215, %p216
      %p218 = scmp.ne.s32.totalorder %s206, %s207
      %p219 = scmp.eq.s32.totalorder %s29, 1
      %p220 = por %p218, %p219
      %p222 = scmp.ne.s32.totalorder %s207, %s221
      %p223 = scmp.eq.s32.totalorder %s29, 0
      %p224 = por %p222, %p223
      %s225 = ssub.s32 %s23, %s30
      %p226 = scmp.eq.s32.totalorder %s225, 0
      %s228 = sadd.s32 %s227, 1
      %s229 = scalar_select %p226, %s227, %s228
      %p232 = pneg %p226
      %p233 = scmp.eq.s32.totalorder %s23, 1
      %p234 = por %p232, %p233
      %p235 = scmp.ne.s32.totalorder %s227, %s230
      %p236 = scmp.eq.s32.totalorder %s23, 0
      %p237 = por %p235, %p236
      %p238 = scmp.ne.s32.totalorder %s227, %s230
      %p239 = scmp.eq.s32.totalorder %s28, 1
      %p240 = por %p238, %p239
      %p241 = scmp.ne.s32.totalorder %s230, %s231
      %p242 = scmp.eq.s32.totalorder %s28, 0
      %p243 = por %p241, %p242
      %p244 = scmp.ne.s32.totalorder %s230, %s231
      %p245 = scmp.eq.s32.totalorder %s29, 1
      %p246 = por %p244, %p245
      %p248 = scmp.ne.s32.totalorder %s231, %s247
      %p249 = scmp.eq.s32.totalorder %s29, 0
      %p250 = por %p248, %p249
      %p251 = scmp.le.s32.totalorder 1, %s23
      %p252 = scmp.lt.s32.totalorder %s23, 3
      %p253 = pnand %p251, %p252
      %p254 = pneg %p253
      // Predicated region
      $region9: #{tpu_custom_call.1} parent=5 // pred_check
        _
      $region10: #{tpu_custom_call.1} parent=5 // pred_check_branch
        %256 = sbr.rel (%p253) target = $region12
      $region11: #{tpu_custom_call.1} parent=5 // pred_region
        %s257 = ssub.s32 %s23, 1
        // Predicated region
        $region13: #{tpu_custom_call.1} parent=11 // pred_check
          %p258 = pneg %p70
        $region14: #{tpu_custom_call.1} parent=11 // pred_check_branch
          %260 = sbr.rel (%p258) target = $region16
        $region15: #{tpu_custom_call.1} parent=11 // pred_region
          %s262 = ssub.s32 12288, 12288
          %263 = vsyncadd [#allocation7], %s262
          %s264 = sshll.u32 [#allocation6], 4
          %s265 = int_to_ptr.vmem [resolvable:$true] %s264
          %270 = dma.hbm_to_vmem [thread:$0]  %s1, 12288, %s265, [#allocation7], 128, 128, 8
        $region16: #{tpu_custom_call.1} parent=11 // pred_fallthru
          _
        // Predicated region
        $region17: #{tpu_custom_call.1} parent=11 // pred_check
          %p271 = pneg %p91
        $region18: #{tpu_custom_call.1} parent=11 // pred_check_branch
          %273 = sbr.rel (%p271) target = $region20
        $region19: #{tpu_custom_call.1} parent=11 // pred_region
          %s275 = ssub.s32 12288, 12288
          %276 = vsyncadd [#allocation7], %s275
          %s277 = sshll.u32 [#allocation8], 4
          %s278 = int_to_ptr.vmem [resolvable:$true] %s277
          %283 = dma.hbm_to_vmem [thread:$0]  %s2, 12288, %s278, [#allocation7], 128, 128, 8
        $region20: #{tpu_custom_call.1} parent=11 // pred_fallthru
          _
        // Predicated region
        $region21: #{tpu_custom_call.1} parent=11 // pred_check
          %p284 = pneg %p112
        $region22: #{tpu_custom_call.1} parent=11 // pred_check_branch
          %286 = sbr.rel (%p284) target = $region24
        $region23: #{tpu_custom_call.1} parent=11 // pred_region
          _
        $region24: #{tpu_custom_call.1} parent=11 // pred_fallthru
          _
        // Predicated region
        $region25: #{tpu_custom_call.1} parent=11 // pred_check
          %p287 = pneg %p133
        $region26: #{tpu_custom_call.1} parent=11 // pred_check_branch
          %289 = sbr.rel (%p287) target = $region28
        $region27: #{tpu_custom_call.1} parent=11 // pred_region
          _
        $region28: #{tpu_custom_call.1} parent=11 // pred_fallthru
          _
        // Predicated region
        $region29: #{tpu_custom_call.1} parent=11 // pred_check
          %p290 = pneg %p154
        $region30: #{tpu_custom_call.1} parent=11 // pred_check_branch
          %292 = sbr.rel (%p290) target = $region32
        $region31: #{tpu_custom_call.1} parent=11 // pred_region
          %s294 = ssub.s32 2048, 2048
          %295 = vsyncadd [#allocation10], %s294
          %s296 = sshll.u32 [#allocation9], 4
          %s297 = int_to_ptr.vmem [resolvable:$true] %s296
          %302 = dma.hbm_to_vmem [thread:$0]  %s5, 2048, %s297, [#allocation10], 64, 64, 4
        $region32: #{tpu_custom_call.1} parent=11 // pred_fallthru
          _
        // Predicated region
        $region33: #{tpu_custom_call.1} parent=11 // pred_check
          %p303 = pneg %p175
        $region34: #{tpu_custom_call.1} parent=11 // pred_check_branch
          %305 = sbr.rel (%p303) target = $region36
        $region35: #{tpu_custom_call.1} parent=11 // pred_region
          _
        $region36: #{tpu_custom_call.1} parent=11 // pred_fallthru
          _
        // Predicated region
        $region37: #{tpu_custom_call.1} parent=11 // pred_check
          %p306 = pneg %p196
        $region38: #{tpu_custom_call.1} parent=11 // pred_check_branch
          %308 = sbr.rel (%p306) target = $region40
        $region39: #{tpu_custom_call.1} parent=11 // pred_region
          %s310 = ssub.s32 2048, 2048
          %311 = vsyncadd [#allocation10], %s310
          %s312 = sshll.u32 [#allocation11], 4
          %s313 = int_to_ptr.vmem [resolvable:$true] %s312
          %318 = dma.hbm_to_vmem [thread:$0]  %s7, 2048, %s313, [#allocation10], 128, 128, 8
        $region40: #{tpu_custom_call.1} parent=11 // pred_fallthru
          _
        // Predicated region
        $region41: #{tpu_custom_call.1} parent=11 // pred_check
          %p319 = pneg %p217
        $region42: #{tpu_custom_call.1} parent=11 // pred_check_branch
          %321 = sbr.rel (%p319) target = $region44
        $region43: #{tpu_custom_call.1} parent=11 // pred_region
          _
        $region44: #{tpu_custom_call.1} parent=11 // pred_fallthru
          _
      $region12: #{tpu_custom_call.1} parent=5 // pred_fallthru
        _
      %p322 = scmp.lt.s32.totalorder %s23, 2
      // Predicated region
      $region45: #{tpu_custom_call.1} parent=5 // pred_check
        %p323 = pneg %p322
      $region46: #{tpu_custom_call.1} parent=5 // pred_check_branch
        %325 = sbr.rel (%p323) target = $region48
      $region47: #{tpu_custom_call.1} parent=5 // pred_region
        // Predicated region
        $region49: #{tpu_custom_call.1} parent=47 // pred_check
          %p326 = pneg %p43
        $region50: #{tpu_custom_call.1} parent=47 // pred_check_branch
          %328 = sbr.rel (%p326) target = $region52
        $region51: #{tpu_custom_call.1} parent=47 // pred_region
          %s329 = sand.u32 %s33, 1
          %s330 = scalar_lea.sflag [#allocation4], %s329
          %s331 = sand.u32 %s33, 1
          %s332 = smul.addr %s331, 128
          %s333 = scalar_lea.vmem [#allocation3], %s332
          %s334 = smul.u32 4, %s23
          %s336 = ssub.s32 2048, 2048
          %337 = vsyncadd %s330, %s336
          %s338 = smul.addr %s334, 4
          %s339 = smul.addr %s338, 128
          %s340 = scalar_lea.hbm %s0, %s339
          %s341 = sshll.u32 %s333, 4
          %s342 = int_to_ptr.vmem [resolvable:$true] %s341
          %347 = dma.hbm_to_vmem [thread:$0]  %s340, 2048, %s342, %s330, 256, 256, 16
        $region52: #{tpu_custom_call.1} parent=47 // pred_fallthru
          _
      $region48: #{tpu_custom_call.1} parent=5 // pred_fallthru
        _
      %p348 = scmp.le.s32.totalorder 1, %s23
      %p349 = scmp.lt.s32.totalorder %s23, 3
      %p350 = pnand %p348, %p349
      %p351 = pneg %p350
      // Predicated region
      $region53: #{tpu_custom_call.1} parent=5 // pred_check
        _
      $region54: #{tpu_custom_call.1} parent=5 // pred_check_branch
        %353 = sbr.rel (%p350) target = $region56
      $region55: #{tpu_custom_call.1} parent=5 // pred_region
        %s354 = ssub.s32 %s23, 1
        %s355 = sand.u32 %s36, 1
        %s356 = scalar_lea.sflag [#allocation4], %s355
        %s357 = sand.u32 %s36, 1
        %s358 = smul.addr %s357, 128
        %s359 = scalar_lea.vmem [#allocation3], %s358
        // Predicated region
        $region57: #{tpu_custom_call.1} parent=55 // pred_check
          %p360 = pneg %p49
        $region58: #{tpu_custom_call.1} parent=55 // pred_check_branch
          %362 = sbr.rel (%p360) target = $region60
        $region59: #{tpu_custom_call.1} parent=55 // pred_region
          %363 = dma.done %s356, 2048
        $region60: #{tpu_custom_call.1} parent=55 // pred_fallthru
          _
        // Predicated region
        $region61: #{tpu_custom_call.1} parent=55 // pred_check
          %p364 = pneg %p70
        $region62: #{tpu_custom_call.1} parent=55 // pred_check_branch
          %366 = sbr.rel (%p364) target = $region64
        $region63: #{tpu_custom_call.1} parent=55 // pred_region
          %367 = dma.done [#allocation7], 12288
        $region64: #{tpu_custom_call.1} parent=55 // pred_fallthru
          _
        // Predicated region
        $region65: #{tpu_custom_call.1} parent=55 // pred_check
          %p368 = pneg %p91
        $region66: #{tpu_custom_call.1} parent=55 // pred_check_branch
          %370 = sbr.rel (%p368) target = $region68
        $region67: #{tpu_custom_call.1} parent=55 // pred_region
          %371 = dma.done [#allocation7], 12288
        $region68: #{tpu_custom_call.1} parent=55 // pred_fallthru
          _
        // Predicated region
        $region69: #{tpu_custom_call.1} parent=55 // pred_check
          %p372 = pneg %p154
        $region70: #{tpu_custom_call.1} parent=55 // pred_check_branch
          %374 = sbr.rel (%p372) target = $region72
        $region71: #{tpu_custom_call.1} parent=55 // pred_region
          %375 = dma.done [#allocation10], 2048
        $region72: #{tpu_custom_call.1} parent=55 // pred_fallthru
          _
        // Predicated region
        $region73: #{tpu_custom_call.1} parent=55 // pred_check
          %p376 = pneg %p196
        $region74: #{tpu_custom_call.1} parent=55 // pred_check_branch
          %378 = sbr.rel (%p376) target = $region76
        $region75: #{tpu_custom_call.1} parent=55 // pred_region
          %379 = dma.done [#allocation10], 2048
        $region76: #{tpu_custom_call.1} parent=55 // pred_fallthru
          _
        %s380 = sand.u32 %s36, 1
        %s381 = scalar_lea.sflag [#allocation4], %s380
        %s382 = sand.u32 %s36, 1
        %s383 = smul.addr %s382, 128
        %s384 = scalar_lea.vmem [#allocation3], %s383
        %p385 = pneg %p49
        %p386 = pneg %p46
        %p387 = pneg %p70
        %p388 = pneg %p67
        %p389 = pneg %p91
        %p390 = pneg %p88
        %p391 = pneg %p112
        %p392 = pneg %p109
        %p393 = pneg %p133
        %p394 = pneg %p130
        %p395 = pneg %p154
        %p396 = pneg %p151
        %p397 = pneg %p175
        %p398 = pneg %p172
        %p399 = pneg %p196
        %p400 = pneg %p193
        %p401 = pneg %p217
        %p402 = pneg %p214
        %p403 = pneg %p243
        %p404 = pneg %p240
        %s405 = sand.u32 %s230, 1
        %s406 = scalar_lea.sflag [#allocation5], %s405
        %s407 = sand.u32 %s230, 1
        %s408 = smul.addr %s407, 128
        %s409 = scalar_lea.vmem [#allocation12], %s408
        %s410 = smul.u32 4, %s28
        %s411 = smul.u32 4, %s28
        %v413 = vlaneseq
        %vm414 = vcmp.ge.s32.totalorder %v413, 0
        %vm415 = vcmp.lt.s32.totalorder %v413, 256
        %vm416 = vmand %vm414, %vm415
        %417 = vst.msk [vmem:[#allocation2] ss:$8 sm:$0x3] %vm416, 0.0
        %418 = vst.msk [vmem:[#allocation2] ss:$8 sm:$0x0] %vm416, 0.0
        %s419 = scalar_lea.vmem [#allocation2], 33
        %420 = vst.msk [vmem:[%s419] ss:$8 sm:$0x3] %vm416, 0.0
        %421 = vst.msk [vmem:[%s419] ss:$8 sm:$0x0] %vm416, 0.0
        %s422 = scalar_lea.vmem [#allocation2], 66
        %423 = vst.msk [vmem:[%s422] ss:$8 sm:$0x3] %vm416, 0.0
        %424 = vst.msk [vmem:[%s422] ss:$8 sm:$0x0] %vm416, 0.0
        %s425 = scalar_lea.vmem [#allocation2], 99
        %426 = vst.msk [vmem:[%s425] ss:$8 sm:$0x3] %vm416, 0.0
        %427 = vst.msk [vmem:[%s425] ss:$8 sm:$0x0] %vm416, 0.0
        %428 = vst [vmem:[#allocation2 + $0x80] sm:$0xf0] 0.0
        %429 = vst [vmem:[#allocation2 + $0x88] sm:$0xf0] 0.0
        %430 = vst [vmem:[#allocation2 + $0x90] sm:$0x3] 0.0
        %431 = vst [vmem:[#allocation2 + $0x98] sm:$0x3] 0.0
        %v432 = vld [vmem:[%s359] sm:$0xff]
        %v433 = vld [vmem:[%s359 + $0x8] sm:$0xff]
        %v434 = vld [vmem:[%s359 + $0x10] sm:$0xff]
        %v435 = vld [vmem:[%s359 + $0x18] sm:$0xff]
        %vm440 = vcmask 1040384
        %v441 = vrot.slane %v432, 7
        %v442 = vrot.slane %v433, 7
        %v443 = vrot.slane %v434, 7
        %v444 = vsel %vm440, %v441, %v443
        %v445 = vrot.slane %v435, 7
        %v446 = vsel %vm440, %v442, %v445
        %453 = vst [vmem:[#allocation2] sm:$0xfe] %v441
        %454 = vst [vmem:[#allocation2 + $0x8] sm:$0xfe] %v442
        %455 = vst [vmem:[#allocation2 + $0x10] sm:$0xff] %v444
        %456 = vst [vmem:[#allocation2 + $0x18] sm:$0xff] %v446
        %457 = vst [vmem:[#allocation2 + $0x20] sm:$0x1] %v443
        %458 = vst [vmem:[#allocation2 + $0x28] sm:$0x1] %v445
        %s459 = scalar_lea.vmem %s359, 32 [#allocation3]
        %v460 = vld [vmem:[%s459] sm:$0xff]
        %v461 = vld [vmem:[%s459 + $0x8] sm:$0xff]
        %v462 = vld [vmem:[%s459 + $0x10] sm:$0xff]
        %v463 = vld [vmem:[%s459 + $0x18] sm:$0xff]
        %vm468 = vcmask 1041408
        %v469 = vrot.slane %v460, 6
        %v470 = vrot.slane %v461, 6
        %v471 = vrot.slane %v462, 6
        %v472 = vsel %vm468, %v469, %v471
        %v473 = vrot.slane %v463, 6
        %v474 = vsel %vm468, %v470, %v473
        %481 = vst [vmem:[#allocation2 + $0x20] sm:$0xfc] %v469
        %482 = vst [vmem:[#allocation2 + $0x28] sm:$0xfc] %v470
        %483 = vst [vmem:[#allocation2 + $0x30] sm:$0xff] %v472
        %484 = vst [vmem:[#allocation2 + $0x38] sm:$0xff] %v474
        %485 = vst [vmem:[#allocation2 + $0x40] sm:$0x3] %v471
        %486 = vst [vmem:[#allocation2 + $0x48] sm:$0x3] %v473
        %s487 = scalar_lea.vmem %s359, 64 [#allocation3]
        %v488 = vld [vmem:[%s487] sm:$0xff]
        %v489 = vld [vmem:[%s487 + $0x8] sm:$0xff]
        %v490 = vld [vmem:[%s487 + $0x10] sm:$0xff]
        %v491 = vld [vmem:[%s487 + $0x18] sm:$0xff]
        %vm496 = vcmask 1042432
        %v497 = vrot.slane %v488, 5
        %v498 = vrot.slane %v489, 5
        %v499 = vrot.slane %v490, 5
        %v500 = vsel %vm496, %v497, %v499
        %v501 = vrot.slane %v491, 5
        %v502 = vsel %vm496, %v498, %v501
        %509 = vst [vmem:[#allocation2 + $0x40] sm:$0xf8] %v497
        %510 = vst [vmem:[#allocation2 + $0x48] sm:$0xf8] %v498
        %511 = vst [vmem:[#allocation2 + $0x50] sm:$0xff] %v500
        %512 = vst [vmem:[#allocation2 + $0x58] sm:$0xff] %v502
        %513 = vst [vmem:[#allocation2 + $0x60] sm:$0x7] %v499
        %514 = vst [vmem:[#allocation2 + $0x68] sm:$0x7] %v501
        %s515 = scalar_lea.vmem %s359, 96 [#allocation3]
        %v516 = vld [vmem:[%s515] sm:$0xff]
        %v517 = vld [vmem:[%s515 + $0x8] sm:$0xff]
        %v518 = vld [vmem:[%s515 + $0x10] sm:$0xff]
        %v519 = vld [vmem:[%s515 + $0x18] sm:$0xff]
        %vm524 = vcmask 1043456
        %v525 = vrot.slane %v516, 4
        %v526 = vrot.slane %v517, 4
        %v527 = vrot.slane %v518, 4
        %v528 = vsel %vm524, %v525, %v527
        %v529 = vrot.slane %v519, 4
        %v530 = vsel %vm524, %v526, %v529
        %537 = vst [vmem:[#allocation2 + $0x60] sm:$0xf0] %v525
        %538 = vst [vmem:[#allocation2 + $0x68] sm:$0xf0] %v526
        %539 = vst [vmem:[#allocation2 + $0x70] sm:$0xff] %v528
        %540 = vst [vmem:[#allocation2 + $0x78] sm:$0xff] %v530
        %541 = vst [vmem:[#allocation2 + $0x80] sm:$0xf] %v527
        %542 = vst [vmem:[#allocation2 + $0x88] sm:$0xf] %v529
        %v543 = vld [vmem:[#allocation2] sm:$0xff]
        %v544 = vld [vmem:[#allocation2 + $0x8] sm:$0xff]
        %v545 = vld [vmem:[#allocation2 + $0x10] sm:$0xff]
        %v546 = vld [vmem:[#allocation2 + $0x18] sm:$0xff]
        %v547 = vld [vmem:[#allocation2 + $0x20] sm:$0xff]
        %v548 = vld [vmem:[#allocation2 + $0x28] sm:$0xff]
        %v549 = vld [vmem:[#allocation2 + $0x30] sm:$0xff]
        %v550 = vld [vmem:[#allocation2 + $0x38] sm:$0xff]
        %v551 = vld [vmem:[#allocation2 + $0x40] sm:$0xff]
        %v552 = vld [vmem:[#allocation2 + $0x48] sm:$0xff]
        %v553 = vld [vmem:[#allocation2 + $0x50] sm:$0xff]
        %v554 = vld [vmem:[#allocation2 + $0x58] sm:$0xff]
        %v555 = vld [vmem:[#allocation2 + $0x60] sm:$0xff]
        %v556 = vld [vmem:[#allocation2 + $0x68] sm:$0xff]
        %v557 = vld [vmem:[#allocation2 + $0x70] sm:$0xff]
        %v558 = vld [vmem:[#allocation2 + $0x78] sm:$0xff]
        %v559 = vld [vmem:[#allocation2 + $0x80] sm:$0xff]
        %v560 = vld [vmem:[#allocation2 + $0x88] sm:$0xff]
        %v561 = vpack.c.bf16 %v545, %v543
        %v562 = vpack.c.bf16 %v546, %v544
        %v563 = vpack.c.bf16 %v549, %v547
        %v564 = vpack.c.bf16 %v550, %v548
        %v565 = vpack.c.bf16 %v553, %v551
        %v566 = vpack.c.bf16 %v554, %v552
        %v567 = vpack.c.bf16 %v557, %v555
        %v568 = vpack.c.bf16 %v558, %v556
        %v569 = vpack.c.bf16 %v559, %v559
        %v570 = vpack.c.bf16 %v560, %v560
        %v571 = vld [vmem:[#allocation2] sm:$0xfe]
        %v572 = vld [vmem:[#allocation2 + $0x8] sm:$0xfe]
        %v573 = vld [vmem:[#allocation2 + $0x90] sm:$0x1]
        %v574 = vld [vmem:[#allocation2 + $0x98] sm:$0x1]
        %v575 = vpack.c.bf16 %v545, %v571
        %v576 = vpack.c.bf16 %v546, %v572
        %v577 = vpack.c.bf16 %v573, %v559
        %v578 = vpack.c.bf16 %v574, %v560
        %v579 = vld [vmem:[#allocation2] sm:$0xfc]
        %v580 = vld [vmem:[#allocation2 + $0x8] sm:$0xfc]
        %v581 = vld [vmem:[#allocation2 + $0x90] sm:$0x3]
        %v582 = vld [vmem:[#allocation2 + $0x98] sm:$0x3]
        %v583 = vpack.c.bf16 %v545, %v579
        %v584 = vpack.c.bf16 %v546, %v580
        %v585 = vpack.c.bf16 %v581, %v559
        %v586 = vpack.c.bf16 %v582, %v560
        %v587 = vld [vmem:[#allocation6] sm:$0xff]
        %v588 = vld [vmem:[#allocation6 + $0x8] sm:$0xff]
        %v589 = vld [vmem:[#allocation6 + $0x10] sm:$0xff]
        %v590 = vld [vmem:[#allocation6 + $0x18] sm:$0xff]
        %v591 = vld [vmem:[#allocation6 + $0x20] sm:$0xff]
        %v592 = vld [vmem:[#allocation6 + $0x28] sm:$0xff]
        %v593 = vld [vmem:[#allocation6 + $0x30] sm:$0xff]
        %v594 = vld [vmem:[#allocation6 + $0x38] sm:$0xff]
        %v595 = vld [vmem:[#allocation6 + $0x40] sm:$0xff]
        %v596 = vld [vmem:[#allocation6 + $0x48] sm:$0xff]
        %v597 = vld [vmem:[#allocation6 + $0x50] sm:$0xff]
        %v598 = vld [vmem:[#allocation6 + $0x58] sm:$0xff]
        %v599 = vld [vmem:[#allocation6 + $0x60] sm:$0xff]
        %v600 = vld [vmem:[#allocation6 + $0x68] sm:$0xff]
        %v601 = vld [vmem:[#allocation6 + $0x70] sm:$0xff]
        %v602 = vld [vmem:[#allocation6 + $0x78] sm:$0xff]
        %v603 = vld [vmem:[#allocation6 + $0x80] sm:$0xff]
        %v604 = vld [vmem:[#allocation6 + $0x88] sm:$0xff]
        %v605 = vld [vmem:[#allocation6 + $0x90] sm:$0xff]
        %v606 = vld [vmem:[#allocation6 + $0x98] sm:$0xff]
        %v607 = vld [vmem:[#allocation6 + $0xa0] sm:$0xff]
        %v608 = vld [vmem:[#allocation6 + $0xa8] sm:$0xff]
        %v609 = vld [vmem:[#allocation6 + $0xb0] sm:$0xff]
        %v610 = vld [vmem:[#allocation6 + $0xb8] sm:$0xff]
        %v611 = vld [vmem:[#allocation6 + $0xc0] sm:$0xff]
        %v612 = vld [vmem:[#allocation6 + $0xc8] sm:$0xff]
        %v613 = vld [vmem:[#allocation6 + $0xd0] sm:$0xff]
        %v614 = vld [vmem:[#allocation6 + $0xd8] sm:$0xff]
        %v615 = vld [vmem:[#allocation6 + $0xe0] sm:$0xff]
        %v616 = vld [vmem:[#allocation6 + $0xe8] sm:$0xff]
        %v617 = vld [vmem:[#allocation6 + $0xf0] sm:$0xff]
        %v618 = vld [vmem:[#allocation6 + $0xf8] sm:$0xff]
        %s619 = scalar_lea.vmem [#allocation6], 256
        %v620 = vld [vmem:[%s619] sm:$0xff]
        %v621 = vld [vmem:[%s619 + $0x8] sm:$0xff]
        %v622 = vld [vmem:[%s619 + $0x10] sm:$0xff]
        %v623 = vld [vmem:[%s619 + $0x18] sm:$0xff]
        %v624 = vld [vmem:[%s619 + $0x20] sm:$0xff]
        %v625 = vld [vmem:[%s619 + $0x28] sm:$0xff]
        %v626 = vld [vmem:[%s619 + $0x30] sm:$0xff]
        %v627 = vld [vmem:[%s619 + $0x38] sm:$0xff]
        %v628 = vld [vmem:[%s619 + $0x40] sm:$0xff]
        %v629 = vld [vmem:[%s619 + $0x48] sm:$0xff]
        %v630 = vld [vmem:[%s619 + $0x50] sm:$0xff]
        %v631 = vld [vmem:[%s619 + $0x58] sm:$0xff]
        %v632 = vld [vmem:[%s619 + $0x60] sm:$0xff]
        %v633 = vld [vmem:[%s619 + $0x68] sm:$0xff]
        %v634 = vld [vmem:[%s619 + $0x70] sm:$0xff]
        %v635 = vld [vmem:[%s619 + $0x78] sm:$0xff]
        %v636 = vld [vmem:[%s619 + $0x80] sm:$0xff]
        %v637 = vld [vmem:[%s619 + $0x88] sm:$0xff]
        %v638 = vld [vmem:[%s619 + $0x90] sm:$0xff]
        %v639 = vld [vmem:[%s619 + $0x98] sm:$0xff]
        %v640 = vld [vmem:[%s619 + $0xa0] sm:$0xff]
        %v641 = vld [vmem:[%s619 + $0xa8] sm:$0xff]
        %v642 = vld [vmem:[%s619 + $0xb0] sm:$0xff]
        %v643 = vld [vmem:[%s619 + $0xb8] sm:$0xff]
        %v644 = vld [vmem:[%s619 + $0xc0] sm:$0xff]
        %v645 = vld [vmem:[%s619 + $0xc8] sm:$0xff]
        %v646 = vld [vmem:[%s619 + $0xd0] sm:$0xff]
        %v647 = vld [vmem:[%s619 + $0xd8] sm:$0xff]
        %v648 = vld [vmem:[%s619 + $0xe0] sm:$0xff]
        %v649 = vld [vmem:[%s619 + $0xe8] sm:$0xff]
        %v650 = vld [vmem:[%s619 + $0xf0] sm:$0xff]
        %v651 = vld [vmem:[%s619 + $0xf8] sm:$0xff]
        %vm652 = vsmask.f32 7424
        %v654 = vshrl.u32 %v575, 16
        %v656 = vshll.u32 %v575, 16
        %v658 = vrot.slane %v656, 1
        %v659 = vor.u32 %v654, %v658
        %v661 = vshll.u32 %v563, 16
        %v663 = vrot.slane %v661, 1
        %v664 = vsel %vm652, %v659, %v663
        %v666 = vshrl.u32 %v576, 16
        %v668 = vshll.u32 %v576, 16
        %v670 = vrot.slane %v668, 1
        %v671 = vor.u32 %v666, %v670
        %v673 = vshll.u32 %v564, 16
        %v675 = vrot.slane %v673, 1
        %v676 = vsel %vm652, %v671, %v675
        %v677 = vshrl.u32 %v563, 16
        %v679 = vor.u32 %v677, %v663
        %v681 = vshll.u32 %v565, 16
        %v683 = vrot.slane %v681, 1
        %v684 = vsel %vm652, %v679, %v683
        %v685 = vshrl.u32 %v564, 16
        %v687 = vor.u32 %v685, %v675
        %v689 = vshll.u32 %v566, 16
        %v691 = vrot.slane %v689, 1
        %v692 = vsel %vm652, %v687, %v691
        %v693 = vshrl.u32 %v565, 16
        %v695 = vor.u32 %v693, %v683
        %v697 = vshll.u32 %v567, 16
        %v699 = vrot.slane %v697, 1
        %v700 = vsel %vm652, %v695, %v699
        %v701 = vshrl.u32 %v566, 16
        %v703 = vor.u32 %v701, %v691
        %v705 = vshll.u32 %v568, 16
        %v707 = vrot.slane %v705, 1
        %v708 = vsel %vm652, %v703, %v707
        %v709 = vshrl.u32 %v567, 16
        %v711 = vor.u32 %v709, %v699
        %v713 = vshll.u32 %v577, 16
        %v715 = vrot.slane %v713, 1
        %v716 = vsel %vm652, %v711, %v715
        %v717 = vshrl.u32 %v568, 16
        %v719 = vor.u32 %v717, %v707
        %v721 = vshll.u32 %v578, 16
        %v723 = vrot.slane %v721, 1
        %v724 = vsel %vm652, %v719, %v723
        %v725 = vshrl.u32 %v577, 16
        %v727 = vor.u32 %v725, %v715
        %v728 = vshrl.u32 %v578, 16
        %v730 = vor.u32 %v728, %v723
        %v773 = vunpack.c.l.b16 %v620
        %v774 = vunpack.c.h.b16 %v620
        %v775 = vunpack.c.l.b16 %v621
        %v776 = vunpack.c.h.b16 %v621
        %v777 = vunpack.c.l.b16 %v622
        %v778 = vunpack.c.h.b16 %v622
        %v779 = vunpack.c.l.b16 %v623
        %v780 = vunpack.c.h.b16 %v623
        %v781 = vunpack.c.l.b16 %v624
        %v782 = vunpack.c.h.b16 %v624
        %v783 = vunpack.c.l.b16 %v625
        %v784 = vunpack.c.h.b16 %v625
        %v785 = vunpack.c.l.b16 %v626
        %v786 = vunpack.c.h.b16 %v626
        %v787 = vunpack.c.l.b16 %v627
        %v788 = vunpack.c.h.b16 %v627
        %v789 = vunpack.c.l.b16 %v628
        %v790 = vunpack.c.h.b16 %v628
        %v791 = vunpack.c.l.b16 %v629
        %v792 = vunpack.c.h.b16 %v629
        %v793 = vunpack.c.l.b16 %v630
        %v794 = vunpack.c.h.b16 %v630
        %v795 = vunpack.c.l.b16 %v631
        %v796 = vunpack.c.h.b16 %v631
        %v797 = vunpack.c.l.b16 %v632
        %v798 = vunpack.c.h.b16 %v632
        %v799 = vunpack.c.l.b16 %v633
        %v800 = vunpack.c.h.b16 %v633
        %v801 = vunpack.c.l.b16 %v634
        %v802 = vunpack.c.h.b16 %v634
        %v803 = vunpack.c.l.b16 %v635
        %v804 = vunpack.c.h.b16 %v635
        %v805 = vunpack.c.l.b16 %v636
        %v806 = vunpack.c.h.b16 %v636
        %v807 = vunpack.c.l.b16 %v637
        %v808 = vunpack.c.h.b16 %v637
        %v809 = vunpack.c.l.b16 %v638
        %v810 = vunpack.c.h.b16 %v638
        %v811 = vunpack.c.l.b16 %v639
        %v812 = vunpack.c.h.b16 %v639
        %v813 = vunpack.c.l.b16 %v640
        %v814 = vunpack.c.h.b16 %v640
        %v815 = vunpack.c.l.b16 %v641
        %v816 = vunpack.c.h.b16 %v641
        %v817 = vunpack.c.l.b16 %v642
        %v818 = vunpack.c.h.b16 %v642
        %v819 = vunpack.c.l.b16 %v643
        %v820 = vunpack.c.h.b16 %v643
        %v821 = vunpack.c.l.b16 %v644
        %v822 = vunpack.c.h.b16 %v644
        %v823 = vunpack.c.l.b16 %v645
        %v824 = vunpack.c.h.b16 %v645
        %v825 = vunpack.c.l.b16 %v646
        %v826 = vunpack.c.h.b16 %v646
        %v827 = vunpack.c.l.b16 %v647
        %v828 = vunpack.c.h.b16 %v647
        %v829 = vunpack.c.l.b16 %v648
        %v830 = vunpack.c.h.b16 %v648
        %v831 = vunpack.c.l.b16 %v649
        %v832 = vunpack.c.h.b16 %v649
        %v833 = vunpack.c.l.b16 %v650
        %v834 = vunpack.c.h.b16 %v650
        %v835 = vunpack.c.l.b16 %v651
        %v836 = vunpack.c.h.b16 %v651
        %v837 = vpack.c.b16 %v775, %v773
        %v838 = vpack.c.b16 %v776, %v774
        %v839 = vpack.c.b16 %v779, %v777
        %v840 = vpack.c.b16 %v780, %v778
        %v841 = vpack.c.b16 %v783, %v781
        %v842 = vpack.c.b16 %v784, %v782
        %v843 = vpack.c.b16 %v787, %v785
        %v844 = vpack.c.b16 %v788, %v786
        %v845 = vpack.c.b16 %v791, %v789
        %v846 = vpack.c.b16 %v792, %v790
        %v847 = vpack.c.b16 %v795, %v793
        %v848 = vpack.c.b16 %v796, %v794
        %v849 = vpack.c.b16 %v799, %v797
        %v850 = vpack.c.b16 %v800, %v798
        %v851 = vpack.c.b16 %v803, %v801
        %v852 = vpack.c.b16 %v804, %v802
        %v853 = vpack.c.b16 %v807, %v805
        %v854 = vpack.c.b16 %v808, %v806
        %v855 = vpack.c.b16 %v811, %v809
        %v856 = vpack.c.b16 %v812, %v810
        %v857 = vpack.c.b16 %v815, %v813
        %v858 = vpack.c.b16 %v816, %v814
        %v859 = vpack.c.b16 %v819, %v817
        %v860 = vpack.c.b16 %v820, %v818
        %v861 = vpack.c.b16 %v823, %v821
        %v862 = vpack.c.b16 %v824, %v822
        %v863 = vpack.c.b16 %v827, %v825
        %v864 = vpack.c.b16 %v828, %v826
        %v865 = vpack.c.b16 %v831, %v829
        %v866 = vpack.c.b16 %v832, %v830
        %v867 = vpack.c.b16 %v835, %v833
        %v868 = vpack.c.b16 %v836, %v834
        %901 = vmatprep.subr.bf16.mxu0 %v852
        %902 = vmatpush1.bf16.msra.mxu0 %v851
        %903 = vmatprep.subr.bf16.mxu0 %v850
        %904 = vmatpush1.bf16.msra.mxu0 %v849
        %905 = vmatprep.subr.bf16.mxu0 %v848
        %906 = vmatpush1.bf16.msra.mxu0 %v847
        %907 = vmatprep.subr.bf16.mxu0 %v846
        %908 = vmatpush1.bf16.msra.mxu0 %v845
        %909 = vmatprep.subr.bf16.mxu0 %v844
        %910 = vmatpush1.bf16.msra.mxu0 %v843
        %911 = vmatprep.subr.bf16.mxu0 %v842
        %912 = vmatpush1.bf16.msra.mxu0 %v841
        %913 = vmatprep.subr.bf16.mxu0 %v840
        %914 = vmatpush1.bf16.msra.mxu0 %v839
        %915 = vmatprep.subr.bf16.mxu0 %v838
        %916 = vmatpush1.bf16.msra.mxu0 %v837
        %917 = vmatprep.subr.bf16.mxu0 %v868
        %918 = vmatpush2.bf16.msra.mxu0 %v867
        %919 = vmatprep.subr.bf16.mxu0 %v866
        %920 = vmatpush2.bf16.msra.mxu0 %v865
        %921 = vmatprep.subr.bf16.mxu0 %v864
        %922 = vmatpush2.bf16.msra.mxu0 %v863
        %923 = vmatprep.subr.bf16.mxu0 %v862
        %924 = vmatpush2.bf16.msra.mxu0 %v861
        %925 = vmatprep.subr.bf16.mxu0 %v860
        %926 = vmatpush2.bf16.msra.mxu0 %v859
        %927 = vmatprep.subr.bf16.mxu0 %v858
        %928 = vmatpush2.bf16.msra.mxu0 %v857
        %929 = vmatprep.subr.bf16.mxu0 %v856
        %930 = vmatpush2.bf16.msra.mxu0 %v855
        %931 = vmatprep.subr.bf16.mxu0 %v854
        %932 = vmatpush2.bf16.msra.mxu0 %v853
        %933 = vmatprep.mubr.bf16.mxu0 %v676
        %934 = vmatmul.mubr.bf16.gmra.mxu0 %v664
        %v935 = vpop.f32.mrf.mxu0
        %v936 = vadd.f32 0.0, %v935
        %v937 = vpop.f32.mrf.mxu0
        %v938 = vadd.f32 0.0, %v937
        %v939 = vpop.f32.mrf.mxu0
        %v940 = vadd.f32 0.0, %v939
        %v941 = vpop.f32.mrf.mxu0
        %v942 = vadd.f32 0.0, %v941
        %943 = vmatprep.mubr.bf16.mxu0 %v692
        %944 = vmatmul.mubr.bf16.gmra.mxu0 %v684
        %v945 = vpop.f32.mrf.mxu0
        %v946 = vadd.f32 0.0, %v945
        %v947 = vpop.f32.mrf.mxu0
        %v948 = vadd.f32 0.0, %v947
        %v949 = vpop.f32.mrf.mxu0
        %v950 = vadd.f32 0.0, %v949
        %v951 = vpop.f32.mrf.mxu0
        %v952 = vadd.f32 0.0, %v951
        %953 = vmatprep.mubr.bf16.mxu0 %v708
        %954 = vmatmul.mubr.bf16.gmra.mxu0 %v700
        %v955 = vpop.f32.mrf.mxu0
        %v956 = vadd.f32 0.0, %v955
        %v957 = vpop.f32.mrf.mxu0
        %v958 = vadd.f32 0.0, %v957
        %v959 = vpop.f32.mrf.mxu0
        %v960 = vadd.f32 0.0, %v959
        %v961 = vpop.f32.mrf.mxu0
        %v962 = vadd.f32 0.0, %v961
        %963 = vmatprep.mubr.bf16.mxu0 %v724
        %964 = vmatmul.mubr.bf16.gmra.mxu0 %v716
        %v965 = vpop.f32.mrf.mxu0
        %v966 = vadd.f32 0.0, %v965
        %v967 = vpop.f32.mrf.mxu0
        %v968 = vadd.f32 0.0, %v967
        %v969 = vpop.f32.mrf.mxu0
        %v970 = vadd.f32 0.0, %v969
        %v971 = vpop.f32.mrf.mxu0
        %v972 = vadd.f32 0.0, %v971
        %973 = vmatprep.mubr.bf16.mxu0 %v730
        %974 = vmatmul.mubr.bf16.gmra.mxu0 %v727
        %v975 = vpop.f32.mrf.mxu0
        %v976 = vadd.f32 0.0, %v975
        %v977 = vpop.f32.mrf.mxu0
        %v978 = vadd.f32 0.0, %v977
        %v979 = vpop.f32.mrf.mxu0
        %v980 = vpop.f32.mrf.mxu0
        %981 = vdwg.mxu0
        %v1014 = vunpack.c.l.b16 %v587
        %v1015 = vunpack.c.h.b16 %v587
        %v1016 = vunpack.c.l.b16 %v588
        %v1017 = vunpack.c.h.b16 %v588
        %v1018 = vunpack.c.l.b16 %v589
        %v1019 = vunpack.c.h.b16 %v589
        %v1020 = vunpack.c.l.b16 %v590
        %v1021 = vunpack.c.h.b16 %v590
        %v1022 = vunpack.c.l.b16 %v591
        %v1023 = vunpack.c.h.b16 %v591
        %v1024 = vunpack.c.l.b16 %v592
        %v1025 = vunpack.c.h.b16 %v592
        %v1026 = vunpack.c.l.b16 %v593
        %v1027 = vunpack.c.h.b16 %v593
        %v1028 = vunpack.c.l.b16 %v594
        %v1029 = vunpack.c.h.b16 %v594
        %v1030 = vunpack.c.l.b16 %v595
        %v1031 = vunpack.c.h.b16 %v595
        %v1032 = vunpack.c.l.b16 %v596
        %v1033 = vunpack.c.h.b16 %v596
        %v1034 = vunpack.c.l.b16 %v597
        %v1035 = vunpack.c.h.b16 %v597
        %v1036 = vunpack.c.l.b16 %v598
        %v1037 = vunpack.c.h.b16 %v598
        %v1038 = vunpack.c.l.b16 %v599
        %v1039 = vunpack.c.h.b16 %v599
        %v1040 = vunpack.c.l.b16 %v600
        %v1041 = vunpack.c.h.b16 %v600
        %v1042 = vunpack.c.l.b16 %v601
        %v1043 = vunpack.c.h.b16 %v601
        %v1044 = vunpack.c.l.b16 %v602
        %v1045 = vunpack.c.h.b16 %v602
        %v1046 = vunpack.c.l.b16 %v603
        %v1047 = vunpack.c.h.b16 %v603
        %v1048 = vunpack.c.l.b16 %v604
        %v1049 = vunpack.c.h.b16 %v604
        %v1050 = vunpack.c.l.b16 %v605
        %v1051 = vunpack.c.h.b16 %v605
        %v1052 = vunpack.c.l.b16 %v606
        %v1053 = vunpack.c.h.b16 %v606
        %v1054 = vunpack.c.l.b16 %v607
        %v1055 = vunpack.c.h.b16 %v607
        %v1056 = vunpack.c.l.b16 %v608
        %v1057 = vunpack.c.h.b16 %v608
        %v1058 = vunpack.c.l.b16 %v609
        %v1059 = vunpack.c.h.b16 %v609
        %v1060 = vunpack.c.l.b16 %v610
        %v1061 = vunpack.c.h.b16 %v610
        %v1062 = vunpack.c.l.b16 %v611
        %v1063 = vunpack.c.h.b16 %v611
        %v1064 = vunpack.c.l.b16 %v612
        %v1065 = vunpack.c.h.b16 %v612
        %v1066 = vunpack.c.l.b16 %v613
        %v1067 = vunpack.c.h.b16 %v613
        %v1068 = vunpack.c.l.b16 %v614
        %v1069 = vunpack.c.h.b16 %v614
        %v1070 = vunpack.c.l.b16 %v615
        %v1071 = vunpack.c.h.b16 %v615
        %v1072 = vunpack.c.l.b16 %v616
        %v1073 = vunpack.c.h.b16 %v616
        %v1074 = vunpack.c.l.b16 %v617
        %v1075 = vunpack.c.h.b16 %v617
        %v1076 = vunpack.c.l.b16 %v618
        %v1077 = vunpack.c.h.b16 %v618
        %v1078 = vpack.c.b16 %v1016, %v1014
        %v1079 = vpack.c.b16 %v1017, %v1015
        %v1080 = vpack.c.b16 %v1020, %v1018
        %v1081 = vpack.c.b16 %v1021, %v1019
        %v1082 = vpack.c.b16 %v1024, %v1022
        %v1083 = vpack.c.b16 %v1025, %v1023
        %v1084 = vpack.c.b16 %v1028, %v1026
        %v1085 = vpack.c.b16 %v1029, %v1027
        %v1086 = vpack.c.b16 %v1032, %v1030
        %v1087 = vpack.c.b16 %v1033, %v1031
        %v1088 = vpack.c.b16 %v1036, %v1034
        %v1089 = vpack.c.b16 %v1037, %v1035
        %v1090 = vpack.c.b16 %v1040, %v1038
        %v1091 = vpack.c.b16 %v1041, %v1039
        %v1092 = vpack.c.b16 %v1044, %v1042
        %v1093 = vpack.c.b16 %v1045, %v1043
        %v1094 = vpack.c.b16 %v1048, %v1046
        %v1095 = vpack.c.b16 %v1049, %v1047
        %v1096 = vpack.c.b16 %v1052, %v1050
        %v1097 = vpack.c.b16 %v1053, %v1051
        %v1098 = vpack.c.b16 %v1056, %v1054
        %v1099 = vpack.c.b16 %v1057, %v1055
        %v1100 = vpack.c.b16 %v1060, %v1058
        %v1101 = vpack.c.b16 %v1061, %v1059
        %v1102 = vpack.c.b16 %v1064, %v1062
        %v1103 = vpack.c.b16 %v1065, %v1063
        %v1104 = vpack.c.b16 %v1068, %v1066
        %v1105 = vpack.c.b16 %v1069, %v1067
        %v1106 = vpack.c.b16 %v1072, %v1070
        %v1107 = vpack.c.b16 %v1073, %v1071
        %v1108 = vpack.c.b16 %v1076, %v1074
        %v1109 = vpack.c.b16 %v1077, %v1075
        %1142 = vmatprep.subr.bf16.mxu0 %v1093
        %1143 = vmatpush1.bf16.msra.mxu0 %v1092
        %1144 = vmatprep.subr.bf16.mxu0 %v1091
        %1145 = vmatpush1.bf16.msra.mxu0 %v1090
        %1146 = vmatprep.subr.bf16.mxu0 %v1089
        %1147 = vmatpush1.bf16.msra.mxu0 %v1088
        %1148 = vmatprep.subr.bf16.mxu0 %v1087
        %1149 = vmatpush1.bf16.msra.mxu0 %v1086
        %1150 = vmatprep.subr.bf16.mxu0 %v1085
        %1151 = vmatpush1.bf16.msra.mxu0 %v1084
        %1152 = vmatprep.subr.bf16.mxu0 %v1083
        %1153 = vmatpush1.bf16.msra.mxu0 %v1082
        %1154 = vmatprep.subr.bf16.mxu0 %v1081
        %1155 = vmatpush1.bf16.msra.mxu0 %v1080
        %1156 = vmatprep.subr.bf16.mxu0 %v1079
        %1157 = vmatpush1.bf16.msra.mxu0 %v1078
        %1158 = vmatprep.subr.bf16.mxu0 %v1109
        %1159 = vmatpush2.bf16.msra.mxu0 %v1108
        %1160 = vmatprep.subr.bf16.mxu0 %v1107
        %1161 = vmatpush2.bf16.msra.mxu0 %v1106
        %1162 = vmatprep.subr.bf16.mxu0 %v1105
        %1163 = vmatpush2.bf16.msra.mxu0 %v1104
        %1164 = vmatprep.subr.bf16.mxu0 %v1103
        %1165 = vmatpush2.bf16.msra.mxu0 %v1102
        %1166 = vmatprep.subr.bf16.mxu0 %v1101
        %1167 = vmatpush2.bf16.msra.mxu0 %v1100
        %1168 = vmatprep.subr.bf16.mxu0 %v1099
        %1169 = vmatpush2.bf16.msra.mxu0 %v1098
        %1170 = vmatprep.subr.bf16.mxu0 %v1097
        %1171 = vmatpush2.bf16.msra.mxu0 %v1096
        %1172 = vmatprep.subr.bf16.mxu0 %v1095
        %1173 = vmatpush2.bf16.msra.mxu0 %v1094
        %1174 = vmatprep.mubr.bf16.mxu0 %v562
        %1175 = vmatmul.mubr.bf16.gmra.mxu0 %v561
        %v1176 = vpop.f32.mrf.mxu0
        %v1177 = vadd.f32 %v936, %v1176
        %v1178 = vpop.f32.mrf.mxu0
        %v1179 = vadd.f32 %v938, %v1178
        %v1180 = vpop.f32.mrf.mxu0
        %v1181 = vadd.f32 %v940, %v1180
        %v1182 = vpop.f32.mrf.mxu0
        %v1183 = vadd.f32 %v942, %v1182
        %1184 = vmatprep.mubr.bf16.mxu0 %v564
        %1185 = vmatmul.mubr.bf16.gmra.mxu0 %v563
        %v1186 = vpop.f32.mrf.mxu0
        %v1187 = vadd.f32 %v946, %v1186
        %v1188 = vpop.f32.mrf.mxu0
        %v1189 = vadd.f32 %v948, %v1188
        %v1190 = vpop.f32.mrf.mxu0
        %v1191 = vadd.f32 %v950, %v1190
        %v1192 = vpop.f32.mrf.mxu0
        %v1193 = vadd.f32 %v952, %v1192
        %1194 = vmatprep.mubr.bf16.mxu0 %v566
        %1195 = vmatmul.mubr.bf16.gmra.mxu0 %v565
        %v1196 = vpop.f32.mrf.mxu0
        %v1197 = vadd.f32 %v956, %v1196
        %v1198 = vpop.f32.mrf.mxu0
        %v1199 = vadd.f32 %v958, %v1198
        %v1200 = vpop.f32.mrf.mxu0
        %v1201 = vadd.f32 %v960, %v1200
        %v1202 = vpop.f32.mrf.mxu0
        %v1203 = vadd.f32 %v962, %v1202
        %1204 = vmatprep.mubr.bf16.mxu0 %v568
        %1205 = vmatmul.mubr.bf16.gmra.mxu0 %v567
        %v1206 = vpop.f32.mrf.mxu0
        %v1207 = vadd.f32 %v966, %v1206
        %v1208 = vpop.f32.mrf.mxu0
        %v1209 = vadd.f32 %v968, %v1208
        %v1210 = vpop.f32.mrf.mxu0
        %v1211 = vadd.f32 %v970, %v1210
        %v1212 = vpop.f32.mrf.mxu0
        %v1213 = vadd.f32 %v972, %v1212
        %1214 = vmatprep.mubr.bf16.mxu0 %v570
        %1215 = vmatmul.mubr.bf16.gmra.mxu0 %v569
        %v1216 = vpop.f32.mrf.mxu0
        %v1217 = vadd.f32 %v976, %v1216
        %v1218 = vpop.f32.mrf.mxu0
        %v1219 = vadd.f32 %v978, %v1218
        %v1220 = vpop.f32.mrf.mxu0
        %v1221 = vpop.f32.mrf.mxu0
        %1222 = vdwg.mxu0
        %s1223 = scalar_lea.vmem [#allocation6], 512
        %v1224 = vld [vmem:[%s1223] sm:$0xff]
        %v1225 = vld [vmem:[%s1223 + $0x8] sm:$0xff]
        %v1226 = vld [vmem:[%s1223 + $0x10] sm:$0xff]
        %v1227 = vld [vmem:[%s1223 + $0x18] sm:$0xff]
        %v1228 = vld [vmem:[%s1223 + $0x20] sm:$0xff]
        %v1229 = vld [vmem:[%s1223 + $0x28] sm:$0xff]
        %v1230 = vld [vmem:[%s1223 + $0x30] sm:$0xff]
        %v1231 = vld [vmem:[%s1223 + $0x38] sm:$0xff]
        %v1232 = vld [vmem:[%s1223 + $0x40] sm:$0xff]
        %v1233 = vld [vmem:[%s1223 + $0x48] sm:$0xff]
        %v1234 = vld [vmem:[%s1223 + $0x50] sm:$0xff]
        %v1235 = vld [vmem:[%s1223 + $0x58] sm:$0xff]
        %v1236 = vld [vmem:[%s1223 + $0x60] sm:$0xff]
        %v1237 = vld [vmem:[%s1223 + $0x68] sm:$0xff]
        %v1238 = vld [vmem:[%s1223 + $0x70] sm:$0xff]
        %v1239 = vld [vmem:[%s1223 + $0x78] sm:$0xff]
        %v1240 = vld [vmem:[%s1223 + $0x80] sm:$0xff]
        %v1241 = vld [vmem:[%s1223 + $0x88] sm:$0xff]
        %v1242 = vld [vmem:[%s1223 + $0x90] sm:$0xff]
        %v1243 = vld [vmem:[%s1223 + $0x98] sm:$0xff]
        %v1244 = vld [vmem:[%s1223 + $0xa0] sm:$0xff]
        %v1245 = vld [vmem:[%s1223 + $0xa8] sm:$0xff]
        %v1246 = vld [vmem:[%s1223 + $0xb0] sm:$0xff]
        %v1247 = vld [vmem:[%s1223 + $0xb8] sm:$0xff]
        %v1248 = vld [vmem:[%s1223 + $0xc0] sm:$0xff]
        %v1249 = vld [vmem:[%s1223 + $0xc8] sm:$0xff]
        %v1250 = vld [vmem:[%s1223 + $0xd0] sm:$0xff]
        %v1251 = vld [vmem:[%s1223 + $0xd8] sm:$0xff]
        %v1252 = vld [vmem:[%s1223 + $0xe0] sm:$0xff]
        %v1253 = vld [vmem:[%s1223 + $0xe8] sm:$0xff]
        %v1254 = vld [vmem:[%s1223 + $0xf0] sm:$0xff]
        %v1255 = vld [vmem:[%s1223 + $0xf8] sm:$0xff]
        %vm1266 = vcmask 1046528
        %v1267 = vrot.slane %v583, 1
        %v1268 = vrot.slane %v563, 1
        %v1269 = vsel %vm1266, %v1267, %v1268
        %v1270 = vrot.slane %v584, 1
        %v1271 = vrot.slane %v564, 1
        %v1272 = vsel %vm1266, %v1270, %v1271
        %v1273 = vrot.slane %v565, 1
        %v1274 = vsel %vm1266, %v1268, %v1273
        %v1275 = vrot.slane %v566, 1
        %v1276 = vsel %vm1266, %v1271, %v1275
        %v1277 = vrot.slane %v567, 1
        %v1278 = vsel %vm1266, %v1273, %v1277
        %v1279 = vrot.slane %v568, 1
        %v1280 = vsel %vm1266, %v1275, %v1279
        %v1281 = vrot.slane %v585, 1
        %v1282 = vsel %vm1266, %v1277, %v1281
        %v1283 = vrot.slane %v586, 1
        %v1284 = vsel %vm1266, %v1279, %v1283
        %v1327 = vunpack.c.l.b16 %v1224
        %v1328 = vunpack.c.h.b16 %v1224
        %v1329 = vunpack.c.l.b16 %v1225
        %v1330 = vunpack.c.h.b16 %v1225
        %v1331 = vunpack.c.l.b16 %v1226
        %v1332 = vunpack.c.h.b16 %v1226
        %v1333 = vunpack.c.l.b16 %v1227
        %v1334 = vunpack.c.h.b16 %v1227
        %v1335 = vunpack.c.l.b16 %v1228
        %v1336 = vunpack.c.h.b16 %v1228
        %v1337 = vunpack.c.l.b16 %v1229
        %v1338 = vunpack.c.h.b16 %v1229
        %v1339 = vunpack.c.l.b16 %v1230
        %v1340 = vunpack.c.h.b16 %v1230
        %v1341 = vunpack.c.l.b16 %v1231
        %v1342 = vunpack.c.h.b16 %v1231
        %v1343 = vunpack.c.l.b16 %v1232
        %v1344 = vunpack.c.h.b16 %v1232
        %v1345 = vunpack.c.l.b16 %v1233
        %v1346 = vunpack.c.h.b16 %v1233
        %v1347 = vunpack.c.l.b16 %v1234
        %v1348 = vunpack.c.h.b16 %v1234
        %v1349 = vunpack.c.l.b16 %v1235
        %v1350 = vunpack.c.h.b16 %v1235
        %v1351 = vunpack.c.l.b16 %v1236
        %v1352 = vunpack.c.h.b16 %v1236
        %v1353 = vunpack.c.l.b16 %v1237
        %v1354 = vunpack.c.h.b16 %v1237
        %v1355 = vunpack.c.l.b16 %v1238
        %v1356 = vunpack.c.h.b16 %v1238
        %v1357 = vunpack.c.l.b16 %v1239
        %v1358 = vunpack.c.h.b16 %v1239
        %v1359 = vunpack.c.l.b16 %v1240
        %v1360 = vunpack.c.h.b16 %v1240
        %v1361 = vunpack.c.l.b16 %v1241
        %v1362 = vunpack.c.h.b16 %v1241
        %v1363 = vunpack.c.l.b16 %v1242
        %v1364 = vunpack.c.h.b16 %v1242
        %v1365 = vunpack.c.l.b16 %v1243
        %v1366 = vunpack.c.h.b16 %v1243
        %v1367 = vunpack.c.l.b16 %v1244
        %v1368 = vunpack.c.h.b16 %v1244
        %v1369 = vunpack.c.l.b16 %v1245
        %v1370 = vunpack.c.h.b16 %v1245
        %v1371 = vunpack.c.l.b16 %v1246
        %v1372 = vunpack.c.h.b16 %v1246
        %v1373 = vunpack.c.l.b16 %v1247
        %v1374 = vunpack.c.h.b16 %v1247
        %v1375 = vunpack.c.l.b16 %v1248
        %v1376 = vunpack.c.h.b16 %v1248
        %v1377 = vunpack.c.l.b16 %v1249
        %v1378 = vunpack.c.h.b16 %v1249
        %v1379 = vunpack.c.l.b16 %v1250
        %v1380 = vunpack.c.h.b16 %v1250
        %v1381 = vunpack.c.l.b16 %v1251
        %v1382 = vunpack.c.h.b16 %v1251
        %v1383 = vunpack.c.l.b16 %v1252
        %v1384 = vunpack.c.h.b16 %v1252
        %v1385 = vunpack.c.l.b16 %v1253
        %v1386 = vunpack.c.h.b16 %v1253
        %v1387 = vunpack.c.l.b16 %v1254
        %v1388 = vunpack.c.h.b16 %v1254
        %v1389 = vunpack.c.l.b16 %v1255
        %v1390 = vunpack.c.h.b16 %v1255
        %v1391 = vpack.c.b16 %v1329, %v1327
        %v1392 = vpack.c.b16 %v1330, %v1328
        %v1393 = vpack.c.b16 %v1333, %v1331
        %v1394 = vpack.c.b16 %v1334, %v1332
        %v1395 = vpack.c.b16 %v1337, %v1335
        %v1396 = vpack.c.b16 %v1338, %v1336
        %v1397 = vpack.c.b16 %v1341, %v1339
        %v1398 = vpack.c.b16 %v1342, %v1340
        %v1399 = vpack.c.b16 %v1345, %v1343
        %v1400 = vpack.c.b16 %v1346, %v1344
        %v1401 = vpack.c.b16 %v1349, %v1347
        %v1402 = vpack.c.b16 %v1350, %v1348
        %v1403 = vpack.c.b16 %v1353, %v1351
        %v1404 = vpack.c.b16 %v1354, %v1352
        %v1405 = vpack.c.b16 %v1357, %v1355
        %v1406 = vpack.c.b16 %v1358, %v1356
        %v1407 = vpack.c.b16 %v1361, %v1359
        %v1408 = vpack.c.b16 %v1362, %v1360
        %v1409 = vpack.c.b16 %v1365, %v1363
        %v1410 = vpack.c.b16 %v1366, %v1364
        %v1411 = vpack.c.b16 %v1369, %v1367
        %v1412 = vpack.c.b16 %v1370, %v1368
        %v1413 = vpack.c.b16 %v1373, %v1371
        %v1414 = vpack.c.b16 %v1374, %v1372
        %v1415 = vpack.c.b16 %v1377, %v1375
        %v1416 = vpack.c.b16 %v1378, %v1376
        %v1417 = vpack.c.b16 %v1381, %v1379
        %v1418 = vpack.c.b16 %v1382, %v1380
        %v1419 = vpack.c.b16 %v1385, %v1383
        %v1420 = vpack.c.b16 %v1386, %v1384
        %v1421 = vpack.c.b16 %v1389, %v1387
        %v1422 = vpack.c.b16 %v1390, %v1388
        %1455 = vmatprep.subr.bf16.mxu0 %v1406
        %1456 = vmatpush1.bf16.msra.mxu0 %v1405
        %1457 = vmatprep.subr.bf16.mxu0 %v1404
        %1458 = vmatpush1.bf16.msra.mxu0 %v1403
        %1459 = vmatprep.subr.bf16.mxu0 %v1402
        %1460 = vmatpush1.bf16.msra.mxu0 %v1401
        %1461 = vmatprep.subr.bf16.mxu0 %v1400
        %1462 = vmatpush1.bf16.msra.mxu0 %v1399
        %1463 = vmatprep.subr.bf16.mxu0 %v1398
        %1464 = vmatpush1.bf16.msra.mxu0 %v1397
        %1465 = vmatprep.subr.bf16.mxu0 %v1396
        %1466 = vmatpush1.bf16.msra.mxu0 %v1395
        %1467 = vmatprep.subr.bf16.mxu0 %v1394
        %1468 = vmatpush1.bf16.msra.mxu0 %v1393
        %1469 = vmatprep.subr.bf16.mxu0 %v1392
        %1470 = vmatpush1.bf16.msra.mxu0 %v1391
        %1471 = vmatprep.subr.bf16.mxu0 %v1422
        %1472 = vmatpush2.bf16.msra.mxu0 %v1421
        %1473 = vmatprep.subr.bf16.mxu0 %v1420
        %1474 = vmatpush2.bf16.msra.mxu0 %v1419
        %1475 = vmatprep.subr.bf16.mxu0 %v1418
        %1476 = vmatpush2.bf16.msra.mxu0 %v1417
        %1477 = vmatprep.subr.bf16.mxu0 %v1416
        %1478 = vmatpush2.bf16.msra.mxu0 %v1415
        %1479 = vmatprep.subr.bf16.mxu0 %v1414
        %1480 = vmatpush2.bf16.msra.mxu0 %v1413
        %1481 = vmatprep.subr.bf16.mxu0 %v1412
        %1482 = vmatpush2.bf16.msra.mxu0 %v1411
        %1483 = vmatprep.subr.bf16.mxu0 %v1410
        %1484 = vmatpush2.bf16.msra.mxu0 %v1409
        %1485 = vmatprep.subr.bf16.mxu0 %v1408
        %1486 = vmatpush2.bf16.msra.mxu0 %v1407
        %1487 = vmatprep.mubr.bf16.mxu0 %v1272
        %1488 = vmatmul.mubr.bf16.gmra.mxu0 %v1269
        %v1489 = vpop.f32.mrf.mxu0
        %v1490 = vadd.f32 0.0, %v1489
        %v1491 = vpop.f32.mrf.mxu0
        %v1492 = vadd.f32 0.0, %v1491
        %v1493 = vpop.f32.mrf.mxu0
        %v1494 = vadd.f32 0.0, %v1493
        %v1495 = vpop.f32.mrf.mxu0
        %v1496 = vadd.f32 0.0, %v1495
        %1497 = vmatprep.mubr.bf16.mxu0 %v1276
        %1498 = vmatmul.mubr.bf16.gmra.mxu0 %v1274
        %v1499 = vpop.f32.mrf.mxu0
        %v1500 = vadd.f32 0.0, %v1499
        %v1501 = vpop.f32.mrf.mxu0
        %v1502 = vadd.f32 0.0, %v1501
        %v1503 = vpop.f32.mrf.mxu0
        %v1504 = vadd.f32 0.0, %v1503
        %v1505 = vpop.f32.mrf.mxu0
        %v1506 = vadd.f32 0.0, %v1505
        %1507 = vmatprep.mubr.bf16.mxu0 %v1280
        %1508 = vmatmul.mubr.bf16.gmra.mxu0 %v1278
        %v1509 = vpop.f32.mrf.mxu0
        %v1510 = vadd.f32 0.0, %v1509
        %v1511 = vpop.f32.mrf.mxu0
        %v1512 = vadd.f32 0.0, %v1511
        %v1513 = vpop.f32.mrf.mxu0
        %v1514 = vadd.f32 0.0, %v1513
        %v1515 = vpop.f32.mrf.mxu0
        %v1516 = vadd.f32 0.0, %v1515
        %1517 = vmatprep.mubr.bf16.mxu0 %v1284
        %1518 = vmatmul.mubr.bf16.gmra.mxu0 %v1282
        %v1519 = vpop.f32.mrf.mxu0
        %v1520 = vadd.f32 0.0, %v1519
        %v1521 = vpop.f32.mrf.mxu0
        %v1522 = vadd.f32 0.0, %v1521
        %v1523 = vpop.f32.mrf.mxu0
        %v1524 = vadd.f32 0.0, %v1523
        %v1525 = vpop.f32.mrf.mxu0
        %v1526 = vadd.f32 0.0, %v1525
        %1527 = vmatprep.mubr.bf16.mxu0 %v1283
        %1528 = vmatmul.mubr.bf16.gmra.mxu0 %v1281
        %v1529 = vpop.f32.mrf.mxu0
        %v1530 = vadd.f32 0.0, %v1529
        %v1531 = vpop.f32.mrf.mxu0
        %v1532 = vadd.f32 0.0, %v1531
        %v1533 = vpop.f32.mrf.mxu0
        %v1534 = vpop.f32.mrf.mxu0
        %1535 = vdwg.mxu0
        %v1536 = vadd.f32 %v1177, %v1490
        %v1537 = vadd.f32 %v1179, %v1492
        %v1538 = vadd.f32 %v1181, %v1494
        %v1539 = vadd.f32 %v1183, %v1496
        %v1540 = vadd.f32 %v1187, %v1500
        %v1541 = vadd.f32 %v1189, %v1502
        %v1542 = vadd.f32 %v1191, %v1504
        %v1543 = vadd.f32 %v1193, %v1506
        %v1544 = vadd.f32 %v1197, %v1510
        %v1545 = vadd.f32 %v1199, %v1512
        %v1546 = vadd.f32 %v1201, %v1514
        %v1547 = vadd.f32 %v1203, %v1516
        %v1548 = vadd.f32 %v1207, %v1520
        %v1549 = vadd.f32 %v1209, %v1522
        %v1550 = vadd.f32 %v1211, %v1524
        %v1551 = vadd.f32 %v1213, %v1526
        %v1552 = vadd.f32 %v1217, %v1530
        %v1553 = vadd.f32 %v1219, %v1532
        %v1554 = vld [vmem:[%s3] sm:$0x3]
        %v1556 = vlaneseq
        %v1557 = vshrl.u32 %v1556, 7
        %v1558 = vsub.s32 0, %v1557
        %v1559 = vrot.slane %v1554, %v1558
        %v1560 = vlaneseq
        %v1561 = vshrl.u32 %v1560, 7
        %v1562 = vsub.s32 1, %v1561
        %v1563 = vrot.slane %v1554, %v1562
        %v1566 = vadd.f32 %v1536, %v1559
        %v1567 = vadd.f32 %v1537, %v1563
        %v1568 = vadd.f32 %v1538, %v1559
        %v1569 = vadd.f32 %v1539, %v1563
        %v1570 = vadd.f32 %v1540, %v1559
        %v1571 = vadd.f32 %v1541, %v1563
        %v1572 = vadd.f32 %v1542, %v1559
        %v1573 = vadd.f32 %v1543, %v1563
        %v1574 = vadd.f32 %v1544, %v1559
        %v1575 = vadd.f32 %v1545, %v1563
        %v1576 = vadd.f32 %v1546, %v1559
        %v1577 = vadd.f32 %v1547, %v1563
        %v1578 = vadd.f32 %v1548, %v1559
        %v1579 = vadd.f32 %v1549, %v1563
        %v1580 = vadd.f32 %v1550, %v1559
        %v1581 = vadd.f32 %v1551, %v1563
        %v1582 = vadd.f32 %v1552, %v1559
        %v1583 = vadd.f32 %v1553, %v1563
        %v1584 = vmax.f32 %v1566, 0.0
        %v1585 = vmax.f32 %v1567, 0.0
        %v1586 = vmax.f32 %v1568, 0.0
        %v1587 = vmax.f32 %v1569, 0.0
        %v1588 = vmax.f32 %v1570, 0.0
        %v1589 = vmax.f32 %v1571, 0.0
        %v1590 = vmax.f32 %v1572, 0.0
        %v1591 = vmax.f32 %v1573, 0.0
        %v1592 = vmax.f32 %v1574, 0.0
        %v1593 = vmax.f32 %v1575, 0.0
        %v1594 = vmax.f32 %v1576, 0.0
        %v1595 = vmax.f32 %v1577, 0.0
        %v1596 = vmax.f32 %v1578, 0.0
        %v1597 = vmax.f32 %v1579, 0.0
        %v1598 = vmax.f32 %v1580, 0.0
        %v1599 = vmax.f32 %v1581, 0.0
        %v1600 = vmax.f32 %v1582, 0.0
        %v1601 = vmax.f32 %v1583, 0.0
        %v1620 = vrot.slane %v1584, 7
        %v1621 = vrot.slane %v1585, 7
        %v1622 = vrot.slane %v1586, 7
        %v1623 = vsel %vm440, %v1620, %v1622
        %v1624 = vrot.slane %v1587, 7
        %v1625 = vsel %vm440, %v1621, %v1624
        %v1626 = vrot.slane %v1588, 7
        %v1627 = vsel %vm440, %v1622, %v1626
        %v1628 = vrot.slane %v1589, 7
        %v1629 = vsel %vm440, %v1624, %v1628
        %v1630 = vrot.slane %v1590, 7
        %v1631 = vsel %vm440, %v1626, %v1630
        %v1632 = vrot.slane %v1591, 7
        %v1633 = vsel %vm440, %v1628, %v1632
        %v1634 = vrot.slane %v1592, 7
        %v1635 = vsel %vm440, %v1630, %v1634
        %v1636 = vrot.slane %v1593, 7
        %v1637 = vsel %vm440, %v1632, %v1636
        %v1638 = vrot.slane %v1594, 7
        %v1639 = vsel %vm440, %v1634, %v1638
        %v1640 = vrot.slane %v1595, 7
        %v1641 = vsel %vm440, %v1636, %v1640
        %v1642 = vrot.slane %v1596, 7
        %v1643 = vsel %vm440, %v1638, %v1642
        %v1644 = vrot.slane %v1597, 7
        %v1645 = vsel %vm440, %v1640, %v1644
        %v1646 = vrot.slane %v1598, 7
        %v1647 = vsel %vm440, %v1642, %v1646
        %v1648 = vrot.slane %v1599, 7
        %v1649 = vsel %vm440, %v1644, %v1648
        %v1650 = vrot.slane %v1600, 7
        %v1651 = vsel %vm440, %v1646, %v1650
        %v1652 = vrot.slane %v1601, 7
        %v1653 = vsel %vm440, %v1648, %v1652
        %1674 = vst [vmem:[#allocation2] sm:$0xfe] %v1620
        %1675 = vst [vmem:[#allocation2 + $0x8] sm:$0xfe] %v1621
        %1676 = vst [vmem:[#allocation2 + $0x10] sm:$0xff] %v1623
        %1677 = vst [vmem:[#allocation2 + $0x18] sm:$0xff] %v1625
        %1678 = vst [vmem:[#allocation2 + $0x20] sm:$0xff] %v1627
        %1679 = vst [vmem:[#allocation2 + $0x28] sm:$0xff] %v1629
        %1680 = vst [vmem:[#allocation2 + $0x30] sm:$0xff] %v1631
        %1681 = vst [vmem:[#allocation2 + $0x38] sm:$0xff] %v1633
        %1682 = vst [vmem:[#allocation2 + $0x40] sm:$0xff] %v1635
        %1683 = vst [vmem:[#allocation2 + $0x48] sm:$0xff] %v1637
        %1684 = vst [vmem:[#allocation2 + $0x50] sm:$0xff] %v1639
        %1685 = vst [vmem:[#allocation2 + $0x58] sm:$0xff] %v1641
        %1686 = vst [vmem:[#allocation2 + $0x60] sm:$0xff] %v1643
        %1687 = vst [vmem:[#allocation2 + $0x68] sm:$0xff] %v1645
        %1688 = vst [vmem:[#allocation2 + $0x70] sm:$0xff] %v1647
        %1689 = vst [vmem:[#allocation2 + $0x78] sm:$0xff] %v1649
        %1690 = vst [vmem:[#allocation2 + $0x80] sm:$0xff] %v1651
        %1691 = vst [vmem:[#allocation2 + $0x88] sm:$0xff] %v1653
        %1692 = vst [vmem:[#allocation2 + $0x90] sm:$0x1] %v1650
        %1693 = vst [vmem:[#allocation2 + $0x98] sm:$0x1] %v1652
        %1694 = vst.msk [vmem:[%s419] ss:$8 sm:$0x3] %vm416, 0.0
        %1695 = vst.msk [vmem:[%s419] ss:$8 sm:$0x0] %vm416, 0.0
        %1696 = vst.msk [vmem:[%s422] ss:$8 sm:$0x3] %vm416, 0.0
        %1697 = vst.msk [vmem:[%s422] ss:$8 sm:$0x0] %vm416, 0.0
        %1698 = vst.msk [vmem:[%s425] ss:$8 sm:$0x3] %vm416, 0.0
        %1699 = vst.msk [vmem:[%s425] ss:$8 sm:$0x0] %vm416, 0.0
        %s1700 = scalar_lea.vmem [#allocation2], 132
        %1701 = vst.msk [vmem:[%s1700] ss:$8 sm:$0x3] %vm416, 0.0
        %1702 = vst.msk [vmem:[%s1700] ss:$8 sm:$0x0] %vm416, 0.0
        %v1703 = vld [vmem:[#allocation2] sm:$0xff]
        %v1704 = vld [vmem:[#allocation2 + $0x8] sm:$0xff]
        %v1705 = vld [vmem:[#allocation2 + $0x10] sm:$0xff]
        %v1706 = vld [vmem:[#allocation2 + $0x18] sm:$0xff]
        %v1707 = vld [vmem:[#allocation2 + $0x20] sm:$0xff]
        %v1708 = vld [vmem:[#allocation2 + $0x28] sm:$0xff]
        %v1709 = vld [vmem:[#allocation2 + $0x30] sm:$0xff]
        %v1710 = vld [vmem:[#allocation2 + $0x38] sm:$0xff]
        %v1711 = vld [vmem:[#allocation2 + $0x40] sm:$0xff]
        %v1712 = vld [vmem:[#allocation2 + $0x48] sm:$0xff]
        %v1713 = vld [vmem:[#allocation2 + $0x50] sm:$0xff]
        %v1714 = vld [vmem:[#allocation2 + $0x58] sm:$0xff]
        %v1715 = vld [vmem:[#allocation2 + $0x60] sm:$0xff]
        %v1716 = vld [vmem:[#allocation2 + $0x68] sm:$0xff]
        %v1717 = vld [vmem:[#allocation2 + $0x70] sm:$0xff]
        %v1718 = vld [vmem:[#allocation2 + $0x78] sm:$0xff]
        %v1719 = vld [vmem:[#allocation2 + $0x80] sm:$0xff]
        %v1720 = vld [vmem:[#allocation2 + $0x88] sm:$0xff]
        %v1721 = vpack.c.bf16 %v1705, %v1703
        %v1722 = vpack.c.bf16 %v1706, %v1704
        %v1723 = vpack.c.bf16 %v1709, %v1707
        %v1724 = vpack.c.bf16 %v1710, %v1708
        %v1725 = vpack.c.bf16 %v1713, %v1711
        %v1726 = vpack.c.bf16 %v1714, %v1712
        %v1727 = vpack.c.bf16 %v1717, %v1715
        %v1728 = vpack.c.bf16 %v1718, %v1716
        %v1729 = vpack.c.bf16 %v1719, %v1719
        %v1730 = vpack.c.bf16 %v1720, %v1720
        %v1731 = vld [vmem:[#allocation2] sm:$0xfe]
        %v1732 = vld [vmem:[#allocation2 + $0x8] sm:$0xfe]
        %v1733 = vld [vmem:[#allocation2 + $0x90] sm:$0x1]
        %v1734 = vld [vmem:[#allocation2 + $0x98] sm:$0x1]
        %v1735 = vpack.c.bf16 %v1705, %v1731
        %v1736 = vpack.c.bf16 %v1706, %v1732
        %v1737 = vpack.c.bf16 %v1733, %v1719
        %v1738 = vpack.c.bf16 %v1734, %v1720
        %v1739 = vld [vmem:[#allocation2] sm:$0xfc]
        %v1740 = vld [vmem:[#allocation2 + $0x8] sm:$0xfc]
        %v1741 = vld [vmem:[#allocation2 + $0x90] sm:$0x3]
        %v1742 = vld [vmem:[#allocation2 + $0x98] sm:$0x3]
        %v1743 = vpack.c.bf16 %v1705, %v1739
        %v1744 = vpack.c.bf16 %v1706, %v1740
        %v1745 = vpack.c.bf16 %v1741, %v1719
        %v1746 = vpack.c.bf16 %v1742, %v1720
        %v1747 = vld [vmem:[#allocation8] sm:$0xff]
        %v1748 = vld [vmem:[#allocation8 + $0x8] sm:$0xff]
        %v1749 = vld [vmem:[#allocation8 + $0x10] sm:$0xff]
        %v1750 = vld [vmem:[#allocation8 + $0x18] sm:$0xff]
        %v1751 = vld [vmem:[#allocation8 + $0x20] sm:$0xff]
        %v1752 = vld [vmem:[#allocation8 + $0x28] sm:$0xff]
        %v1753 = vld [vmem:[#allocation8 + $0x30] sm:$0xff]
        %v1754 = vld [vmem:[#allocation8 + $0x38] sm:$0xff]
        %v1755 = vld [vmem:[#allocation8 + $0x40] sm:$0xff]
        %v1756 = vld [vmem:[#allocation8 + $0x48] sm:$0xff]
        %v1757 = vld [vmem:[#allocation8 + $0x50] sm:$0xff]
        %v1758 = vld [vmem:[#allocation8 + $0x58] sm:$0xff]
        %v1759 = vld [vmem:[#allocation8 + $0x60] sm:$0xff]
        %v1760 = vld [vmem:[#allocation8 + $0x68] sm:$0xff]
        %v1761 = vld [vmem:[#allocation8 + $0x70] sm:$0xff]
        %v1762 = vld [vmem:[#allocation8 + $0x78] sm:$0xff]
        %v1763 = vld [vmem:[#allocation8 + $0x80] sm:$0xff]
        %v1764 = vld [vmem:[#allocation8 + $0x88] sm:$0xff]
        %v1765 = vld [vmem:[#allocation8 + $0x90] sm:$0xff]
        %v1766 = vld [vmem:[#allocation8 + $0x98] sm:$0xff]
        %v1767 = vld [vmem:[#allocation8 + $0xa0] sm:$0xff]
        %v1768 = vld [vmem:[#allocation8 + $0xa8] sm:$0xff]
        %v1769 = vld [vmem:[#allocation8 + $0xb0] sm:$0xff]
        %v1770 = vld [vmem:[#allocation8 + $0xb8] sm:$0xff]
        %v1771 = vld [vmem:[#allocation8 + $0xc0] sm:$0xff]
        %v1772 = vld [vmem:[#allocation8 + $0xc8] sm:$0xff]
        %v1773 = vld [vmem:[#allocation8 + $0xd0] sm:$0xff]
        %v1774 = vld [vmem:[#allocation8 + $0xd8] sm:$0xff]
        %v1775 = vld [vmem:[#allocation8 + $0xe0] sm:$0xff]
        %v1776 = vld [vmem:[#allocation8 + $0xe8] sm:$0xff]
        %v1777 = vld [vmem:[#allocation8 + $0xf0] sm:$0xff]
        %v1778 = vld [vmem:[#allocation8 + $0xf8] sm:$0xff]
        %s1779 = scalar_lea.vmem [#allocation8], 256
        %v1780 = vld [vmem:[%s1779] sm:$0xff]
        %v1781 = vld [vmem:[%s1779 + $0x8] sm:$0xff]
        %v1782 = vld [vmem:[%s1779 + $0x10] sm:$0xff]
        %v1783 = vld [vmem:[%s1779 + $0x18] sm:$0xff]
        %v1784 = vld [vmem:[%s1779 + $0x20] sm:$0xff]
        %v1785 = vld [vmem:[%s1779 + $0x28] sm:$0xff]
        %v1786 = vld [vmem:[%s1779 + $0x30] sm:$0xff]
        %v1787 = vld [vmem:[%s1779 + $0x38] sm:$0xff]
        %v1788 = vld [vmem:[%s1779 + $0x40] sm:$0xff]
        %v1789 = vld [vmem:[%s1779 + $0x48] sm:$0xff]
        %v1790 = vld [vmem:[%s1779 + $0x50] sm:$0xff]
        %v1791 = vld [vmem:[%s1779 + $0x58] sm:$0xff]
        %v1792 = vld [vmem:[%s1779 + $0x60] sm:$0xff]
        %v1793 = vld [vmem:[%s1779 + $0x68] sm:$0xff]
        %v1794 = vld [vmem:[%s1779 + $0x70] sm:$0xff]
        %v1795 = vld [vmem:[%s1779 + $0x78] sm:$0xff]
        %v1796 = vld [vmem:[%s1779 + $0x80] sm:$0xff]
        %v1797 = vld [vmem:[%s1779 + $0x88] sm:$0xff]
        %v1798 = vld [vmem:[%s1779 + $0x90] sm:$0xff]
        %v1799 = vld [vmem:[%s1779 + $0x98] sm:$0xff]
        %v1800 = vld [vmem:[%s1779 + $0xa0] sm:$0xff]
        %v1801 = vld [vmem:[%s1779 + $0xa8] sm:$0xff]
        %v1802 = vld [vmem:[%s1779 + $0xb0] sm:$0xff]
        %v1803 = vld [vmem:[%s1779 + $0xb8] sm:$0xff]
        %v1804 = vld [vmem:[%s1779 + $0xc0] sm:$0xff]
        %v1805 = vld [vmem:[%s1779 + $0xc8] sm:$0xff]
        %v1806 = vld [vmem:[%s1779 + $0xd0] sm:$0xff]
        %v1807 = vld [vmem:[%s1779 + $0xd8] sm:$0xff]
        %v1808 = vld [vmem:[%s1779 + $0xe0] sm:$0xff]
        %v1809 = vld [vmem:[%s1779 + $0xe8] sm:$0xff]
        %v1810 = vld [vmem:[%s1779 + $0xf0] sm:$0xff]
        %v1811 = vld [vmem:[%s1779 + $0xf8] sm:$0xff]
        %v1813 = vshrl.u32 %v1735, 16
        %v1815 = vshll.u32 %v1735, 16
        %v1817 = vrot.slane %v1815, 1
        %v1818 = vor.u32 %v1813, %v1817
        %v1820 = vshll.u32 %v1723, 16
        %v1822 = vrot.slane %v1820, 1
        %v1823 = vsel %vm652, %v1818, %v1822
        %v1825 = vshrl.u32 %v1736, 16
        %v1827 = vshll.u32 %v1736, 16
        %v1829 = vrot.slane %v1827, 1
        %v1830 = vor.u32 %v1825, %v1829
        %v1832 = vshll.u32 %v1724, 16
        %v1834 = vrot.slane %v1832, 1
        %v1835 = vsel %vm652, %v1830, %v1834
        %v1836 = vshrl.u32 %v1723, 16
        %v1838 = vor.u32 %v1836, %v1822
        %v1840 = vshll.u32 %v1725, 16
        %v1842 = vrot.slane %v1840, 1
        %v1843 = vsel %vm652, %v1838, %v1842
        %v1844 = vshrl.u32 %v1724, 16
        %v1846 = vor.u32 %v1844, %v1834
        %v1848 = vshll.u32 %v1726, 16
        %v1850 = vrot.slane %v1848, 1
        %v1851 = vsel %vm652, %v1846, %v1850
        %v1852 = vshrl.u32 %v1725, 16
        %v1854 = vor.u32 %v1852, %v1842
        %v1856 = vshll.u32 %v1727, 16
        %v1858 = vrot.slane %v1856, 1
        %v1859 = vsel %vm652, %v1854, %v1858
        %v1860 = vshrl.u32 %v1726, 16
        %v1862 = vor.u32 %v1860, %v1850
        %v1864 = vshll.u32 %v1728, 16
        %v1866 = vrot.slane %v1864, 1
        %v1867 = vsel %vm652, %v1862, %v1866
        %v1868 = vshrl.u32 %v1727, 16
        %v1870 = vor.u32 %v1868, %v1858
        %v1872 = vshll.u32 %v1737, 16
        %v1874 = vrot.slane %v1872, 1
        %v1875 = vsel %vm652, %v1870, %v1874
        %v1876 = vshrl.u32 %v1728, 16
        %v1878 = vor.u32 %v1876, %v1866
        %v1880 = vshll.u32 %v1738, 16
        %v1882 = vrot.slane %v1880, 1
        %v1883 = vsel %vm652, %v1878, %v1882
        %v1884 = vshrl.u32 %v1737, 16
        %v1886 = vor.u32 %v1884, %v1874
        %v1887 = vshrl.u32 %v1738, 16
        %v1889 = vor.u32 %v1887, %v1882
        %v1932 = vunpack.c.l.b16 %v1780
        %v1933 = vunpack.c.h.b16 %v1780
        %v1934 = vunpack.c.l.b16 %v1781
        %v1935 = vunpack.c.h.b16 %v1781
        %v1936 = vunpack.c.l.b16 %v1782
        %v1937 = vunpack.c.h.b16 %v1782
        %v1938 = vunpack.c.l.b16 %v1783
        %v1939 = vunpack.c.h.b16 %v1783
        %v1940 = vunpack.c.l.b16 %v1784
        %v1941 = vunpack.c.h.b16 %v1784
        %v1942 = vunpack.c.l.b16 %v1785
        %v1943 = vunpack.c.h.b16 %v1785
        %v1944 = vunpack.c.l.b16 %v1786
        %v1945 = vunpack.c.h.b16 %v1786
        %v1946 = vunpack.c.l.b16 %v1787
        %v1947 = vunpack.c.h.b16 %v1787
        %v1948 = vunpack.c.l.b16 %v1788
        %v1949 = vunpack.c.h.b16 %v1788
        %v1950 = vunpack.c.l.b16 %v1789
        %v1951 = vunpack.c.h.b16 %v1789
        %v1952 = vunpack.c.l.b16 %v1790
        %v1953 = vunpack.c.h.b16 %v1790
        %v1954 = vunpack.c.l.b16 %v1791
        %v1955 = vunpack.c.h.b16 %v1791
        %v1956 = vunpack.c.l.b16 %v1792
        %v1957 = vunpack.c.h.b16 %v1792
        %v1958 = vunpack.c.l.b16 %v1793
        %v1959 = vunpack.c.h.b16 %v1793
        %v1960 = vunpack.c.l.b16 %v1794
        %v1961 = vunpack.c.h.b16 %v1794
        %v1962 = vunpack.c.l.b16 %v1795
        %v1963 = vunpack.c.h.b16 %v1795
        %v1964 = vunpack.c.l.b16 %v1796
        %v1965 = vunpack.c.h.b16 %v1796
        %v1966 = vunpack.c.l.b16 %v1797
        %v1967 = vunpack.c.h.b16 %v1797
        %v1968 = vunpack.c.l.b16 %v1798
        %v1969 = vunpack.c.h.b16 %v1798
        %v1970 = vunpack.c.l.b16 %v1799
        %v1971 = vunpack.c.h.b16 %v1799
        %v1972 = vunpack.c.l.b16 %v1800
        %v1973 = vunpack.c.h.b16 %v1800
        %v1974 = vunpack.c.l.b16 %v1801
        %v1975 = vunpack.c.h.b16 %v1801
        %v1976 = vunpack.c.l.b16 %v1802
        %v1977 = vunpack.c.h.b16 %v1802
        %v1978 = vunpack.c.l.b16 %v1803
        %v1979 = vunpack.c.h.b16 %v1803
        %v1980 = vunpack.c.l.b16 %v1804
        %v1981 = vunpack.c.h.b16 %v1804
        %v1982 = vunpack.c.l.b16 %v1805
        %v1983 = vunpack.c.h.b16 %v1805
        %v1984 = vunpack.c.l.b16 %v1806
        %v1985 = vunpack.c.h.b16 %v1806
        %v1986 = vunpack.c.l.b16 %v1807
        %v1987 = vunpack.c.h.b16 %v1807
        %v1988 = vunpack.c.l.b16 %v1808
        %v1989 = vunpack.c.h.b16 %v1808
        %v1990 = vunpack.c.l.b16 %v1809
        %v1991 = vunpack.c.h.b16 %v1809
        %v1992 = vunpack.c.l.b16 %v1810
        %v1993 = vunpack.c.h.b16 %v1810
        %v1994 = vunpack.c.l.b16 %v1811
        %v1995 = vunpack.c.h.b16 %v1811
        %v1996 = vpack.c.b16 %v1934, %v1932
        %v1997 = vpack.c.b16 %v1935, %v1933
        %v1998 = vpack.c.b16 %v1938, %v1936
        %v1999 = vpack.c.b16 %v1939, %v1937
        %v2000 = vpack.c.b16 %v1942, %v1940
        %v2001 = vpack.c.b16 %v1943, %v1941
        %v2002 = vpack.c.b16 %v1946, %v1944
        %v2003 = vpack.c.b16 %v1947, %v1945
        %v2004 = vpack.c.b16 %v1950, %v1948
        %v2005 = vpack.c.b16 %v1951, %v1949
        %v2006 = vpack.c.b16 %v1954, %v1952
        %v2007 = vpack.c.b16 %v1955, %v1953
        %v2008 = vpack.c.b16 %v1958, %v1956
        %v2009 = vpack.c.b16 %v1959, %v1957
        %v2010 = vpack.c.b16 %v1962, %v1960
        %v2011 = vpack.c.b16 %v1963, %v1961
        %v2012 = vpack.c.b16 %v1966, %v1964
        %v2013 = vpack.c.b16 %v1967, %v1965
        %v2014 = vpack.c.b16 %v1970, %v1968
        %v2015 = vpack.c.b16 %v1971, %v1969
        %v2016 = vpack.c.b16 %v1974, %v1972
        %v2017 = vpack.c.b16 %v1975, %v1973
        %v2018 = vpack.c.b16 %v1978, %v1976
        %v2019 = vpack.c.b16 %v1979, %v1977
        %v2020 = vpack.c.b16 %v1982, %v1980
        %v2021 = vpack.c.b16 %v1983, %v1981
        %v2022 = vpack.c.b16 %v1986, %v1984
        %v2023 = vpack.c.b16 %v1987, %v1985
        %v2024 = vpack.c.b16 %v1990, %v1988
        %v2025 = vpack.c.b16 %v1991, %v1989
        %v2026 = vpack.c.b16 %v1994, %v1992
        %v2027 = vpack.c.b16 %v1995, %v1993
        %2060 = vmatprep.subr.bf16.mxu0 %v2011
        %2061 = vmatpush1.bf16.msra.mxu0 %v2010
        %2062 = vmatprep.subr.bf16.mxu0 %v2009
        %2063 = vmatpush1.bf16.msra.mxu0 %v2008
        %2064 = vmatprep.subr.bf16.mxu0 %v2007
        %2065 = vmatpush1.bf16.msra.mxu0 %v2006
        %2066 = vmatprep.subr.bf16.mxu0 %v2005
        %2067 = vmatpush1.bf16.msra.mxu0 %v2004
        %2068 = vmatprep.subr.bf16.mxu0 %v2003
        %2069 = vmatpush1.bf16.msra.mxu0 %v2002
        %2070 = vmatprep.subr.bf16.mxu0 %v2001
        %2071 = vmatpush1.bf16.msra.mxu0 %v2000
        %2072 = vmatprep.subr.bf16.mxu0 %v1999
        %2073 = vmatpush1.bf16.msra.mxu0 %v1998
        %2074 = vmatprep.subr.bf16.mxu0 %v1997
        %2075 = vmatpush1.bf16.msra.mxu0 %v1996
        %2076 = vmatprep.subr.bf16.mxu0 %v2027
        %2077 = vmatpush2.bf16.msra.mxu0 %v2026
        %2078 = vmatprep.subr.bf16.mxu0 %v2025
        %2079 = vmatpush2.bf16.msra.mxu0 %v2024
        %2080 = vmatprep.subr.bf16.mxu0 %v2023
        %2081 = vmatpush2.bf16.msra.mxu0 %v2022
        %2082 = vmatprep.subr.bf16.mxu0 %v2021
        %2083 = vmatpush2.bf16.msra.mxu0 %v2020
        %2084 = vmatprep.subr.bf16.mxu0 %v2019
        %2085 = vmatpush2.bf16.msra.mxu0 %v2018
        %2086 = vmatprep.subr.bf16.mxu0 %v2017
        %2087 = vmatpush2.bf16.msra.mxu0 %v2016
        %2088 = vmatprep.subr.bf16.mxu0 %v2015
        %2089 = vmatpush2.bf16.msra.mxu0 %v2014
        %2090 = vmatprep.subr.bf16.mxu0 %v2013
        %2091 = vmatpush2.bf16.msra.mxu0 %v2012
        %2092 = vmatprep.mubr.bf16.mxu0 %v1835
        %2093 = vmatmul.mubr.bf16.gmra.mxu0 %v1823
        %v2094 = vpop.f32.mrf.mxu0
        %v2095 = vadd.f32 0.0, %v2094
        %v2096 = vpop.f32.mrf.mxu0
        %v2097 = vadd.f32 0.0, %v2096
        %v2098 = vpop.f32.mrf.mxu0
        %v2099 = vadd.f32 0.0, %v2098
        %v2100 = vpop.f32.mrf.mxu0
        %v2101 = vadd.f32 0.0, %v2100
        %2102 = vmatprep.mubr.bf16.mxu0 %v1851
        %2103 = vmatmul.mubr.bf16.gmra.mxu0 %v1843
        %v2104 = vpop.f32.mrf.mxu0
        %v2105 = vadd.f32 0.0, %v2104
        %v2106 = vpop.f32.mrf.mxu0
        %v2107 = vadd.f32 0.0, %v2106
        %v2108 = vpop.f32.mrf.mxu0
        %v2109 = vadd.f32 0.0, %v2108
        %v2110 = vpop.f32.mrf.mxu0
        %v2111 = vadd.f32 0.0, %v2110
        %2112 = vmatprep.mubr.bf16.mxu0 %v1867
        %2113 = vmatmul.mubr.bf16.gmra.mxu0 %v1859
        %v2114 = vpop.f32.mrf.mxu0
        %v2115 = vadd.f32 0.0, %v2114
        %v2116 = vpop.f32.mrf.mxu0
        %v2117 = vadd.f32 0.0, %v2116
        %v2118 = vpop.f32.mrf.mxu0
        %v2119 = vadd.f32 0.0, %v2118
        %v2120 = vpop.f32.mrf.mxu0
        %v2121 = vadd.f32 0.0, %v2120
        %2122 = vmatprep.mubr.bf16.mxu0 %v1883
        %2123 = vmatmul.mubr.bf16.gmra.mxu0 %v1875
        %v2124 = vpop.f32.mrf.mxu0
        %v2125 = vadd.f32 0.0, %v2124
        %v2126 = vpop.f32.mrf.mxu0
        %v2127 = vadd.f32 0.0, %v2126
        %v2128 = vpop.f32.mrf.mxu0
        %v2129 = vadd.f32 0.0, %v2128
        %v2130 = vpop.f32.mrf.mxu0
        %v2131 = vadd.f32 0.0, %v2130
        %2132 = vmatprep.mubr.bf16.mxu0 %v1889
        %2133 = vmatmul.mubr.bf16.gmra.mxu0 %v1886
        %v2134 = vpop.f32.mrf.mxu0
        %v2135 = vadd.f32 0.0, %v2134
        %v2136 = vpop.f32.mrf.mxu0
        %v2137 = vadd.f32 0.0, %v2136
        %v2138 = vpop.f32.mrf.mxu0
        %v2139 = vpop.f32.mrf.mxu0
        %2140 = vdwg.mxu0
        %v2173 = vunpack.c.l.b16 %v1747
        %v2174 = vunpack.c.h.b16 %v1747
        %v2175 = vunpack.c.l.b16 %v1748
        %v2176 = vunpack.c.h.b16 %v1748
        %v2177 = vunpack.c.l.b16 %v1749
        %v2178 = vunpack.c.h.b16 %v1749
        %v2179 = vunpack.c.l.b16 %v1750
        %v2180 = vunpack.c.h.b16 %v1750
        %v2181 = vunpack.c.l.b16 %v1751
        %v2182 = vunpack.c.h.b16 %v1751
        %v2183 = vunpack.c.l.b16 %v1752
        %v2184 = vunpack.c.h.b16 %v1752
        %v2185 = vunpack.c.l.b16 %v1753
        %v2186 = vunpack.c.h.b16 %v1753
        %v2187 = vunpack.c.l.b16 %v1754
        %v2188 = vunpack.c.h.b16 %v1754
        %v2189 = vunpack.c.l.b16 %v1755
        %v2190 = vunpack.c.h.b16 %v1755
        %v2191 = vunpack.c.l.b16 %v1756
        %v2192 = vunpack.c.h.b16 %v1756
        %v2193 = vunpack.c.l.b16 %v1757
        %v2194 = vunpack.c.h.b16 %v1757
        %v2195 = vunpack.c.l.b16 %v1758
        %v2196 = vunpack.c.h.b16 %v1758
        %v2197 = vunpack.c.l.b16 %v1759
        %v2198 = vunpack.c.h.b16 %v1759
        %v2199 = vunpack.c.l.b16 %v1760
        %v2200 = vunpack.c.h.b16 %v1760
        %v2201 = vunpack.c.l.b16 %v1761
        %v2202 = vunpack.c.h.b16 %v1761
        %v2203 = vunpack.c.l.b16 %v1762
        %v2204 = vunpack.c.h.b16 %v1762
        %v2205 = vunpack.c.l.b16 %v1763
        %v2206 = vunpack.c.h.b16 %v1763
        %v2207 = vunpack.c.l.b16 %v1764
        %v2208 = vunpack.c.h.b16 %v1764
        %v2209 = vunpack.c.l.b16 %v1765
        %v2210 = vunpack.c.h.b16 %v1765
        %v2211 = vunpack.c.l.b16 %v1766
        %v2212 = vunpack.c.h.b16 %v1766
        %v2213 = vunpack.c.l.b16 %v1767
        %v2214 = vunpack.c.h.b16 %v1767
        %v2215 = vunpack.c.l.b16 %v1768
        %v2216 = vunpack.c.h.b16 %v1768
        %v2217 = vunpack.c.l.b16 %v1769
        %v2218 = vunpack.c.h.b16 %v1769
        %v2219 = vunpack.c.l.b16 %v1770
        %v2220 = vunpack.c.h.b16 %v1770
        %v2221 = vunpack.c.l.b16 %v1771
        %v2222 = vunpack.c.h.b16 %v1771
        %v2223 = vunpack.c.l.b16 %v1772
        %v2224 = vunpack.c.h.b16 %v1772
        %v2225 = vunpack.c.l.b16 %v1773
        %v2226 = vunpack.c.h.b16 %v1773
        %v2227 = vunpack.c.l.b16 %v1774
        %v2228 = vunpack.c.h.b16 %v1774
        %v2229 = vunpack.c.l.b16 %v1775
        %v2230 = vunpack.c.h.b16 %v1775
        %v2231 = vunpack.c.l.b16 %v1776
        %v2232 = vunpack.c.h.b16 %v1776
        %v2233 = vunpack.c.l.b16 %v1777
        %v2234 = vunpack.c.h.b16 %v1777
        %v2235 = vunpack.c.l.b16 %v1778
        %v2236 = vunpack.c.h.b16 %v1778
        %v2237 = vpack.c.b16 %v2175, %v2173
        %v2238 = vpack.c.b16 %v2176, %v2174
        %v2239 = vpack.c.b16 %v2179, %v2177
        %v2240 = vpack.c.b16 %v2180, %v2178
        %v2241 = vpack.c.b16 %v2183, %v2181
        %v2242 = vpack.c.b16 %v2184, %v2182
        %v2243 = vpack.c.b16 %v2187, %v2185
        %v2244 = vpack.c.b16 %v2188, %v2186
        %v2245 = vpack.c.b16 %v2191, %v2189
        %v2246 = vpack.c.b16 %v2192, %v2190
        %v2247 = vpack.c.b16 %v2195, %v2193
        %v2248 = vpack.c.b16 %v2196, %v2194
        %v2249 = vpack.c.b16 %v2199, %v2197
        %v2250 = vpack.c.b16 %v2200, %v2198
        %v2251 = vpack.c.b16 %v2203, %v2201
        %v2252 = vpack.c.b16 %v2204, %v2202
        %v2253 = vpack.c.b16 %v2207, %v2205
        %v2254 = vpack.c.b16 %v2208, %v2206
        %v2255 = vpack.c.b16 %v2211, %v2209
        %v2256 = vpack.c.b16 %v2212, %v2210
        %v2257 = vpack.c.b16 %v2215, %v2213
        %v2258 = vpack.c.b16 %v2216, %v2214
        %v2259 = vpack.c.b16 %v2219, %v2217
        %v2260 = vpack.c.b16 %v2220, %v2218
        %v2261 = vpack.c.b16 %v2223, %v2221
        %v2262 = vpack.c.b16 %v2224, %v2222
        %v2263 = vpack.c.b16 %v2227, %v2225
        %v2264 = vpack.c.b16 %v2228, %v2226
        %v2265 = vpack.c.b16 %v2231, %v2229
        %v2266 = vpack.c.b16 %v2232, %v2230
        %v2267 = vpack.c.b16 %v2235, %v2233
        %v2268 = vpack.c.b16 %v2236, %v2234
        %2301 = vmatprep.subr.bf16.mxu0 %v2252
        %2302 = vmatpush1.bf16.msra.mxu0 %v2251
        %2303 = vmatprep.subr.bf16.mxu0 %v2250
        %2304 = vmatpush1.bf16.msra.mxu0 %v2249
        %2305 = vmatprep.subr.bf16.mxu0 %v2248
        %2306 = vmatpush1.bf16.msra.mxu0 %v2247
        %2307 = vmatprep.subr.bf16.mxu0 %v2246
        %2308 = vmatpush1.bf16.msra.mxu0 %v2245
        %2309 = vmatprep.subr.bf16.mxu0 %v2244
        %2310 = vmatpush1.bf16.msra.mxu0 %v2243
        %2311 = vmatprep.subr.bf16.mxu0 %v2242
        %2312 = vmatpush1.bf16.msra.mxu0 %v2241
        %2313 = vmatprep.subr.bf16.mxu0 %v2240
        %2314 = vmatpush1.bf16.msra.mxu0 %v2239
        %2315 = vmatprep.subr.bf16.mxu0 %v2238
        %2316 = vmatpush1.bf16.msra.mxu0 %v2237
        %2317 = vmatprep.subr.bf16.mxu0 %v2268
        %2318 = vmatpush2.bf16.msra.mxu0 %v2267
        %2319 = vmatprep.subr.bf16.mxu0 %v2266
        %2320 = vmatpush2.bf16.msra.mxu0 %v2265
        %2321 = vmatprep.subr.bf16.mxu0 %v2264
        %2322 = vmatpush2.bf16.msra.mxu0 %v2263
        %2323 = vmatprep.subr.bf16.mxu0 %v2262
        %2324 = vmatpush2.bf16.msra.mxu0 %v2261
        %2325 = vmatprep.subr.bf16.mxu0 %v2260
        %2326 = vmatpush2.bf16.msra.mxu0 %v2259
        %2327 = vmatprep.subr.bf16.mxu0 %v2258
        %2328 = vmatpush2.bf16.msra.mxu0 %v2257
        %2329 = vmatprep.subr.bf16.mxu0 %v2256
        %2330 = vmatpush2.bf16.msra.mxu0 %v2255
        %2331 = vmatprep.subr.bf16.mxu0 %v2254
        %2332 = vmatpush2.bf16.msra.mxu0 %v2253
        %2333 = vmatprep.mubr.bf16.mxu0 %v1722
        %2334 = vmatmul.mubr.bf16.gmra.mxu0 %v1721
        %v2335 = vpop.f32.mrf.mxu0
        %v2336 = vadd.f32 %v2095, %v2335
        %v2337 = vpop.f32.mrf.mxu0
        %v2338 = vadd.f32 %v2097, %v2337
        %v2339 = vpop.f32.mrf.mxu0
        %v2340 = vadd.f32 %v2099, %v2339
        %v2341 = vpop.f32.mrf.mxu0
        %v2342 = vadd.f32 %v2101, %v2341
        %2343 = vmatprep.mubr.bf16.mxu0 %v1724
        %2344 = vmatmul.mubr.bf16.gmra.mxu0 %v1723
        %v2345 = vpop.f32.mrf.mxu0
        %v2346 = vadd.f32 %v2105, %v2345
        %v2347 = vpop.f32.mrf.mxu0
        %v2348 = vadd.f32 %v2107, %v2347
        %v2349 = vpop.f32.mrf.mxu0
        %v2350 = vadd.f32 %v2109, %v2349
        %v2351 = vpop.f32.mrf.mxu0
        %v2352 = vadd.f32 %v2111, %v2351
        %2353 = vmatprep.mubr.bf16.mxu0 %v1726
        %2354 = vmatmul.mubr.bf16.gmra.mxu0 %v1725
        %v2355 = vpop.f32.mrf.mxu0
        %v2356 = vadd.f32 %v2115, %v2355
        %v2357 = vpop.f32.mrf.mxu0
        %v2358 = vadd.f32 %v2117, %v2357
        %v2359 = vpop.f32.mrf.mxu0
        %v2360 = vadd.f32 %v2119, %v2359
        %v2361 = vpop.f32.mrf.mxu0
        %v2362 = vadd.f32 %v2121, %v2361
        %2363 = vmatprep.mubr.bf16.mxu0 %v1728
        %2364 = vmatmul.mubr.bf16.gmra.mxu0 %v1727
        %v2365 = vpop.f32.mrf.mxu0
        %v2366 = vadd.f32 %v2125, %v2365
        %v2367 = vpop.f32.mrf.mxu0
        %v2368 = vadd.f32 %v2127, %v2367
        %v2369 = vpop.f32.mrf.mxu0
        %v2370 = vadd.f32 %v2129, %v2369
        %v2371 = vpop.f32.mrf.mxu0
        %v2372 = vadd.f32 %v2131, %v2371
        %2373 = vmatprep.mubr.bf16.mxu0 %v1730
        %2374 = vmatmul.mubr.bf16.gmra.mxu0 %v1729
        %v2375 = vpop.f32.mrf.mxu0
        %v2376 = vadd.f32 %v2135, %v2375
        %v2377 = vpop.f32.mrf.mxu0
        %v2378 = vadd.f32 %v2137, %v2377
        %v2379 = vpop.f32.mrf.mxu0
        %v2380 = vpop.f32.mrf.mxu0
        %2381 = vdwg.mxu0
        %s2382 = scalar_lea.vmem [#allocation8], 512
        %v2383 = vld [vmem:[%s2382] sm:$0xff]
        %v2384 = vld [vmem:[%s2382 + $0x8] sm:$0xff]
        %v2385 = vld [vmem:[%s2382 + $0x10] sm:$0xff]
        %v2386 = vld [vmem:[%s2382 + $0x18] sm:$0xff]
        %v2387 = vld [vmem:[%s2382 + $0x20] sm:$0xff]
        %v2388 = vld [vmem:[%s2382 + $0x28] sm:$0xff]
        %v2389 = vld [vmem:[%s2382 + $0x30] sm:$0xff]
        %v2390 = vld [vmem:[%s2382 + $0x38] sm:$0xff]
        %v2391 = vld [vmem:[%s2382 + $0x40] sm:$0xff]
        %v2392 = vld [vmem:[%s2382 + $0x48] sm:$0xff]
        %v2393 = vld [vmem:[%s2382 + $0x50] sm:$0xff]
        %v2394 = vld [vmem:[%s2382 + $0x58] sm:$0xff]
        %v2395 = vld [vmem:[%s2382 + $0x60] sm:$0xff]
        %v2396 = vld [vmem:[%s2382 + $0x68] sm:$0xff]
        %v2397 = vld [vmem:[%s2382 + $0x70] sm:$0xff]
        %v2398 = vld [vmem:[%s2382 + $0x78] sm:$0xff]
        %v2399 = vld [vmem:[%s2382 + $0x80] sm:$0xff]
        %v2400 = vld [vmem:[%s2382 + $0x88] sm:$0xff]
        %v2401 = vld [vmem:[%s2382 + $0x90] sm:$0xff]
        %v2402 = vld [vmem:[%s2382 + $0x98] sm:$0xff]
        %v2403 = vld [vmem:[%s2382 + $0xa0] sm:$0xff]
        %v2404 = vld [vmem:[%s2382 + $0xa8] sm:$0xff]
        %v2405 = vld [vmem:[%s2382 + $0xb0] sm:$0xff]
        %v2406 = vld [vmem:[%s2382 + $0xb8] sm:$0xff]
        %v2407 = vld [vmem:[%s2382 + $0xc0] sm:$0xff]
        %v2408 = vld [vmem:[%s2382 + $0xc8] sm:$0xff]
        %v2409 = vld [vmem:[%s2382 + $0xd0] sm:$0xff]
        %v2410 = vld [vmem:[%s2382 + $0xd8] sm:$0xff]
        %v2411 = vld [vmem:[%s2382 + $0xe0] sm:$0xff]
        %v2412 = vld [vmem:[%s2382 + $0xe8] sm:$0xff]
        %v2413 = vld [vmem:[%s2382 + $0xf0] sm:$0xff]
        %v2414 = vld [vmem:[%s2382 + $0xf8] sm:$0xff]
        %v2425 = vrot.slane %v1743, 1
        %v2426 = vrot.slane %v1723, 1
        %v2427 = vsel %vm1266, %v2425, %v2426
        %v2428 = vrot.slane %v1744, 1
        %v2429 = vrot.slane %v1724, 1
        %v2430 = vsel %vm1266, %v2428, %v2429
        %v2431 = vrot.slane %v1725, 1
        %v2432 = vsel %vm1266, %v2426, %v2431
        %v2433 = vrot.slane %v1726, 1
        %v2434 = vsel %vm1266, %v2429, %v2433
        %v2435 = vrot.slane %v1727, 1
        %v2436 = vsel %vm1266, %v2431, %v2435
        %v2437 = vrot.slane %v1728, 1
        %v2438 = vsel %vm1266, %v2433, %v2437
        %v2439 = vrot.slane %v1745, 1
        %v2440 = vsel %vm1266, %v2435, %v2439
        %v2441 = vrot.slane %v1746, 1
        %v2442 = vsel %vm1266, %v2437, %v2441
        %v2485 = vunpack.c.l.b16 %v2383
        %v2486 = vunpack.c.h.b16 %v2383
        %v2487 = vunpack.c.l.b16 %v2384
        %v2488 = vunpack.c.h.b16 %v2384
        %v2489 = vunpack.c.l.b16 %v2385
        %v2490 = vunpack.c.h.b16 %v2385
        %v2491 = vunpack.c.l.b16 %v2386
        %v2492 = vunpack.c.h.b16 %v2386
        %v2493 = vunpack.c.l.b16 %v2387
        %v2494 = vunpack.c.h.b16 %v2387
        %v2495 = vunpack.c.l.b16 %v2388
        %v2496 = vunpack.c.h.b16 %v2388
        %v2497 = vunpack.c.l.b16 %v2389
        %v2498 = vunpack.c.h.b16 %v2389
        %v2499 = vunpack.c.l.b16 %v2390
        %v2500 = vunpack.c.h.b16 %v2390
        %v2501 = vunpack.c.l.b16 %v2391
        %v2502 = vunpack.c.h.b16 %v2391
        %v2503 = vunpack.c.l.b16 %v2392
        %v2504 = vunpack.c.h.b16 %v2392
        %v2505 = vunpack.c.l.b16 %v2393
        %v2506 = vunpack.c.h.b16 %v2393
        %v2507 = vunpack.c.l.b16 %v2394
        %v2508 = vunpack.c.h.b16 %v2394
        %v2509 = vunpack.c.l.b16 %v2395
        %v2510 = vunpack.c.h.b16 %v2395
        %v2511 = vunpack.c.l.b16 %v2396
        %v2512 = vunpack.c.h.b16 %v2396
        %v2513 = vunpack.c.l.b16 %v2397
        %v2514 = vunpack.c.h.b16 %v2397
        %v2515 = vunpack.c.l.b16 %v2398
        %v2516 = vunpack.c.h.b16 %v2398
        %v2517 = vunpack.c.l.b16 %v2399
        %v2518 = vunpack.c.h.b16 %v2399
        %v2519 = vunpack.c.l.b16 %v2400
        %v2520 = vunpack.c.h.b16 %v2400
        %v2521 = vunpack.c.l.b16 %v2401
        %v2522 = vunpack.c.h.b16 %v2401
        %v2523 = vunpack.c.l.b16 %v2402
        %v2524 = vunpack.c.h.b16 %v2402
        %v2525 = vunpack.c.l.b16 %v2403
        %v2526 = vunpack.c.h.b16 %v2403
        %v2527 = vunpack.c.l.b16 %v2404
        %v2528 = vunpack.c.h.b16 %v2404
        %v2529 = vunpack.c.l.b16 %v2405
        %v2530 = vunpack.c.h.b16 %v2405
        %v2531 = vunpack.c.l.b16 %v2406
        %v2532 = vunpack.c.h.b16 %v2406
        %v2533 = vunpack.c.l.b16 %v2407
        %v2534 = vunpack.c.h.b16 %v2407
        %v2535 = vunpack.c.l.b16 %v2408
        %v2536 = vunpack.c.h.b16 %v2408
        %v2537 = vunpack.c.l.b16 %v2409
        %v2538 = vunpack.c.h.b16 %v2409
        %v2539 = vunpack.c.l.b16 %v2410
        %v2540 = vunpack.c.h.b16 %v2410
        %v2541 = vunpack.c.l.b16 %v2411
        %v2542 = vunpack.c.h.b16 %v2411
        %v2543 = vunpack.c.l.b16 %v2412
        %v2544 = vunpack.c.h.b16 %v2412
        %v2545 = vunpack.c.l.b16 %v2413
        %v2546 = vunpack.c.h.b16 %v2413
        %v2547 = vunpack.c.l.b16 %v2414
        %v2548 = vunpack.c.h.b16 %v2414
        %v2549 = vpack.c.b16 %v2487, %v2485
        %v2550 = vpack.c.b16 %v2488, %v2486
        %v2551 = vpack.c.b16 %v2491, %v2489
        %v2552 = vpack.c.b16 %v2492, %v2490
        %v2553 = vpack.c.b16 %v2495, %v2493
        %v2554 = vpack.c.b16 %v2496, %v2494
        %v2555 = vpack.c.b16 %v2499, %v2497
        %v2556 = vpack.c.b16 %v2500, %v2498
        %v2557 = vpack.c.b16 %v2503, %v2501
        %v2558 = vpack.c.b16 %v2504, %v2502
        %v2559 = vpack.c.b16 %v2507, %v2505
        %v2560 = vpack.c.b16 %v2508, %v2506
        %v2561 = vpack.c.b16 %v2511, %v2509
        %v2562 = vpack.c.b16 %v2512, %v2510
        %v2563 = vpack.c.b16 %v2515, %v2513
        %v2564 = vpack.c.b16 %v2516, %v2514
        %v2565 = vpack.c.b16 %v2519, %v2517
        %v2566 = vpack.c.b16 %v2520, %v2518
        %v2567 = vpack.c.b16 %v2523, %v2521
        %v2568 = vpack.c.b16 %v2524, %v2522
        %v2569 = vpack.c.b16 %v2527, %v2525
        %v2570 = vpack.c.b16 %v2528, %v2526
        %v2571 = vpack.c.b16 %v2531, %v2529
        %v2572 = vpack.c.b16 %v2532, %v2530
        %v2573 = vpack.c.b16 %v2535, %v2533
        %v2574 = vpack.c.b16 %v2536, %v2534
        %v2575 = vpack.c.b16 %v2539, %v2537
        %v2576 = vpack.c.b16 %v2540, %v2538
        %v2577 = vpack.c.b16 %v2543, %v2541
        %v2578 = vpack.c.b16 %v2544, %v2542
        %v2579 = vpack.c.b16 %v2547, %v2545
        %v2580 = vpack.c.b16 %v2548, %v2546
        %2613 = vmatprep.subr.bf16.mxu0 %v2564
        %2614 = vmatpush1.bf16.msra.mxu0 %v2563
        %2615 = vmatprep.subr.bf16.mxu0 %v2562
        %2616 = vmatpush1.bf16.msra.mxu0 %v2561
        %2617 = vmatprep.subr.bf16.mxu0 %v2560
        %2618 = vmatpush1.bf16.msra.mxu0 %v2559
        %2619 = vmatprep.subr.bf16.mxu0 %v2558
        %2620 = vmatpush1.bf16.msra.mxu0 %v2557
        %2621 = vmatprep.subr.bf16.mxu0 %v2556
        %2622 = vmatpush1.bf16.msra.mxu0 %v2555
        %2623 = vmatprep.subr.bf16.mxu0 %v2554
        %2624 = vmatpush1.bf16.msra.mxu0 %v2553
        %2625 = vmatprep.subr.bf16.mxu0 %v2552
        %2626 = vmatpush1.bf16.msra.mxu0 %v2551
        %2627 = vmatprep.subr.bf16.mxu0 %v2550
        %2628 = vmatpush1.bf16.msra.mxu0 %v2549
        %2629 = vmatprep.subr.bf16.mxu0 %v2580
        %2630 = vmatpush2.bf16.msra.mxu0 %v2579
        %2631 = vmatprep.subr.bf16.mxu0 %v2578
        %2632 = vmatpush2.bf16.msra.mxu0 %v2577
        %2633 = vmatprep.subr.bf16.mxu0 %v2576
        %2634 = vmatpush2.bf16.msra.mxu0 %v2575
        %2635 = vmatprep.subr.bf16.mxu0 %v2574
        %2636 = vmatpush2.bf16.msra.mxu0 %v2573
        %2637 = vmatprep.subr.bf16.mxu0 %v2572
        %2638 = vmatpush2.bf16.msra.mxu0 %v2571
        %2639 = vmatprep.subr.bf16.mxu0 %v2570
        %2640 = vmatpush2.bf16.msra.mxu0 %v2569
        %2641 = vmatprep.subr.bf16.mxu0 %v2568
        %2642 = vmatpush2.bf16.msra.mxu0 %v2567
        %2643 = vmatprep.subr.bf16.mxu0 %v2566
        %2644 = vmatpush2.bf16.msra.mxu0 %v2565
        %2645 = vmatprep.mubr.bf16.mxu0 %v2430
        %2646 = vmatmul.mubr.bf16.gmra.mxu0 %v2427
        %v2647 = vpop.f32.mrf.mxu0
        %v2648 = vadd.f32 0.0, %v2647
        %v2649 = vpop.f32.mrf.mxu0
        %v2650 = vadd.f32 0.0, %v2649
        %v2651 = vpop.f32.mrf.mxu0
        %v2652 = vadd.f32 0.0, %v2651
        %v2653 = vpop.f32.mrf.mxu0
        %v2654 = vadd.f32 0.0, %v2653
        %2655 = vmatprep.mubr.bf16.mxu0 %v2434
        %2656 = vmatmul.mubr.bf16.gmra.mxu0 %v2432
        %v2657 = vpop.f32.mrf.mxu0
        %v2658 = vadd.f32 0.0, %v2657
        %v2659 = vpop.f32.mrf.mxu0
        %v2660 = vadd.f32 0.0, %v2659
        %v2661 = vpop.f32.mrf.mxu0
        %v2662 = vadd.f32 0.0, %v2661
        %v2663 = vpop.f32.mrf.mxu0
        %v2664 = vadd.f32 0.0, %v2663
        %2665 = vmatprep.mubr.bf16.mxu0 %v2438
        %2666 = vmatmul.mubr.bf16.gmra.mxu0 %v2436
        %v2667 = vpop.f32.mrf.mxu0
        %v2668 = vadd.f32 0.0, %v2667
        %v2669 = vpop.f32.mrf.mxu0
        %v2670 = vadd.f32 0.0, %v2669
        %v2671 = vpop.f32.mrf.mxu0
        %v2672 = vadd.f32 0.0, %v2671
        %v2673 = vpop.f32.mrf.mxu0
        %v2674 = vadd.f32 0.0, %v2673
        %2675 = vmatprep.mubr.bf16.mxu0 %v2442
        %2676 = vmatmul.mubr.bf16.gmra.mxu0 %v2440
        %v2677 = vpop.f32.mrf.mxu0
        %v2678 = vadd.f32 0.0, %v2677
        %v2679 = vpop.f32.mrf.mxu0
        %v2680 = vadd.f32 0.0, %v2679
        %v2681 = vpop.f32.mrf.mxu0
        %v2682 = vadd.f32 0.0, %v2681
        %v2683 = vpop.f32.mrf.mxu0
        %v2684 = vadd.f32 0.0, %v2683
        %2685 = vmatprep.mubr.bf16.mxu0 %v2441
        %2686 = vmatmul.mubr.bf16.gmra.mxu0 %v2439
        %v2687 = vpop.f32.mrf.mxu0
        %v2688 = vadd.f32 0.0, %v2687
        %v2689 = vpop.f32.mrf.mxu0
        %v2690 = vadd.f32 0.0, %v2689
        %v2691 = vpop.f32.mrf.mxu0
        %v2692 = vpop.f32.mrf.mxu0
        %2693 = vdwg.mxu0
        %v2694 = vadd.f32 %v2336, %v2648
        %v2695 = vadd.f32 %v2338, %v2650
        %v2696 = vadd.f32 %v2340, %v2652
        %v2697 = vadd.f32 %v2342, %v2654
        %v2698 = vadd.f32 %v2346, %v2658
        %v2699 = vadd.f32 %v2348, %v2660
        %v2700 = vadd.f32 %v2350, %v2662
        %v2701 = vadd.f32 %v2352, %v2664
        %v2702 = vadd.f32 %v2356, %v2668
        %v2703 = vadd.f32 %v2358, %v2670
        %v2704 = vadd.f32 %v2360, %v2672
        %v2705 = vadd.f32 %v2362, %v2674
        %v2706 = vadd.f32 %v2366, %v2678
        %v2707 = vadd.f32 %v2368, %v2680
        %v2708 = vadd.f32 %v2370, %v2682
        %v2709 = vadd.f32 %v2372, %v2684
        %v2710 = vadd.f32 %v2376, %v2688
        %v2711 = vadd.f32 %v2378, %v2690
        %v2712 = vld [vmem:[%s4] sm:$0x3]
        %v2714 = vlaneseq
        %v2715 = vshrl.u32 %v2714, 7
        %v2716 = vsub.s32 0, %v2715
        %v2717 = vrot.slane %v2712, %v2716
        %v2718 = vlaneseq
        %v2719 = vshrl.u32 %v2718, 7
        %v2720 = vsub.s32 1, %v2719
        %v2721 = vrot.slane %v2712, %v2720
        %v2724 = vadd.f32 %v2694, %v2717
        %v2725 = vadd.f32 %v2695, %v2721
        %v2726 = vadd.f32 %v2696, %v2717
        %v2727 = vadd.f32 %v2697, %v2721
        %v2728 = vadd.f32 %v2698, %v2717
        %v2729 = vadd.f32 %v2699, %v2721
        %v2730 = vadd.f32 %v2700, %v2717
        %v2731 = vadd.f32 %v2701, %v2721
        %v2732 = vadd.f32 %v2702, %v2717
        %v2733 = vadd.f32 %v2703, %v2721
        %v2734 = vadd.f32 %v2704, %v2717
        %v2735 = vadd.f32 %v2705, %v2721
        %v2736 = vadd.f32 %v2706, %v2717
        %v2737 = vadd.f32 %v2707, %v2721
        %v2738 = vadd.f32 %v2708, %v2717
        %v2739 = vadd.f32 %v2709, %v2721
        %v2740 = vadd.f32 %v2710, %v2717
        %v2741 = vadd.f32 %v2711, %v2721
        %2742 = vst [vmem:[#allocation2] sm:$0xff] %v2724
        %2743 = vst [vmem:[#allocation2 + $0x8] sm:$0xff] %v2725
        %2744 = vst [vmem:[#allocation2 + $0x10] sm:$0xff] %v2726
        %2745 = vst [vmem:[#allocation2 + $0x18] sm:$0xff] %v2727
        %2746 = vst [vmem:[#allocation2 + $0x20] sm:$0xff] %v2728
        %2747 = vst [vmem:[#allocation2 + $0x28] sm:$0xff] %v2729
        %2748 = vst [vmem:[#allocation2 + $0x30] sm:$0xff] %v2730
        %2749 = vst [vmem:[#allocation2 + $0x38] sm:$0xff] %v2731
        %2750 = vst [vmem:[#allocation2 + $0x40] sm:$0xff] %v2732
        %2751 = vst [vmem:[#allocation2 + $0x48] sm:$0xff] %v2733
        %2752 = vst [vmem:[#allocation2 + $0x50] sm:$0xff] %v2734
        %2753 = vst [vmem:[#allocation2 + $0x58] sm:$0xff] %v2735
        %2754 = vst [vmem:[#allocation2 + $0x60] sm:$0xff] %v2736
        %2755 = vst [vmem:[#allocation2 + $0x68] sm:$0xff] %v2737
        %2756 = vst [vmem:[#allocation2 + $0x70] sm:$0xff] %v2738
        %2757 = vst [vmem:[#allocation2 + $0x78] sm:$0xff] %v2739
        %2758 = vst [vmem:[#allocation2 + $0x80] sm:$0xff] %v2740
        %2759 = vst [vmem:[#allocation2 + $0x88] sm:$0xff] %v2741
        %v2760 = vld [vmem:[#allocation2] sm:$0xff]
        %v2761 = vld [vmem:[#allocation2 + $0x8] sm:$0xff]
        %v2762 = vld [vmem:[#allocation2 + $0x10] sm:$0xff]
        %v2763 = vld [vmem:[#allocation2 + $0x18] sm:$0xff]
        %v2764 = vadd.f32 %v2760, %v2762
        %v2765 = vrot.slane %v2764, 4
        %v2766 = vadd.f32 %v2764, %v2765
        %v2767 = vrot.slane %v2766, 2
        %v2768 = vadd.f32 %v2766, %v2767
        %v2769 = vrot.slane %v2768, 1
        %v2770 = vadd.f32 %v2768, %v2769
        %v2771 = vadd.f32 %v2761, %v2763
        %v2772 = vrot.slane %v2771, 4
        %v2773 = vadd.f32 %v2771, %v2772
        %v2774 = vrot.slane %v2773, 2
        %v2775 = vadd.f32 %v2773, %v2774
        %v2776 = vrot.slane %v2775, 1
        %v2777 = vadd.f32 %v2775, %v2776
        %v2778 = vld [vmem:[#allocation2 + $0x20] sm:$0xfe]
        %v2779 = vld [vmem:[#allocation2 + $0x28] sm:$0xfe]
        %v2780 = vld [vmem:[#allocation2 + $0x30] sm:$0xff]
        %v2781 = vld [vmem:[#allocation2 + $0x38] sm:$0xff]
        %v2782 = vld [vmem:[#allocation2 + $0x40] sm:$0x1]
        %v2783 = vld [vmem:[#allocation2 + $0x48] sm:$0x1]
        %vm2790 = vcmask 1046528
        %v2791 = vrot.slane %v2778, 1
        %v2792 = vrot.slane %v2780, 1
        %v2793 = vsel %vm2790, %v2791, %v2792
        %v2794 = vrot.slane %v2779, 1
        %v2795 = vrot.slane %v2781, 1
        %v2796 = vsel %vm2790, %v2794, %v2795
        %v2797 = vrot.slane %v2782, 1
        %v2798 = vsel %vm2790, %v2792, %v2797
        %v2799 = vrot.slane %v2783, 1
        %v2800 = vsel %vm2790, %v2795, %v2799
        %v2805 = vadd.f32 %v2793, %v2798
        %v2806 = vrot.slane %v2805, 4
        %v2807 = vadd.f32 %v2805, %v2806
        %v2808 = vrot.slane %v2807, 2
        %v2809 = vadd.f32 %v2807, %v2808
        %v2810 = vrot.slane %v2809, 1
        %v2811 = vadd.f32 %v2809, %v2810
        %v2812 = vadd.f32 %v2796, %v2800
        %v2813 = vrot.slane %v2812, 4
        %v2814 = vadd.f32 %v2812, %v2813
        %v2815 = vrot.slane %v2814, 2
        %v2816 = vadd.f32 %v2814, %v2815
        %v2817 = vrot.slane %v2816, 1
        %v2818 = vadd.f32 %v2816, %v2817
        %v2819 = vld [vmem:[#allocation2 + $0x40] sm:$0xfc]
        %v2820 = vld [vmem:[#allocation2 + $0x48] sm:$0xfc]
        %v2821 = vld [vmem:[#allocation2 + $0x50] sm:$0xff]
        %v2822 = vld [vmem:[#allocation2 + $0x58] sm:$0xff]
        %v2823 = vld [vmem:[#allocation2 + $0x60] sm:$0x3]
        %v2824 = vld [vmem:[#allocation2 + $0x68] sm:$0x3]
        %vm2831 = vcmask 1045504
        %v2832 = vrot.slane %v2819, 2
        %v2833 = vrot.slane %v2821, 2
        %v2834 = vsel %vm2831, %v2832, %v2833
        %v2835 = vrot.slane %v2820, 2
        %v2836 = vrot.slane %v2822, 2
        %v2837 = vsel %vm2831, %v2835, %v2836
        %v2838 = vrot.slane %v2823, 2
        %v2839 = vsel %vm2831, %v2833, %v2838
        %v2840 = vrot.slane %v2824, 2
        %v2841 = vsel %vm2831, %v2836, %v2840
        %v2846 = vadd.f32 %v2834, %v2839
        %v2847 = vrot.slane %v2846, 4
        %v2848 = vadd.f32 %v2846, %v2847
        %v2849 = vrot.slane %v2848, 2
        %v2850 = vadd.f32 %v2848, %v2849
        %v2851 = vrot.slane %v2850, 1
        %v2852 = vadd.f32 %v2850, %v2851
        %v2853 = vadd.f32 %v2837, %v2841
        %v2854 = vrot.slane %v2853, 4
        %v2855 = vadd.f32 %v2853, %v2854
        %v2856 = vrot.slane %v2855, 2
        %v2857 = vadd.f32 %v2855, %v2856
        %v2858 = vrot.slane %v2857, 1
        %v2859 = vadd.f32 %v2857, %v2858
        %v2860 = vld [vmem:[#allocation2 + $0x60] sm:$0xf8]
        %v2861 = vld [vmem:[#allocation2 + $0x68] sm:$0xf8]
        %v2862 = vld [vmem:[#allocation2 + $0x70] sm:$0xff]
        %v2863 = vld [vmem:[#allocation2 + $0x78] sm:$0xff]
        %v2864 = vld [vmem:[#allocation2 + $0x80] sm:$0x7]
        %v2865 = vld [vmem:[#allocation2 + $0x88] sm:$0x7]
        %vm2872 = vcmask 1044480
        %v2873 = vrot.slane %v2860, 3
        %v2874 = vrot.slane %v2862, 3
        %v2875 = vsel %vm2872, %v2873, %v2874
        %v2876 = vrot.slane %v2861, 3
        %v2877 = vrot.slane %v2863, 3
        %v2878 = vsel %vm2872, %v2876, %v2877
        %v2879 = vrot.slane %v2864, 3
        %v2880 = vsel %vm2872, %v2874, %v2879
        %v2881 = vrot.slane %v2865, 3
        %v2882 = vsel %vm2872, %v2877, %v2881
        %v2887 = vadd.f32 %v2875, %v2880
        %v2888 = vrot.slane %v2887, 4
        %v2889 = vadd.f32 %v2887, %v2888
        %v2890 = vrot.slane %v2889, 2
        %v2891 = vadd.f32 %v2889, %v2890
        %v2892 = vrot.slane %v2891, 1
        %v2893 = vadd.f32 %v2891, %v2892
        %v2894 = vadd.f32 %v2878, %v2882
        %v2895 = vrot.slane %v2894, 4
        %v2896 = vadd.f32 %v2894, %v2895
        %v2897 = vrot.slane %v2896, 2
        %v2898 = vadd.f32 %v2896, %v2897
        %v2899 = vrot.slane %v2898, 1
        %v2900 = vadd.f32 %v2898, %v2899
        %v2901 = vsel %vm440, %v2770, %v2811
        %v2902 = vsel %vm440, %v2777, %v2818
        %v2903 = vsel %vm468, %v2901, %v2852
        %v2904 = vsel %vm468, %v2902, %v2859
        %v2905 = vsel %vm496, %v2903, %v2893
        %v2906 = vsel %vm496, %v2904, %v2900
        %v2907 = vpack.c.bf16 %v2905, %v2905
        %v2908 = vpack.c.bf16 %v2906, %v2906
        %v2909 = vld [vmem:[#allocation9] sm:$0xf]
        %v2910 = vld [vmem:[#allocation9 + $0x4] sm:$0xf]
        %v2911 = vld [vmem:[#allocation9 + $0x8] sm:$0xf]
        %v2912 = vld [vmem:[#allocation9 + $0xc] sm:$0xf]
        %v2913 = vld [vmem:[#allocation9 + $0x10] sm:$0xf]
        %v2914 = vld [vmem:[#allocation9 + $0x14] sm:$0xf]
        %v2915 = vld [vmem:[#allocation9 + $0x18] sm:$0xf]
        %v2916 = vld [vmem:[#allocation9 + $0x1c] sm:$0xf]
        %v2917 = vld [vmem:[#allocation9 + $0x20] sm:$0xf]
        %v2918 = vld [vmem:[#allocation9 + $0x24] sm:$0xf]
        %v2919 = vld [vmem:[#allocation9 + $0x28] sm:$0xf]
        %v2920 = vld [vmem:[#allocation9 + $0x2c] sm:$0xf]
        %v2921 = vld [vmem:[#allocation9 + $0x30] sm:$0xf]
        %v2922 = vld [vmem:[#allocation9 + $0x34] sm:$0xf]
        %v2923 = vld [vmem:[#allocation9 + $0x38] sm:$0xf]
        %v2924 = vld [vmem:[#allocation9 + $0x3c] sm:$0xf]
        %v2925 = vld [vmem:[#allocation9 + $0x40] sm:$0xf]
        %v2926 = vld [vmem:[#allocation9 + $0x44] sm:$0xf]
        %v2927 = vld [vmem:[#allocation9 + $0x48] sm:$0xf]
        %v2928 = vld [vmem:[#allocation9 + $0x4c] sm:$0xf]
        %v2929 = vld [vmem:[#allocation9 + $0x50] sm:$0xf]
        %v2930 = vld [vmem:[#allocation9 + $0x54] sm:$0xf]
        %v2931 = vld [vmem:[#allocation9 + $0x58] sm:$0xf]
        %v2932 = vld [vmem:[#allocation9 + $0x5c] sm:$0xf]
        %v2933 = vld [vmem:[#allocation9 + $0x60] sm:$0xf]
        %v2934 = vld [vmem:[#allocation9 + $0x64] sm:$0xf]
        %v2935 = vld [vmem:[#allocation9 + $0x68] sm:$0xf]
        %v2936 = vld [vmem:[#allocation9 + $0x6c] sm:$0xf]
        %v2937 = vld [vmem:[#allocation9 + $0x70] sm:$0xf]
        %v2938 = vld [vmem:[#allocation9 + $0x74] sm:$0xf]
        %v2939 = vld [vmem:[#allocation9 + $0x78] sm:$0xf]
        %v2940 = vld [vmem:[#allocation9 + $0x7c] sm:$0xf]
        %v2941 = vld [vmem:[%s6] sm:$0x1]
        %v2943 = vlaneseq
        %v2944 = vshrl.u32 %v2943, 7
        %v2945 = vsub.s32 0, %v2944
        %v2946 = vrot.slane %v2941, %v2945
        %v2980 = vunpack.c.l.b16 %v2909
        %v2981 = vunpack.c.l.b16 %v2910
        %v2982 = vunpack.c.l.b16 %v2911
        %v2983 = vunpack.c.l.b16 %v2912
        %v2984 = vunpack.c.l.b16 %v2913
        %v2985 = vunpack.c.l.b16 %v2914
        %v2986 = vunpack.c.l.b16 %v2915
        %v2987 = vunpack.c.l.b16 %v2916
        %v2988 = vunpack.c.l.b16 %v2917
        %v2989 = vunpack.c.l.b16 %v2918
        %v2990 = vunpack.c.l.b16 %v2919
        %v2991 = vunpack.c.l.b16 %v2920
        %v2992 = vunpack.c.l.b16 %v2921
        %v2993 = vunpack.c.l.b16 %v2922
        %v2994 = vunpack.c.l.b16 %v2923
        %v2995 = vunpack.c.l.b16 %v2924
        %v2996 = vunpack.c.l.b16 %v2925
        %v2997 = vunpack.c.l.b16 %v2926
        %v2998 = vunpack.c.l.b16 %v2927
        %v2999 = vunpack.c.l.b16 %v2928
        %v3000 = vunpack.c.l.b16 %v2929
        %v3001 = vunpack.c.l.b16 %v2930
        %v3002 = vunpack.c.l.b16 %v2931
        %v3003 = vunpack.c.l.b16 %v2932
        %v3004 = vunpack.c.l.b16 %v2933
        %v3005 = vunpack.c.l.b16 %v2934
        %v3006 = vunpack.c.l.b16 %v2935
        %v3007 = vunpack.c.l.b16 %v2936
        %v3008 = vunpack.c.l.b16 %v2937
        %v3009 = vunpack.c.l.b16 %v2938
        %v3010 = vunpack.c.l.b16 %v2939
        %v3011 = vunpack.c.l.b16 %v2940
        %v3012 = vpack.c.b16 %v2981, %v2980
        %v3013 = vpack.c.b16 %v2983, %v2982
        %v3014 = vpack.c.b16 %v2985, %v2984
        %v3015 = vpack.c.b16 %v2987, %v2986
        %v3016 = vpack.c.b16 %v2989, %v2988
        %v3017 = vpack.c.b16 %v2991, %v2990
        %v3018 = vpack.c.b16 %v2993, %v2992
        %v3019 = vpack.c.b16 %v2995, %v2994
        %v3020 = vpack.c.b16 %v2997, %v2996
        %v3021 = vpack.c.b16 %v2999, %v2998
        %v3022 = vpack.c.b16 %v3001, %v3000
        %v3023 = vpack.c.b16 %v3003, %v3002
        %v3024 = vpack.c.b16 %v3005, %v3004
        %v3025 = vpack.c.b16 %v3007, %v3006
        %v3026 = vpack.c.b16 %v3009, %v3008
        %v3027 = vpack.c.b16 %v3011, %v3010
        %3044 = vmatprep.subr.bf16.mxu0 0
        %3045 = vmatpush1.bf16.msra.mxu0 %v3019
        %3046 = vmatprep.subr.bf16.mxu0 0
        %3047 = vmatpush1.bf16.msra.mxu0 %v3018
        %3048 = vmatprep.subr.bf16.mxu0 0
        %3049 = vmatpush1.bf16.msra.mxu0 %v3017
        %3050 = vmatprep.subr.bf16.mxu0 0
        %3051 = vmatpush1.bf16.msra.mxu0 %v3016
        %3052 = vmatprep.subr.bf16.mxu0 0
        %3053 = vmatpush1.bf16.msra.mxu0 %v3015
        %3054 = vmatprep.subr.bf16.mxu0 0
        %3055 = vmatpush1.bf16.msra.mxu0 %v3014
        %3056 = vmatprep.subr.bf16.mxu0 0
        %3057 = vmatpush1.bf16.msra.mxu0 %v3013
        %3058 = vmatprep.subr.bf16.mxu0 0
        %3059 = vmatpush1.bf16.msra.mxu0 %v3012
        %3060 = vmatprep.subr.bf16.mxu0 0
        %3061 = vmatpush2.bf16.msra.mxu0 %v3027
        %3062 = vmatprep.subr.bf16.mxu0 0
        %3063 = vmatpush2.bf16.msra.mxu0 %v3026
        %3064 = vmatprep.subr.bf16.mxu0 0
        %3065 = vmatpush2.bf16.msra.mxu0 %v3025
        %3066 = vmatprep.subr.bf16.mxu0 0
        %3067 = vmatpush2.bf16.msra.mxu0 %v3024
        %3068 = vmatprep.subr.bf16.mxu0 0
        %3069 = vmatpush2.bf16.msra.mxu0 %v3023
        %3070 = vmatprep.subr.bf16.mxu0 0
        %3071 = vmatpush2.bf16.msra.mxu0 %v3022
        %3072 = vmatprep.subr.bf16.mxu0 0
        %3073 = vmatpush2.bf16.msra.mxu0 %v3021
        %3074 = vmatprep.subr.bf16.mxu0 0
        %3075 = vmatpush2.bf16.msra.mxu0 %v3020
        %3076 = vmatprep.mubr.bf16.mxu0 %v2908
        %3077 = vmatmul.mubr.bf16.gmra.mxu0 %v2907
        %v3078 = vpop.f32.mrf.mxu0
        %v3079 = vadd.f32 %v2946, %v3078
        %v3080 = vpop.f32.mrf.mxu0
        %v3081 = vpop.f32.mrf.mxu0
        %v3082 = vpop.f32.mrf.mxu0
        %3083 = vdwg.mxu0
        %v3084 = vmax.f32 %v3079, 0.0
        %v3085 = vpack.c.bf16 %v3084, %v3084
        %v3086 = vld [vmem:[#allocation11] sm:$0xff]
        %v3087 = vld [vmem:[#allocation11 + $0x8] sm:$0xff]
        %v3088 = vld [vmem:[#allocation11 + $0x10] sm:$0xff]
        %v3089 = vld [vmem:[#allocation11 + $0x18] sm:$0xff]
        %v3090 = vld [vmem:[#allocation11 + $0x20] sm:$0xff]
        %v3091 = vld [vmem:[#allocation11 + $0x28] sm:$0xff]
        %v3092 = vld [vmem:[#allocation11 + $0x30] sm:$0xff]
        %v3093 = vld [vmem:[#allocation11 + $0x38] sm:$0xff]
        %v3094 = vld [vmem:[#allocation11 + $0x40] sm:$0xff]
        %v3095 = vld [vmem:[#allocation11 + $0x48] sm:$0xff]
        %v3096 = vld [vmem:[#allocation11 + $0x50] sm:$0xff]
        %v3097 = vld [vmem:[#allocation11 + $0x58] sm:$0xff]
        %v3098 = vld [vmem:[#allocation11 + $0x60] sm:$0xff]
        %v3099 = vld [vmem:[#allocation11 + $0x68] sm:$0xff]
        %v3100 = vld [vmem:[#allocation11 + $0x70] sm:$0xff]
        %v3101 = vld [vmem:[#allocation11 + $0x78] sm:$0xff]
        %v3102 = vld [vmem:[%s8] sm:$0x3]
        %v3104 = vlaneseq
        %v3105 = vshrl.u32 %v3104, 7
        %v3106 = vsub.s32 0, %v3105
        %v3107 = vrot.slane %v3102, %v3106
        %v3108 = vlaneseq
        %v3109 = vshrl.u32 %v3108, 7
        %v3110 = vsub.s32 1, %v3109
        %v3111 = vrot.slane %v3102, %v3110
        %v3130 = vunpack.c.l.b16 %v3086
        %v3131 = vunpack.c.h.b16 %v3086
        %v3132 = vunpack.c.l.b16 %v3087
        %v3133 = vunpack.c.h.b16 %v3087
        %v3134 = vunpack.c.l.b16 %v3088
        %v3135 = vunpack.c.h.b16 %v3088
        %v3136 = vunpack.c.l.b16 %v3089
        %v3137 = vunpack.c.h.b16 %v3089
        %v3138 = vunpack.c.l.b16 %v3090
        %v3139 = vunpack.c.h.b16 %v3090
        %v3140 = vunpack.c.l.b16 %v3091
        %v3141 = vunpack.c.h.b16 %v3091
        %v3142 = vunpack.c.l.b16 %v3092
        %v3143 = vunpack.c.h.b16 %v3092
        %v3144 = vunpack.c.l.b16 %v3093
        %v3145 = vunpack.c.h.b16 %v3093
        %v3146 = vunpack.c.l.b16 %v3094
        %v3147 = vunpack.c.h.b16 %v3094
        %v3148 = vunpack.c.l.b16 %v3095
        %v3149 = vunpack.c.h.b16 %v3095
        %v3150 = vunpack.c.l.b16 %v3096
        %v3151 = vunpack.c.h.b16 %v3096
        %v3152 = vunpack.c.l.b16 %v3097
        %v3153 = vunpack.c.h.b16 %v3097
        %v3154 = vunpack.c.l.b16 %v3098
        %v3155 = vunpack.c.h.b16 %v3098
        %v3156 = vunpack.c.l.b16 %v3099
        %v3157 = vunpack.c.h.b16 %v3099
        %v3158 = vunpack.c.l.b16 %v3100
        %v3159 = vunpack.c.h.b16 %v3100
        %v3160 = vunpack.c.l.b16 %v3101
        %v3161 = vunpack.c.h.b16 %v3101
        %v3162 = vpack.c.b16 %v3132, %v3130
        %v3163 = vpack.c.b16 %v3133, %v3131
        %v3164 = vpack.c.b16 %v3136, %v3134
        %v3165 = vpack.c.b16 %v3137, %v3135
        %v3166 = vpack.c.b16 %v3140, %v3138
        %v3167 = vpack.c.b16 %v3141, %v3139
        %v3168 = vpack.c.b16 %v3144, %v3142
        %v3169 = vpack.c.b16 %v3145, %v3143
        %v3170 = vpack.c.b16 %v3148, %v3146
        %v3171 = vpack.c.b16 %v3149, %v3147
        %v3172 = vpack.c.b16 %v3152, %v3150
        %v3173 = vpack.c.b16 %v3153, %v3151
        %v3174 = vpack.c.b16 %v3156, %v3154
        %v3175 = vpack.c.b16 %v3157, %v3155
        %v3176 = vpack.c.b16 %v3160, %v3158
        %v3177 = vpack.c.b16 %v3161, %v3159
        %3194 = vmatprep.subr.bf16.mxu0 %v3177
        %3195 = vmatpush1.bf16.msra.mxu0 %v3176
        %3196 = vmatprep.subr.bf16.mxu0 %v3175
        %3197 = vmatpush1.bf16.msra.mxu0 %v3174
        %3198 = vmatprep.subr.bf16.mxu0 %v3173
        %3199 = vmatpush1.bf16.msra.mxu0 %v3172
        %3200 = vmatprep.subr.bf16.mxu0 %v3171
        %3201 = vmatpush1.bf16.msra.mxu0 %v3170
        %3202 = vmatprep.subr.bf16.mxu0 %v3169
        %3203 = vmatpush1.bf16.msra.mxu0 %v3168
        %3204 = vmatprep.subr.bf16.mxu0 %v3167
        %3205 = vmatpush1.bf16.msra.mxu0 %v3166
        %3206 = vmatprep.subr.bf16.mxu0 %v3165
        %3207 = vmatpush1.bf16.msra.mxu0 %v3164
        %3208 = vmatprep.subr.bf16.mxu0 %v3163
        %3209 = vmatpush1.bf16.msra.mxu0 %v3162
        %3210 = vmatprep.subr.bf16.mxu0 0
        %3211 = vmatpush2.bf16.msra.mxu0 0
        %3212 = vmatprep.subr.bf16.mxu0 0
        %3213 = vmatpush2.bf16.msra.mxu0 0
        %3214 = vmatprep.subr.bf16.mxu0 0
        %3215 = vmatpush2.bf16.msra.mxu0 0
        %3216 = vmatprep.subr.bf16.mxu0 0
        %3217 = vmatpush2.bf16.msra.mxu0 0
        %3218 = vmatprep.subr.bf16.mxu0 0
        %3219 = vmatpush2.bf16.msra.mxu0 0
        %3220 = vmatprep.subr.bf16.mxu0 0
        %3221 = vmatpush2.bf16.msra.mxu0 0
        %3222 = vmatprep.subr.bf16.mxu0 0
        %3223 = vmatpush2.bf16.msra.mxu0 0
        %3224 = vmatprep.subr.bf16.mxu0 0
        %3225 = vmatpush2.bf16.msra.mxu0 0
        %3226 = vmatprep.mubr.bf16.mxu0 0
        %3227 = vmatmul.mubr.bf16.gmra.mxu0 %v3085
        %v3228 = vpop.f32.mrf.mxu0
        %v3229 = vadd.f32 %v3107, %v3228
        %v3230 = vpop.f32.mrf.mxu0
        %v3231 = vadd.f32 %v3111, %v3230
        %v3232 = vpop.f32.mrf.mxu0
        %v3233 = vpop.f32.mrf.mxu0
        %3234 = vdwg.mxu0
        %v3235 = vxor.u32 %v3229, 2147483648
        %v3236 = vxor.u32 %v3231, 2147483648
        %v3237 = vmul.f32 %v3235, 1.442695
        %v3238 = vpow.pop %v3237
        %v3239 = vmul.f32 %v3236, 1.442695
        %v3240 = vpow.pop %v3239
        %v3241 = vadd.f32 %v3238, 1.0
        %v3242 = vadd.f32 %v3240, 1.0
        %v3243 = vrcp.pop %v3241
        %v3244 = vmul.f32 1.0, %v3243
        %v3245 = vrcp.pop %v3242
        %v3246 = vmul.f32 1.0, %v3245
        %v3247 = vlaneseq
        %v3248 = vshrl.u32 %v3247, 7
        %v3249 = vsub.s32 0, %v3248
        %v3250 = vrot.slane %v3244, %v3249
        %v3251 = vlaneseq
        %v3252 = vshrl.u32 %v3251, 7
        %v3253 = vsub.s32 0, %v3252
        %v3254 = vrot.slane %v3246, %v3253
        %v3255 = vmul.f32 %v2760, %v3250
        %v3256 = vmul.f32 %v2761, %v3254
        %v3257 = vmul.f32 %v2762, %v3250
        %v3258 = vmul.f32 %v2763, %v3254
        %v3259 = vld [vmem:[%s359] sm:$0xff]
        %v3260 = vld [vmem:[%s359 + $0x8] sm:$0xff]
        %v3261 = vld [vmem:[%s359 + $0x10] sm:$0xff]
        %v3262 = vld [vmem:[%s359 + $0x18] sm:$0xff]
        %v3263 = vadd.f32 %v3255, %v3259
        %v3264 = vadd.f32 %v3256, %v3260
        %v3265 = vadd.f32 %v3257, %v3261
        %v3266 = vadd.f32 %v3258, %v3262
        %v3267 = vmax.f32 %v3263, 0.0
        %v3268 = vmax.f32 %v3264, 0.0
        %v3269 = vmax.f32 %v3265, 0.0
        %v3270 = vmax.f32 %v3266, 0.0
        %3271 = vst [vmem:[%s409] sm:$0xff] %v3267
        %3272 = vst [vmem:[%s409 + $0x8] sm:$0xff] %v3268
        %3273 = vst [vmem:[%s409 + $0x10] sm:$0xff] %v3269
        %3274 = vst [vmem:[%s409 + $0x18] sm:$0xff] %v3270
        %v3275 = vld [vmem:[#allocation2 + $0x20] sm:$0xfe]
        %v3276 = vld [vmem:[#allocation2 + $0x28] sm:$0xfe]
        %v3277 = vld [vmem:[#allocation2 + $0x30] sm:$0xff]
        %v3278 = vld [vmem:[#allocation2 + $0x38] sm:$0xff]
        %v3279 = vld [vmem:[#allocation2 + $0x40] sm:$0x1]
        %v3280 = vld [vmem:[#allocation2 + $0x48] sm:$0x1]
        %v3281 = vlaneseq
        %v3282 = vshrl.u32 %v3281, 7
        %v3283 = vsub.s32 1, %v3282
        %v3284 = vrot.slane %v3244, %v3283
        %v3285 = vlaneseq
        %v3286 = vshrl.u32 %v3285, 7
        %v3287 = vsub.s32 1, %v3286
        %v3288 = vrot.slane %v3246, %v3287
        %v3289 = vmul.f32 %v3275, %v3284
        %v3290 = vmul.f32 %v3276, %v3288
        %v3291 = vmul.f32 %v3277, %v3284
        %v3292 = vmul.f32 %v3278, %v3288
        %v3293 = vmul.f32 %v3279, %v3284
        %v3294 = vmul.f32 %v3280, %v3288
        %v3295 = vld [vmem:[%s459] sm:$0xff]
        %v3296 = vld [vmem:[%s459 + $0x8] sm:$0xff]
        %v3297 = vld [vmem:[%s459 + $0x10] sm:$0xff]
        %v3298 = vld [vmem:[%s459 + $0x18] sm:$0xff]
        %v3303 = vrot.slane %v3295, 7
        %v3304 = vrot.slane %v3296, 7
        %v3305 = vrot.slane %v3297, 7
        %v3306 = vsel %vm440, %v3303, %v3305
        %v3307 = vrot.slane %v3298, 7
        %v3308 = vsel %vm440, %v3304, %v3307
        %v3315 = vadd.f32 %v3289, %v3303
        %v3316 = vadd.f32 %v3290, %v3304
        %v3317 = vadd.f32 %v3291, %v3306
        %v3318 = vadd.f32 %v3292, %v3308
        %v3319 = vadd.f32 %v3293, %v3305
        %v3320 = vadd.f32 %v3294, %v3307
        %v3321 = vmax.f32 %v3315, 0.0
        %v3322 = vmax.f32 %v3316, 0.0
        %v3323 = vmax.f32 %v3317, 0.0
        %v3324 = vmax.f32 %v3318, 0.0
        %v3325 = vmax.f32 %v3319, 0.0
        %v3326 = vmax.f32 %v3320, 0.0
        %v3333 = vrot.slane %v3321, 1
        %v3334 = vrot.slane %v3323, 1
        %v3335 = vsel %vm2790, %v3333, %v3334
        %v3336 = vrot.slane %v3322, 1
        %v3337 = vrot.slane %v3324, 1
        %v3338 = vsel %vm2790, %v3336, %v3337
        %v3339 = vrot.slane %v3325, 1
        %v3340 = vsel %vm2790, %v3334, %v3339
        %v3341 = vrot.slane %v3326, 1
        %v3342 = vsel %vm2790, %v3337, %v3341
        %s3347 = scalar_lea.vmem %s409, 32 [#allocation12]
        %3348 = vst [vmem:[%s3347] sm:$0xff] %v3335
        %3349 = vst [vmem:[%s3347 + $0x8] sm:$0xff] %v3338
        %3350 = vst [vmem:[%s3347 + $0x10] sm:$0xff] %v3340
        %3351 = vst [vmem:[%s3347 + $0x18] sm:$0xff] %v3342
        %v3352 = vld [vmem:[#allocation2 + $0x40] sm:$0xfc]
        %v3353 = vld [vmem:[#allocation2 + $0x48] sm:$0xfc]
        %v3354 = vld [vmem:[#allocation2 + $0x50] sm:$0xff]
        %v3355 = vld [vmem:[#allocation2 + $0x58] sm:$0xff]
        %v3356 = vld [vmem:[#allocation2 + $0x60] sm:$0x3]
        %v3357 = vld [vmem:[#allocation2 + $0x68] sm:$0x3]
        %v3358 = vlaneseq
        %v3359 = vshrl.u32 %v3358, 7
        %v3360 = vsub.s32 2, %v3359
        %v3361 = vrot.slane %v3244, %v3360
        %v3362 = vlaneseq
        %v3363 = vshrl.u32 %v3362, 7
        %v3364 = vsub.s32 2, %v3363
        %v3365 = vrot.slane %v3246, %v3364
        %v3366 = vmul.f32 %v3352, %v3361
        %v3367 = vmul.f32 %v3353, %v3365
        %v3368 = vmul.f32 %v3354, %v3361
        %v3369 = vmul.f32 %v3355, %v3365
        %v3370 = vmul.f32 %v3356, %v3361
        %v3371 = vmul.f32 %v3357, %v3365
        %v3372 = vld [vmem:[%s487] sm:$0xff]
        %v3373 = vld [vmem:[%s487 + $0x8] sm:$0xff]
        %v3374 = vld [vmem:[%s487 + $0x10] sm:$0xff]
        %v3375 = vld [vmem:[%s487 + $0x18] sm:$0xff]
        %v3380 = vrot.slane %v3372, 6
        %v3381 = vrot.slane %v3373, 6
        %v3382 = vrot.slane %v3374, 6
        %v3383 = vsel %vm468, %v3380, %v3382
        %v3384 = vrot.slane %v3375, 6
        %v3385 = vsel %vm468, %v3381, %v3384
        %v3392 = vadd.f32 %v3366, %v3380
        %v3393 = vadd.f32 %v3367, %v3381
        %v3394 = vadd.f32 %v3368, %v3383
        %v3395 = vadd.f32 %v3369, %v3385
        %v3396 = vadd.f32 %v3370, %v3382
        %v3397 = vadd.f32 %v3371, %v3384
        %v3398 = vmax.f32 %v3392, 0.0
        %v3399 = vmax.f32 %v3393, 0.0
        %v3400 = vmax.f32 %v3394, 0.0
        %v3401 = vmax.f32 %v3395, 0.0
        %v3402 = vmax.f32 %v3396, 0.0
        %v3403 = vmax.f32 %v3397, 0.0
        %v3410 = vrot.slane %v3398, 2
        %v3411 = vrot.slane %v3400, 2
        %v3412 = vsel %vm2831, %v3410, %v3411
        %v3413 = vrot.slane %v3399, 2
        %v3414 = vrot.slane %v3401, 2
        %v3415 = vsel %vm2831, %v3413, %v3414
        %v3416 = vrot.slane %v3402, 2
        %v3417 = vsel %vm2831, %v3411, %v3416
        %v3418 = vrot.slane %v3403, 2
        %v3419 = vsel %vm2831, %v3414, %v3418
        %s3424 = scalar_lea.vmem %s409, 64 [#allocation12]
        %3425 = vst [vmem:[%s3424] sm:$0xff] %v3412
        %3426 = vst [vmem:[%s3424 + $0x8] sm:$0xff] %v3415
        %3427 = vst [vmem:[%s3424 + $0x10] sm:$0xff] %v3417
        %3428 = vst [vmem:[%s3424 + $0x18] sm:$0xff] %v3419
        %v3429 = vld [vmem:[#allocation2 + $0x60] sm:$0xf8]
        %v3430 = vld [vmem:[#allocation2 + $0x68] sm:$0xf8]
        %v3431 = vld [vmem:[#allocation2 + $0x70] sm:$0xff]
        %v3432 = vld [vmem:[#allocation2 + $0x78] sm:$0xff]
        %v3433 = vld [vmem:[#allocation2 + $0x80] sm:$0x7]
        %v3434 = vld [vmem:[#allocation2 + $0x88] sm:$0x7]
        %v3435 = vlaneseq
        %v3436 = vshrl.u32 %v3435, 7
        %v3437 = vsub.s32 3, %v3436
        %v3438 = vrot.slane %v3244, %v3437
        %v3439 = vlaneseq
        %v3440 = vshrl.u32 %v3439, 7
        %v3441 = vsub.s32 3, %v3440
        %v3442 = vrot.slane %v3246, %v3441
        %v3443 = vmul.f32 %v3429, %v3438
        %v3444 = vmul.f32 %v3430, %v3442
        %v3445 = vmul.f32 %v3431, %v3438
        %v3446 = vmul.f32 %v3432, %v3442
        %v3447 = vmul.f32 %v3433, %v3438
        %v3448 = vmul.f32 %v3434, %v3442
        %v3449 = vld [vmem:[%s515] sm:$0xff]
        %v3450 = vld [vmem:[%s515 + $0x8] sm:$0xff]
        %v3451 = vld [vmem:[%s515 + $0x10] sm:$0xff]
        %v3452 = vld [vmem:[%s515 + $0x18] sm:$0xff]
        %v3457 = vrot.slane %v3449, 5
        %v3458 = vrot.slane %v3450, 5
        %v3459 = vrot.slane %v3451, 5
        %v3460 = vsel %vm496, %v3457, %v3459
        %v3461 = vrot.slane %v3452, 5
        %v3462 = vsel %vm496, %v3458, %v3461
        %v3469 = vadd.f32 %v3443, %v3457
        %v3470 = vadd.f32 %v3444, %v3458
        %v3471 = vadd.f32 %v3445, %v3460
        %v3472 = vadd.f32 %v3446, %v3462
        %v3473 = vadd.f32 %v3447, %v3459
        %v3474 = vadd.f32 %v3448, %v3461
        %v3475 = vmax.f32 %v3469, 0.0
        %v3476 = vmax.f32 %v3470, 0.0
        %v3477 = vmax.f32 %v3471, 0.0
        %v3478 = vmax.f32 %v3472, 0.0
        %v3479 = vmax.f32 %v3473, 0.0
        %v3480 = vmax.f32 %v3474, 0.0
        %v3487 = vrot.slane %v3475, 3
        %v3488 = vrot.slane %v3477, 3
        %v3489 = vsel %vm2872, %v3487, %v3488
        %v3490 = vrot.slane %v3476, 3
        %v3491 = vrot.slane %v3478, 3
        %v3492 = vsel %vm2872, %v3490, %v3491
        %v3493 = vrot.slane %v3479, 3
        %v3494 = vsel %vm2872, %v3488, %v3493
        %v3495 = vrot.slane %v3480, 3
        %v3496 = vsel %vm2872, %v3491, %v3495
        %s3501 = scalar_lea.vmem %s409, 96 [#allocation12]
        %3502 = vst [vmem:[%s3501] sm:$0xff] %v3489
        %3503 = vst [vmem:[%s3501 + $0x8] sm:$0xff] %v3492
        %3504 = vst [vmem:[%s3501 + $0x10] sm:$0xff] %v3494
        %3505 = vst [vmem:[%s3501 + $0x18] sm:$0xff] %v3496
        %s3506 = sand.u32 %s230, 1
        %s3507 = scalar_lea.sflag [#allocation5], %s3506
        %s3508 = sand.u32 %s230, 1
        %s3509 = smul.addr %s3508, 128
        %s3510 = scalar_lea.vmem [#allocation12], %s3509
        // Predicated region
        $region77: #{tpu_custom_call.1} parent=55 // pred_check
          %p3511 = pneg %p240
        $region78: #{tpu_custom_call.1} parent=55 // pred_check_branch
          %3513 = sbr.rel (%p3511) target = $region80
        $region79: #{tpu_custom_call.1} parent=55 // pred_region
          %s3514 = smul.u32 4, %s28
          %s3516 = ssub.s32 2048, 2048
          %3517 = vsyncadd %s3507, %s3516
          %s3518 = smul.addr %s3514, 4
          %s3519 = smul.addr %s3518, 128
          %s3520 = scalar_lea.hbm %s9, %s3519
          %s3521 = sshll.u32 %s3510, 4
          %s3522 = int_to_ptr.vmem [resolvable:$true] %s3521
          %3527 = dma.vmem_to_hbm [thread:$0]  %s3522, 2048, %s3520, %s3507, 256, 256, 16
        $region80: #{tpu_custom_call.1} parent=55 // pred_fallthru
          _
      $region56: #{tpu_custom_call.1} parent=5 // pred_fallthru
        _
      %p3528 = scmp.le.s32.totalorder 2, %s23
      // Predicated region
      $region81: #{tpu_custom_call.1} parent=5 // pred_check
        %p3529 = pneg %p3528
      $region82: #{tpu_custom_call.1} parent=5 // pred_check_branch
        %3531 = sbr.rel (%p3529) target = $region84
      $region83: #{tpu_custom_call.1} parent=5 // pred_region
        %s3532 = ssub.s32 %s23, 2
        // Predicated region
        $region85: #{tpu_custom_call.1} parent=83 // pred_check
          %p3533 = pneg %p246
        $region86: #{tpu_custom_call.1} parent=83 // pred_check_branch
          %3535 = sbr.rel (%p3533) target = $region88
        $region87: #{tpu_custom_call.1} parent=83 // pred_region
          %s3536 = sand.u32 %s231, 1
          %s3537 = scalar_lea.sflag [#allocation5], %s3536
          %s3538 = sand.u32 %s231, 1
          %s3539 = smul.addr %s3538, 128
          %s3540 = scalar_lea.vmem [#allocation12], %s3539
          %3541 = dma.done %s3537, 2048
        $region88: #{tpu_custom_call.1} parent=83 // pred_fallthru
          _
      $region84: #{tpu_custom_call.1} parent=5 // pred_fallthru
        _
    $region6: #{tpu_custom_call.1} parent=1 // loop_footer
      %s27 = sadd.s32 1, %s23
    $region7: #{tpu_custom_call.1} parent=1 // loop_footer_branch
      %22 = sbr.rel target = $region3
    $region8: #{tpu_custom_call.1} parent=1 // loop_exit
      _
    %3542 = vsyncpa [#allocation4], 1
    %s3543 = scalar_lea.sflag [#allocation4], 1
    %3544 = vsyncpa %s3543, 1
    %3545 = vsyncpa [#allocation7], 1
    %3546 = vsyncpa [#allocation10], 1
    %3547 = vsyncpa [#allocation5], 1
    %s3548 = scalar_lea.sflag [#allocation5], 1
    %3549 = vsyncpa %s3548, 1

</llo_original>
